<compile_context>
chip_gen: v5e
topology: v5e:2x2
jax: 0.10.0
libtpu: 0.0.40
codegen_flags: <defaults>
</compile_context>

<pallas_src>
import math
import numpy as np
import jax
import jax.numpy as jnp
from jax.experimental import pallas as pl
from jax.experimental.pallas import tpu as pltpu

NEG_SLOPE = 0.2          # LeakyReLU negative slope used by the 'leaky' / fused_lrelu activation
SQRT2 = math.sqrt(2.0)
CPAD = 128               # lane-dense channel padding


# ------------------------------------------------------------------
# Fused Pallas kernel: one grid step == one image, everything stays in VMEM.
# ------------------------------------------------------------------
def _tostyle_fused_kernel(x_ref,
                          g1_ref, w1_ref, s1_ref,
                          g2_ref, w2_ref, s2_ref,
                          g3_ref, w3_ref, s3_ref,
                          fcw_ref, fcb_ref,
                          o_ref):
    def conv_bn_lrelu(x, g_ref, w_ref, s_ref):
        # x: (S_in, C) bf16 activation, rows = h*W+w (row-major), channels lane-dense.
        # g_ref: (9, S_out, S_in) 0/1 tap selectors (zero rows encode the conv zero-padding).
        # w_ref: (9*C, C) bf16 weights with BN scale folded in; s_ref: (1, C) f32 shift.
        taps = [
            jnp.dot(g_ref[t], x, preferred_element_type=jnp.float32).astype(jnp.bfloat16)
            for t in range(9)
        ]
        patches = jnp.concatenate(taps, axis=1)                        # (S_out, 9*C) im2col in VMEM
        acc = jnp.dot(patches, w_ref[...], preferred_element_type=jnp.float32)
        acc = acc + s_ref[...]                                         # f32 epilogue: BN shift + bias
        acc = jnp.where(acc >= 0.0, acc, NEG_SLOPE * acc)              # LeakyReLU(0.2)
        return acc.astype(jnp.bfloat16)

    x = x_ref[0]                                                       # (H*W, C) bf16
    x = conv_bn_lrelu(x, g1_ref, w1_ref, s1_ref)                       # (H*W/4,  C)
    x = conv_bn_lrelu(x, g2_ref, w2_ref, s2_ref)                       # (H*W/16, C)
    x = conv_bn_lrelu(x, g3_ref, w3_ref, s3_ref)                       # (H*W/64, C)

    # AdaptiveAvgPool2d(1) + EqualLinear(fused_lrelu); pool folded through the FC matmul.
    z = jnp.dot(x, fcw_ref[...], preferred_element_type=jnp.float32)   # (S3, C) f32
    y = jnp.mean(z, axis=0, keepdims=True) + fcb_ref[...]              # (1, C)
    y = jnp.where(y >= 0.0, y, NEG_SLOPE * y) * SQRT2                  # fused_leaky_relu
    o_ref[0] = y.astype(o_ref.dtype)


# ------------------------------------------------------------------
# Constant 0/1 tap-selector matrices for a 3x3 / stride-2 / pad-1 conv.
# Selector t = kh*3+kw: row r (= output pixel) has a single 1 at the input pixel it reads,
# or an all-zero row when that tap falls in the zero-padding region.
# ------------------------------------------------------------------
def _tap_selectors(h_in, w_in):
    h_out, w_out = h_in // 2, w_in // 2
    g = np.zeros((9, h_out * w_out, h_in * w_in), np.float32)
    for kh in range(3):
        for kw in range(3):
            t = kh * 3 + kw
            for i in range(h_out):
                h = 2 * i + kh - 1
                if h < 0 or h >= h_in:
                    continue
                for j in range(w_out):
                    w = 2 * j + kw - 1
                    if w < 0 or w >= w_in:
                        continue
                    g[t, i * w_out + j, h * w_in + w] = 1.0
    return jnp.asarray(g, jnp.bfloat16)         # 0/1 exact in bf16


# ------------------------------------------------------------------
# Deterministic synthetic parameters (no checkpoint), pre-folded & channel-padded.
# ------------------------------------------------------------------
def init_params(key, cin, cout_fc, eps=1e-5, lr_mul=1.0):
    ks = jax.random.split(key, 32)
    ki = 0
    conv_layers = []
    for _ in range(3):
        w = jax.random.normal(ks[ki], (cin, cin, 3, 3), jnp.float32) / math.sqrt(cin * 9); ki += 1
        b = 0.1 * jax.random.normal(ks[ki], (cin,), jnp.float32); ki += 1
        gamma = 1.0 + 0.1 * jax.random.normal(ks[ki], (cin,), jnp.float32); ki += 1
        beta = 0.1 * jax.random.normal(ks[ki], (cin,), jnp.float32); ki += 1
        rmean = 0.1 * jax.random.normal(ks[ki], (cin,), jnp.float32); ki += 1
        rvar = 1.0 + 0.1 * jnp.abs(jax.random.normal(ks[ki], (cin,), jnp.float32)); ki += 1
        inv_std = 1.0 / jnp.sqrt(rvar + eps)
        scale = gamma * inv_std                                   # BN scale
        shift = beta - rmean * scale + b * scale                  # BN shift with conv bias folded in
        # (cout,cin,kh,kw) -> (kh,kw,cin,cout) -> (9*cin, cout); fold BN scale into the columns
        # so the kernel epilogue is only "+ shift".
        w_mat = jnp.transpose(w, (2, 3, 1, 0)).reshape(9 * cin, cin) * scale[None, :]
        w_pad = (jnp.zeros((9, CPAD, CPAD), jnp.float32)
                 .at[:, :cin, :cin].set(w_mat.reshape(9, cin, cin))
                 .reshape(9 * CPAD, CPAD).astype(jnp.bfloat16))
        s_pad = jnp.zeros((1, CPAD), jnp.float32).at[0, :cin].set(shift)
        conv_layers.append((w_pad, s_pad))

    # EqualLinear: runtime weight = W * lr_mul/sqrt(in), bias init 0 (* lr_mul).
    w_fc = jax.random.normal(ks[ki], (cout_fc, cin), jnp.float32) / lr_mul; ki += 1
    eq_scale = (1.0 / math.sqrt(cin)) * lr_mul
    b_fc = jnp.zeros((cout_fc,), jnp.float32)
    fcw_pad = (jnp.zeros((CPAD, CPAD), jnp.float32)
               .at[:cin, :cout_fc].set((w_fc * eq_scale).T).astype(jnp.bfloat16))
    fcb_pad = jnp.zeros((1, CPAD), jnp.float32).at[0, :cout_fc].set(b_fc * lr_mul)
    return dict(conv=conv_layers, fc=(fcw_pad, fcb_pad))


# ------------------------------------------------------------------
# Forward pass (mirrors ToStyle.forward) — one fused pallas_call.
# ------------------------------------------------------------------
def to_style_forward(x_nchw, params, cout_fc):
    N, C, H, W = x_nchw.shape
    assert H % 8 == 0 and W % 8 == 0, "three stride-2 convs expect spatial divisible by 8"
    assert C <= CPAD

    # NCHW -> NHWC -> (N, H*W, CPAD): channel-padded (lane-dense) and cast to bf16 for the MXU.
    x_nhwc = jnp.transpose(x_nchw, (0, 2, 3, 1)).reshape(N, H * W, C)
    x_flat = (jnp.zeros((N, H * W, CPAD), jnp.float32)
              .at[:, :, :C].set(x_nhwc).astype(jnp.bfloat16))

    g1 = _tap_selectors(H, W)
    g2 = _tap_selectors(H // 2, W // 2)
    g3 = _tap_selectors(H // 4, W // 4)
    (w1, s1), (w2, s2), (w3, s3) = params["conv"]
    fcw, fcb = params["fc"]

    def full(a, nd):  # whole-array block, constant across the batch grid (stays VMEM-resident)
        return pl.BlockSpec(a.shape, lambda n, _nd=nd: (0,) * _nd)

    out = pl.pallas_call(
        _tostyle_fused_kernel,
        out_shape=jax.ShapeDtypeStruct((N, 1, CPAD), jnp.float32),
        grid_spec=pl.GridSpec(
            grid=(N,),                                        # one image per grid step
            in_specs=[
                pl.BlockSpec((1, H * W, CPAD), lambda n: (n, 0, 0)),
                full(g1, 3), full(w1, 2), full(s1, 2),
                full(g2, 3), full(w2, 2), full(s2, 2),
                full(g3, 3), full(w3, 2), full(s3, 2),
                full(fcw, 2), full(fcb, 2),
            ],
            out_specs=pl.BlockSpec((1, 1, CPAD), lambda n: (n, 0, 0)),
        ),
        compiler_params=pltpu.CompilerParams(
            # "parallel" over batch -> the two TensorCores on v7x each take half the images.
            # Total resident VMEM is ~3 MiB, well under the default scoped limit on v5e/v6e/v7x.
            dimension_semantics=("parallel",),
        ),
    )(x_flat, g1, w1, s1, g2, w2, s2, g3, w3, s3, fcw, fcb)

    return out.reshape(N, CPAD)[:, :cout_fc]                   # drop channel padding


if __name__ == "__main__":
    key = jax.random.PRNGKey(0)
    k_x, k_p = jax.random.split(key)

    N, Cin, H, W = 2, 4, 16, 16     # 16 -> 8 -> 4 -> 2 spatial after the three stride-2 convs
    Cout_fc = 8

    x = jax.random.normal(k_x, (N, Cin, H, W), jnp.float32)
    params = init_params(k_p, Cin, Cout_fc)

    y = to_style_forward(x, params, Cout_fc)
    y = jax.block_until_ready(y)
    assert y.shape == (N, Cout_fc) and y.dtype == jnp.float32
    print("KERNEL_OK")
</pallas_src>

<mosaic_0001>
module attributes {stable_mosaic.version = 11 : i64} {
  func.func @_tostyle_fused_kernel(%arg0: i32, %arg1: memref<1x256x128xbf16, #tpu.memory_space<vmem>>, %arg2: memref<9x64x256xbf16, #tpu.memory_space<vmem>>, %arg3: memref<1152x128xbf16, #tpu.memory_space<vmem>>, %arg4: memref<1x128xf32, #tpu.memory_space<vmem>>, %arg5: memref<9x16x64xbf16, #tpu.memory_space<vmem>>, %arg6: memref<1152x128xbf16, #tpu.memory_space<vmem>>, %arg7: memref<1x128xf32, #tpu.memory_space<vmem>>, %arg8: memref<9x4x16xbf16, #tpu.memory_space<vmem>>, %arg9: memref<1152x128xbf16, #tpu.memory_space<vmem>>, %arg10: memref<1x128xf32, #tpu.memory_space<vmem>>, %arg11: memref<128x128xbf16, #tpu.memory_space<vmem>>, %arg12: memref<1x128xf32, #tpu.memory_space<vmem>>, %arg13: memref<1x1x128xf32, #tpu.memory_space<vmem>>) attributes {dimension_semantics = [#tpu.dimension_semantics<parallel>], iteration_bounds = array<i64: 2>, scalar_prefetch = 0 : i64, scratch_operands = 0 : i64, tpu.core_type = #tpu.core_type<tc>, window_params = [{transform_indices = @transform_0, window_bounds = array<i64: 1, 256, 128>}, {pipeline_mode = #tpu.pipeline_mode<synchronous>, transform_indices = @transform_1, window_bounds = array<i64: 9, 64, 256>}, {pipeline_mode = #tpu.pipeline_mode<synchronous>, transform_indices = @transform_2, window_bounds = array<i64: 1152, 128>}, {pipeline_mode = #tpu.pipeline_mode<synchronous>, transform_indices = @transform_3, window_bounds = array<i64: 1, 128>}, {pipeline_mode = #tpu.pipeline_mode<synchronous>, transform_indices = @transform_4, window_bounds = array<i64: 9, 16, 64>}, {pipeline_mode = #tpu.pipeline_mode<synchronous>, transform_indices = @transform_5, window_bounds = array<i64: 1152, 128>}, {pipeline_mode = #tpu.pipeline_mode<synchronous>, transform_indices = @transform_6, window_bounds = array<i64: 1, 128>}, {pipeline_mode = #tpu.pipeline_mode<synchronous>, transform_indices = @transform_7, window_bounds = array<i64: 9, 4, 16>}, {pipeline_mode = #tpu.pipeline_mode<synchronous>, transform_indices = @transform_8, window_bounds = array<i64: 1152, 128>}, {pipeline_mode = #tpu.pipeline_mode<synchronous>, transform_indices = @transform_9, window_bounds = array<i64: 1, 128>}, {pipeline_mode = #tpu.pipeline_mode<synchronous>, transform_indices = @transform_10, window_bounds = array<i64: 128, 128>}, {pipeline_mode = #tpu.pipeline_mode<synchronous>, transform_indices = @transform_11, window_bounds = array<i64: 1, 128>}, {transform_indices = @transform_12, window_bounds = array<i64: 1, 1, 128>}]} {
    %c0 = arith.constant 0 : index
    %c0_0 = arith.constant 0 : index
    %c0_1 = arith.constant 0 : index
    %0 = vector.load %arg1[%c0, %c0_0, %c0_1] : memref<1x256x128xbf16, #tpu.memory_space<vmem>>, vector<1x256x128xbf16>
    %1 = vector.shape_cast %0 : vector<1x256x128xbf16> to vector<256x128xbf16>
    %c0_2 = arith.constant 0 : index
    %c0_3 = arith.constant 0 : index
    %c0_4 = arith.constant 0 : index
    %2 = vector.load %arg2[%c0_2, %c0_3, %c0_4] : memref<9x64x256xbf16, #tpu.memory_space<vmem>>, vector<1x64x256xbf16>
    %3 = vector.shape_cast %2 : vector<1x64x256xbf16> to vector<64x256xbf16>
    %cst = arith.constant dense<0.000000e+00> : vector<64x128xf32>
    %4 = tpu.matmul %3, %1, %cst {dimension_numbers = #tpu.dot_dimension_numbers<[1], [0], [0], [1], [0, 0, 1, 1], [], []>} : vector<64x256xbf16>, vector<256x128xbf16>, vector<64x128xf32> -> vector<64x128xf32>
    %5 = arith.truncf %4 : vector<64x128xf32> to vector<64x128xbf16>
    %c1 = arith.constant 1 : index
    %c0_5 = arith.constant 0 : index
    %c0_6 = arith.constant 0 : index
    %6 = vector.load %arg2[%c1, %c0_5, %c0_6] : memref<9x64x256xbf16, #tpu.memory_space<vmem>>, vector<1x64x256xbf16>
    %7 = vector.shape_cast %6 : vector<1x64x256xbf16> to vector<64x256xbf16>
    %cst_7 = arith.constant dense<0.000000e+00> : vector<64x128xf32>
    %8 = tpu.matmul %7, %1, %cst_7 {dimension_numbers = #tpu.dot_dimension_numbers<[1], [0], [0], [1], [0, 0, 1, 1], [], []>} : vector<64x256xbf16>, vector<256x128xbf16>, vector<64x128xf32> -> vector<64x128xf32>
    %9 = arith.truncf %8 : vector<64x128xf32> to vector<64x128xbf16>
    %c2 = arith.constant 2 : index
    %c0_8 = arith.constant 0 : index
    %c0_9 = arith.constant 0 : index
    %10 = vector.load %arg2[%c2, %c0_8, %c0_9] : memref<9x64x256xbf16, #tpu.memory_space<vmem>>, vector<1x64x256xbf16>
    %11 = vector.shape_cast %10 : vector<1x64x256xbf16> to vector<64x256xbf16>
    %cst_10 = arith.constant dense<0.000000e+00> : vector<64x128xf32>
    %12 = tpu.matmul %11, %1, %cst_10 {dimension_numbers = #tpu.dot_dimension_numbers<[1], [0], [0], [1], [0, 0, 1, 1], [], []>} : vector<64x256xbf16>, vector<256x128xbf16>, vector<64x128xf32> -> vector<64x128xf32>
    %13 = arith.truncf %12 : vector<64x128xf32> to vector<64x128xbf16>
    %c3 = arith.constant 3 : index
    %c0_11 = arith.constant 0 : index
    %c0_12 = arith.constant 0 : index
    %14 = vector.load %arg2[%c3, %c0_11, %c0_12] : memref<9x64x256xbf16, #tpu.memory_space<vmem>>, vector<1x64x256xbf16>
    %15 = vector.shape_cast %14 : vector<1x64x256xbf16> to vector<64x256xbf16>
    %cst_13 = arith.constant dense<0.000000e+00> : vector<64x128xf32>
    %16 = tpu.matmul %15, %1, %cst_13 {dimension_numbers = #tpu.dot_dimension_numbers<[1], [0], [0], [1], [0, 0, 1, 1], [], []>} : vector<64x256xbf16>, vector<256x128xbf16>, vector<64x128xf32> -> vector<64x128xf32>
    %17 = arith.truncf %16 : vector<64x128xf32> to vector<64x128xbf16>
    %c4 = arith.constant 4 : index
    %c0_14 = arith.constant 0 : index
    %c0_15 = arith.constant 0 : index
    %18 = vector.load %arg2[%c4, %c0_14, %c0_15] : memref<9x64x256xbf16, #tpu.memory_space<vmem>>, vector<1x64x256xbf16>
    %19 = vector.shape_cast %18 : vector<1x64x256xbf16> to vector<64x256xbf16>
    %cst_16 = arith.constant dense<0.000000e+00> : vector<64x128xf32>
    %20 = tpu.matmul %19, %1, %cst_16 {dimension_numbers = #tpu.dot_dimension_numbers<[1], [0], [0], [1], [0, 0, 1, 1], [], []>} : vector<64x256xbf16>, vector<256x128xbf16>, vector<64x128xf32> -> vector<64x128xf32>
    %21 = arith.truncf %20 : vector<64x128xf32> to vector<64x128xbf16>
    %c5 = arith.constant 5 : index
    %c0_17 = arith.constant 0 : index
    %c0_18 = arith.constant 0 : index
    %22 = vector.load %arg2[%c5, %c0_17, %c0_18] : memref<9x64x256xbf16, #tpu.memory_space<vmem>>, vector<1x64x256xbf16>
    %23 = vector.shape_cast %22 : vector<1x64x256xbf16> to vector<64x256xbf16>
    %cst_19 = arith.constant dense<0.000000e+00> : vector<64x128xf32>
    %24 = tpu.matmul %23, %1, %cst_19 {dimension_numbers = #tpu.dot_dimension_numbers<[1], [0], [0], [1], [0, 0, 1, 1], [], []>} : vector<64x256xbf16>, vector<256x128xbf16>, vector<64x128xf32> -> vector<64x128xf32>
    %25 = arith.truncf %24 : vector<64x128xf32> to vector<64x128xbf16>
    %c6 = arith.constant 6 : index
    %c0_20 = arith.constant 0 : index
    %c0_21 = arith.constant 0 : index
    %26 = vector.load %arg2[%c6, %c0_20, %c0_21] : memref<9x64x256xbf16, #tpu.memory_space<vmem>>, vector<1x64x256xbf16>
    %27 = vector.shape_cast %26 : vector<1x64x256xbf16> to vector<64x256xbf16>
    %cst_22 = arith.constant dense<0.000000e+00> : vector<64x128xf32>
    %28 = tpu.matmul %27, %1, %cst_22 {dimension_numbers = #tpu.dot_dimension_numbers<[1], [0], [0], [1], [0, 0, 1, 1], [], []>} : vector<64x256xbf16>, vector<256x128xbf16>, vector<64x128xf32> -> vector<64x128xf32>
    %29 = arith.truncf %28 : vector<64x128xf32> to vector<64x128xbf16>
    %c7 = arith.constant 7 : index
    %c0_23 = arith.constant 0 : index
    %c0_24 = arith.constant 0 : index
    %30 = vector.load %arg2[%c7, %c0_23, %c0_24] : memref<9x64x256xbf16, #tpu.memory_space<vmem>>, vector<1x64x256xbf16>
    %31 = vector.shape_cast %30 : vector<1x64x256xbf16> to vector<64x256xbf16>
    %cst_25 = arith.constant dense<0.000000e+00> : vector<64x128xf32>
    %32 = tpu.matmul %31, %1, %cst_25 {dimension_numbers = #tpu.dot_dimension_numbers<[1], [0], [0], [1], [0, 0, 1, 1], [], []>} : vector<64x256xbf16>, vector<256x128xbf16>, vector<64x128xf32> -> vector<64x128xf32>
    %33 = arith.truncf %32 : vector<64x128xf32> to vector<64x128xbf16>
    %c8 = arith.constant 8 : index
    %c0_26 = arith.constant 0 : index
    %c0_27 = arith.constant 0 : index
    %34 = vector.load %arg2[%c8, %c0_26, %c0_27] : memref<9x64x256xbf16, #tpu.memory_space<vmem>>, vector<1x64x256xbf16>
    %35 = vector.shape_cast %34 : vector<1x64x256xbf16> to vector<64x256xbf16>
    %cst_28 = arith.constant dense<0.000000e+00> : vector<64x128xf32>
    %36 = tpu.matmul %35, %1, %cst_28 {dimension_numbers = #tpu.dot_dimension_numbers<[1], [0], [0], [1], [0, 0, 1, 1], [], []>} : vector<64x256xbf16>, vector<256x128xbf16>, vector<64x128xf32> -> vector<64x128xf32>
    %37 = arith.truncf %36 : vector<64x128xf32> to vector<64x128xbf16>
    %38 = tpu.concatenate %5, %9, %13, %17, %21, %25, %29, %33, %37 in 1 : vector<64x128xbf16>, vector<64x128xbf16>, vector<64x128xbf16>, vector<64x128xbf16>, vector<64x128xbf16>, vector<64x128xbf16>, vector<64x128xbf16>, vector<64x128xbf16>, vector<64x128xbf16> -> vector<64x1152xbf16>
    %c0_29 = arith.constant 0 : index
    %c0_30 = arith.constant 0 : index
    %39 = vector.load %arg3[%c0_29, %c0_30] : memref<1152x128xbf16, #tpu.memory_space<vmem>>, vector<1152x128xbf16>
    %cst_31 = arith.constant dense<0.000000e+00> : vector<64x128xf32>
    %40 = tpu.matmul %38, %39, %cst_31 {dimension_numbers = #tpu.dot_dimension_numbers<[1], [0], [0], [1], [0, 0, 1, 1], [], []>} : vector<64x1152xbf16>, vector<1152x128xbf16>, vector<64x128xf32> -> vector<64x128xf32>
    %c0_32 = arith.constant 0 : index
    %c0_33 = arith.constant 0 : index
    %41 = vector.load %arg4[%c0_32, %c0_33] : memref<1x128xf32, #tpu.memory_space<vmem>>, vector<1x128xf32>
    %42 = vector.broadcast %41 : vector<1x128xf32> to vector<64x128xf32>
    %43 = arith.addf %40, %42 : vector<64x128xf32>
    %cst_34 = arith.constant 0.000000e+00 : f32
    %44 = vector.broadcast %cst_34 : f32 to vector<64x128xf32>
    %45 = arith.cmpf oge, %43, %44 : vector<64x128xf32>
    %cst_35 = arith.constant 2.000000e-01 : f32
    %46 = vector.broadcast %cst_35 : f32 to vector<64x128xf32>
    %47 = arith.mulf %46, %43 : vector<64x128xf32>
    %48 = arith.select %45, %43, %47 : vector<64x128xi1>, vector<64x128xf32>
    %49 = arith.truncf %48 : vector<64x128xf32> to vector<64x128xbf16>
    %c0_36 = arith.constant 0 : index
    %c0_37 = arith.constant 0 : index
    %c0_38 = arith.constant 0 : index
    %50 = vector.load %arg5[%c0_36, %c0_37, %c0_38] : memref<9x16x64xbf16, #tpu.memory_space<vmem>>, vector<1x16x64xbf16>
    %51 = vector.shape_cast %50 : vector<1x16x64xbf16> to vector<16x64xbf16>
    %cst_39 = arith.constant dense<0.000000e+00> : vector<16x128xf32>
    %52 = tpu.matmul %51, %49, %cst_39 {dimension_numbers = #tpu.dot_dimension_numbers<[1], [0], [0], [1], [0, 0, 1, 1], [], []>} : vector<16x64xbf16>, vector<64x128xbf16>, vector<16x128xf32> -> vector<16x128xf32>
    %53 = arith.truncf %52 : vector<16x128xf32> to vector<16x128xbf16>
    %c1_40 = arith.constant 1 : index
    %c0_41 = arith.constant 0 : index
    %c0_42 = arith.constant 0 : index
    %54 = vector.load %arg5[%c1_40, %c0_41, %c0_42] : memref<9x16x64xbf16, #tpu.memory_space<vmem>>, vector<1x16x64xbf16>
    %55 = vector.shape_cast %54 : vector<1x16x64xbf16> to vector<16x64xbf16>
    %cst_43 = arith.constant dense<0.000000e+00> : vector<16x128xf32>
    %56 = tpu.matmul %55, %49, %cst_43 {dimension_numbers = #tpu.dot_dimension_numbers<[1], [0], [0], [1], [0, 0, 1, 1], [], []>} : vector<16x64xbf16>, vector<64x128xbf16>, vector<16x128xf32> -> vector<16x128xf32>
    %57 = arith.truncf %56 : vector<16x128xf32> to vector<16x128xbf16>
    %c2_44 = arith.constant 2 : index
    %c0_45 = arith.constant 0 : index
    %c0_46 = arith.constant 0 : index
    %58 = vector.load %arg5[%c2_44, %c0_45, %c0_46] : memref<9x16x64xbf16, #tpu.memory_space<vmem>>, vector<1x16x64xbf16>
    %59 = vector.shape_cast %58 : vector<1x16x64xbf16> to vector<16x64xbf16>
    %cst_47 = arith.constant dense<0.000000e+00> : vector<16x128xf32>
    %60 = tpu.matmul %59, %49, %cst_47 {dimension_numbers = #tpu.dot_dimension_numbers<[1], [0], [0], [1], [0, 0, 1, 1], [], []>} : vector<16x64xbf16>, vector<64x128xbf16>, vector<16x128xf32> -> vector<16x128xf32>
    %61 = arith.truncf %60 : vector<16x128xf32> to vector<16x128xbf16>
    %c3_48 = arith.constant 3 : index
    %c0_49 = arith.constant 0 : index
    %c0_50 = arith.constant 0 : index
    %62 = vector.load %arg5[%c3_48, %c0_49, %c0_50] : memref<9x16x64xbf16, #tpu.memory_space<vmem>>, vector<1x16x64xbf16>
    %63 = vector.shape_cast %62 : vector<1x16x64xbf16> to vector<16x64xbf16>
    %cst_51 = arith.constant dense<0.000000e+00> : vector<16x128xf32>
    %64 = tpu.matmul %63, %49, %cst_51 {dimension_numbers = #tpu.dot_dimension_numbers<[1], [0], [0], [1], [0, 0, 1, 1], [], []>} : vector<16x64xbf16>, vector<64x128xbf16>, vector<16x128xf32> -> vector<16x128xf32>
    %65 = arith.truncf %64 : vector<16x128xf32> to vector<16x128xbf16>
    %c4_52 = arith.constant 4 : index
    %c0_53 = arith.constant 0 : index
    %c0_54 = arith.constant 0 : index
    %66 = vector.load %arg5[%c4_52, %c0_53, %c0_54] : memref<9x16x64xbf16, #tpu.memory_space<vmem>>, vector<1x16x64xbf16>
    %67 = vector.shape_cast %66 : vector<1x16x64xbf16> to vector<16x64xbf16>
    %cst_55 = arith.constant dense<0.000000e+00> : vector<16x128xf32>
    %68 = tpu.matmul %67, %49, %cst_55 {dimension_numbers = #tpu.dot_dimension_numbers<[1], [0], [0], [1], [0, 0, 1, 1], [], []>} : vector<16x64xbf16>, vector<64x128xbf16>, vector<16x128xf32> -> vector<16x128xf32>
    %69 = arith.truncf %68 : vector<16x128xf32> to vector<16x128xbf16>
    %c5_56 = arith.constant 5 : index
    %c0_57 = arith.constant 0 : index
    %c0_58 = arith.constant 0 : index
    %70 = vector.load %arg5[%c5_56, %c0_57, %c0_58] : memref<9x16x64xbf16, #tpu.memory_space<vmem>>, vector<1x16x64xbf16>
    %71 = vector.shape_cast %70 : vector<1x16x64xbf16> to vector<16x64xbf16>
    %cst_59 = arith.constant dense<0.000000e+00> : vector<16x128xf32>
    %72 = tpu.matmul %71, %49, %cst_59 {dimension_numbers = #tpu.dot_dimension_numbers<[1], [0], [0], [1], [0, 0, 1, 1], [], []>} : vector<16x64xbf16>, vector<64x128xbf16>, vector<16x128xf32> -> vector<16x128xf32>
    %73 = arith.truncf %72 : vector<16x128xf32> to vector<16x128xbf16>
    %c6_60 = arith.constant 6 : index
    %c0_61 = arith.constant 0 : index
    %c0_62 = arith.constant 0 : index
    %74 = vector.load %arg5[%c6_60, %c0_61, %c0_62] : memref<9x16x64xbf16, #tpu.memory_space<vmem>>, vector<1x16x64xbf16>
    %75 = vector.shape_cast %74 : vector<1x16x64xbf16> to vector<16x64xbf16>
    %cst_63 = arith.constant dense<0.000000e+00> : vector<16x128xf32>
    %76 = tpu.matmul %75, %49, %cst_63 {dimension_numbers = #tpu.dot_dimension_numbers<[1], [0], [0], [1], [0, 0, 1, 1], [], []>} : vector<16x64xbf16>, vector<64x128xbf16>, vector<16x128xf32> -> vector<16x128xf32>
    %77 = arith.truncf %76 : vector<16x128xf32> to vector<16x128xbf16>
    %c7_64 = arith.constant 7 : index
    %c0_65 = arith.constant 0 : index
    %c0_66 = arith.constant 0 : index
    %78 = vector.load %arg5[%c7_64, %c0_65, %c0_66] : memref<9x16x64xbf16, #tpu.memory_space<vmem>>, vector<1x16x64xbf16>
    %79 = vector.shape_cast %78 : vector<1x16x64xbf16> to vector<16x64xbf16>
    %cst_67 = arith.constant dense<0.000000e+00> : vector<16x128xf32>
    %80 = tpu.matmul %79, %49, %cst_67 {dimension_numbers = #tpu.dot_dimension_numbers<[1], [0], [0], [1], [0, 0, 1, 1], [], []>} : vector<16x64xbf16>, vector<64x128xbf16>, vector<16x128xf32> -> vector<16x128xf32>
    %81 = arith.truncf %80 : vector<16x128xf32> to vector<16x128xbf16>
    %c8_68 = arith.constant 8 : index
    %c0_69 = arith.constant 0 : index
    %c0_70 = arith.constant 0 : index
    %82 = vector.load %arg5[%c8_68, %c0_69, %c0_70] : memref<9x16x64xbf16, #tpu.memory_space<vmem>>, vector<1x16x64xbf16>
    %83 = vector.shape_cast %82 : vector<1x16x64xbf16> to vector<16x64xbf16>
    %cst_71 = arith.constant dense<0.000000e+00> : vector<16x128xf32>
    %84 = tpu.matmul %83, %49, %cst_71 {dimension_numbers = #tpu.dot_dimension_numbers<[1], [0], [0], [1], [0, 0, 1, 1], [], []>} : vector<16x64xbf16>, vector<64x128xbf16>, vector<16x128xf32> -> vector<16x128xf32>
    %85 = arith.truncf %84 : vector<16x128xf32> to vector<16x128xbf16>
    %86 = tpu.concatenate %53, %57, %61, %65, %69, %73, %77, %81, %85 in 1 : vector<16x128xbf16>, vector<16x128xbf16>, vector<16x128xbf16>, vector<16x128xbf16>, vector<16x128xbf16>, vector<16x128xbf16>, vector<16x128xbf16>, vector<16x128xbf16>, vector<16x128xbf16> -> vector<16x1152xbf16>
    %c0_72 = arith.constant 0 : index
    %c0_73 = arith.constant 0 : index
    %87 = vector.load %arg6[%c0_72, %c0_73] : memref<1152x128xbf16, #tpu.memory_space<vmem>>, vector<1152x128xbf16>
    %cst_74 = arith.constant dense<0.000000e+00> : vector<16x128xf32>
    %88 = tpu.matmul %86, %87, %cst_74 {dimension_numbers = #tpu.dot_dimension_numbers<[1], [0], [0], [1], [0, 0, 1, 1], [], []>} : vector<16x1152xbf16>, vector<1152x128xbf16>, vector<16x128xf32> -> vector<16x128xf32>
    %c0_75 = arith.constant 0 : index
    %c0_76 = arith.constant 0 : index
    %89 = vector.load %arg7[%c0_75, %c0_76] : memref<1x128xf32, #tpu.memory_space<vmem>>, vector<1x128xf32>
    %90 = vector.broadcast %89 : vector<1x128xf32> to vector<16x128xf32>
    %91 = arith.addf %88, %90 : vector<16x128xf32>
    %cst_77 = arith.constant 0.000000e+00 : f32
    %92 = vector.broadcast %cst_77 : f32 to vector<16x128xf32>
    %93 = arith.cmpf oge, %91, %92 : vector<16x128xf32>
    %cst_78 = arith.constant 2.000000e-01 : f32
    %94 = vector.broadcast %cst_78 : f32 to vector<16x128xf32>
    %95 = arith.mulf %94, %91 : vector<16x128xf32>
    %96 = arith.select %93, %91, %95 : vector<16x128xi1>, vector<16x128xf32>
    %97 = arith.truncf %96 : vector<16x128xf32> to vector<16x128xbf16>
    %c0_79 = arith.constant 0 : index
    %c0_80 = arith.constant 0 : index
    %c0_81 = arith.constant 0 : index
    %98 = vector.load %arg8[%c0_79, %c0_80, %c0_81] : memref<9x4x16xbf16, #tpu.memory_space<vmem>>, vector<1x4x16xbf16>
    %99 = vector.shape_cast %98 : vector<1x4x16xbf16> to vector<4x16xbf16>
    %cst_82 = arith.constant dense<0.000000e+00> : vector<4x128xf32>
    %100 = tpu.matmul %99, %97, %cst_82 {dimension_numbers = #tpu.dot_dimension_numbers<[1], [0], [0], [1], [0, 0, 1, 1], [], []>} : vector<4x16xbf16>, vector<16x128xbf16>, vector<4x128xf32> -> vector<4x128xf32>
    %101 = arith.truncf %100 : vector<4x128xf32> to vector<4x128xbf16>
    %c1_83 = arith.constant 1 : index
    %c0_84 = arith.constant 0 : index
    %c0_85 = arith.constant 0 : index
    %102 = vector.load %arg8[%c1_83, %c0_84, %c0_85] : memref<9x4x16xbf16, #tpu.memory_space<vmem>>, vector<1x4x16xbf16>
    %103 = vector.shape_cast %102 : vector<1x4x16xbf16> to vector<4x16xbf16>
    %cst_86 = arith.constant dense<0.000000e+00> : vector<4x128xf32>
    %104 = tpu.matmul %103, %97, %cst_86 {dimension_numbers = #tpu.dot_dimension_numbers<[1], [0], [0], [1], [0, 0, 1, 1], [], []>} : vector<4x16xbf16>, vector<16x128xbf16>, vector<4x128xf32> -> vector<4x128xf32>
    %105 = arith.truncf %104 : vector<4x128xf32> to vector<4x128xbf16>
    %c2_87 = arith.constant 2 : index
    %c0_88 = arith.constant 0 : index
    %c0_89 = arith.constant 0 : index
    %106 = vector.load %arg8[%c2_87, %c0_88, %c0_89] : memref<9x4x16xbf16, #tpu.memory_space<vmem>>, vector<1x4x16xbf16>
    %107 = vector.shape_cast %106 : vector<1x4x16xbf16> to vector<4x16xbf16>
    %cst_90 = arith.constant dense<0.000000e+00> : vector<4x128xf32>
    %108 = tpu.matmul %107, %97, %cst_90 {dimension_numbers = #tpu.dot_dimension_numbers<[1], [0], [0], [1], [0, 0, 1, 1], [], []>} : vector<4x16xbf16>, vector<16x128xbf16>, vector<4x128xf32> -> vector<4x128xf32>
    %109 = arith.truncf %108 : vector<4x128xf32> to vector<4x128xbf16>
    %c3_91 = arith.constant 3 : index
    %c0_92 = arith.constant 0 : index
    %c0_93 = arith.constant 0 : index
    %110 = vector.load %arg8[%c3_91, %c0_92, %c0_93] : memref<9x4x16xbf16, #tpu.memory_space<vmem>>, vector<1x4x16xbf16>
    %111 = vector.shape_cast %110 : vector<1x4x16xbf16> to vector<4x16xbf16>
    %cst_94 = arith.constant dense<0.000000e+00> : vector<4x128xf32>
    %112 = tpu.matmul %111, %97, %cst_94 {dimension_numbers = #tpu.dot_dimension_numbers<[1], [0], [0], [1], [0, 0, 1, 1], [], []>} : vector<4x16xbf16>, vector<16x128xbf16>, vector<4x128xf32> -> vector<4x128xf32>
    %113 = arith.truncf %112 : vector<4x128xf32> to vector<4x128xbf16>
    %c4_95 = arith.constant 4 : index
    %c0_96 = arith.constant 0 : index
    %c0_97 = arith.constant 0 : index
    %114 = vector.load %arg8[%c4_95, %c0_96, %c0_97] : memref<9x4x16xbf16, #tpu.memory_space<vmem>>, vector<1x4x16xbf16>
    %115 = vector.shape_cast %114 : vector<1x4x16xbf16> to vector<4x16xbf16>
    %cst_98 = arith.constant dense<0.000000e+00> : vector<4x128xf32>
    %116 = tpu.matmul %115, %97, %cst_98 {dimension_numbers = #tpu.dot_dimension_numbers<[1], [0], [0], [1], [0, 0, 1, 1], [], []>} : vector<4x16xbf16>, vector<16x128xbf16>, vector<4x128xf32> -> vector<4x128xf32>
    %117 = arith.truncf %116 : vector<4x128xf32> to vector<4x128xbf16>
    %c5_99 = arith.constant 5 : index
    %c0_100 = arith.constant 0 : index
    %c0_101 = arith.constant 0 : index
    %118 = vector.load %arg8[%c5_99, %c0_100, %c0_101] : memref<9x4x16xbf16, #tpu.memory_space<vmem>>, vector<1x4x16xbf16>
    %119 = vector.shape_cast %118 : vector<1x4x16xbf16> to vector<4x16xbf16>
    %cst_102 = arith.constant dense<0.000000e+00> : vector<4x128xf32>
    %120 = tpu.matmul %119, %97, %cst_102 {dimension_numbers = #tpu.dot_dimension_numbers<[1], [0], [0], [1], [0, 0, 1, 1], [], []>} : vector<4x16xbf16>, vector<16x128xbf16>, vector<4x128xf32> -> vector<4x128xf32>
    %121 = arith.truncf %120 : vector<4x128xf32> to vector<4x128xbf16>
    %c6_103 = arith.constant 6 : index
    %c0_104 = arith.constant 0 : index
    %c0_105 = arith.constant 0 : index
    %122 = vector.load %arg8[%c6_103, %c0_104, %c0_105] : memref<9x4x16xbf16, #tpu.memory_space<vmem>>, vector<1x4x16xbf16>
    %123 = vector.shape_cast %122 : vector<1x4x16xbf16> to vector<4x16xbf16>
    %cst_106 = arith.constant dense<0.000000e+00> : vector<4x128xf32>
    %124 = tpu.matmul %123, %97, %cst_106 {dimension_numbers = #tpu.dot_dimension_numbers<[1], [0], [0], [1], [0, 0, 1, 1], [], []>} : vector<4x16xbf16>, vector<16x128xbf16>, vector<4x128xf32> -> vector<4x128xf32>
    %125 = arith.truncf %124 : vector<4x128xf32> to vector<4x128xbf16>
    %c7_107 = arith.constant 7 : index
    %c0_108 = arith.constant 0 : index
    %c0_109 = arith.constant 0 : index
    %126 = vector.load %arg8[%c7_107, %c0_108, %c0_109] : memref<9x4x16xbf16, #tpu.memory_space<vmem>>, vector<1x4x16xbf16>
    %127 = vector.shape_cast %126 : vector<1x4x16xbf16> to vector<4x16xbf16>
    %cst_110 = arith.constant dense<0.000000e+00> : vector<4x128xf32>
    %128 = tpu.matmul %127, %97, %cst_110 {dimension_numbers = #tpu.dot_dimension_numbers<[1], [0], [0], [1], [0, 0, 1, 1], [], []>} : vector<4x16xbf16>, vector<16x128xbf16>, vector<4x128xf32> -> vector<4x128xf32>
    %129 = arith.truncf %128 : vector<4x128xf32> to vector<4x128xbf16>
    %c8_111 = arith.constant 8 : index
    %c0_112 = arith.constant 0 : index
    %c0_113 = arith.constant 0 : index
    %130 = vector.load %arg8[%c8_111, %c0_112, %c0_113] : memref<9x4x16xbf16, #tpu.memory_space<vmem>>, vector<1x4x16xbf16>
    %131 = vector.shape_cast %130 : vector<1x4x16xbf16> to vector<4x16xbf16>
    %cst_114 = arith.constant dense<0.000000e+00> : vector<4x128xf32>
    %132 = tpu.matmul %131, %97, %cst_114 {dimension_numbers = #tpu.dot_dimension_numbers<[1], [0], [0], [1], [0, 0, 1, 1], [], []>} : vector<4x16xbf16>, vector<16x128xbf16>, vector<4x128xf32> -> vector<4x128xf32>
    %133 = arith.truncf %132 : vector<4x128xf32> to vector<4x128xbf16>
    %134 = tpu.concatenate %101, %105, %109, %113, %117, %121, %125, %129, %133 in 1 : vector<4x128xbf16>, vector<4x128xbf16>, vector<4x128xbf16>, vector<4x128xbf16>, vector<4x128xbf16>, vector<4x128xbf16>, vector<4x128xbf16>, vector<4x128xbf16>, vector<4x128xbf16> -> vector<4x1152xbf16>
    %c0_115 = arith.constant 0 : index
    %c0_116 = arith.constant 0 : index
    %135 = vector.load %arg9[%c0_115, %c0_116] : memref<1152x128xbf16, #tpu.memory_space<vmem>>, vector<1152x128xbf16>
    %cst_117 = arith.constant dense<0.000000e+00> : vector<4x128xf32>
    %136 = tpu.matmul %134, %135, %cst_117 {dimension_numbers = #tpu.dot_dimension_numbers<[1], [0], [0], [1], [0, 0, 1, 1], [], []>} : vector<4x1152xbf16>, vector<1152x128xbf16>, vector<4x128xf32> -> vector<4x128xf32>
    %c0_118 = arith.constant 0 : index
    %c0_119 = arith.constant 0 : index
    %137 = vector.load %arg10[%c0_118, %c0_119] : memref<1x128xf32, #tpu.memory_space<vmem>>, vector<1x128xf32>
    %138 = vector.broadcast %137 : vector<1x128xf32> to vector<4x128xf32>
    %139 = arith.addf %136, %138 : vector<4x128xf32>
    %cst_120 = arith.constant 0.000000e+00 : f32
    %140 = vector.broadcast %cst_120 : f32 to vector<4x128xf32>
    %141 = arith.cmpf oge, %139, %140 : vector<4x128xf32>
    %cst_121 = arith.constant 2.000000e-01 : f32
    %142 = vector.broadcast %cst_121 : f32 to vector<4x128xf32>
    %143 = arith.mulf %142, %139 : vector<4x128xf32>
    %144 = arith.select %141, %139, %143 : vector<4x128xi1>, vector<4x128xf32>
    %145 = arith.truncf %144 : vector<4x128xf32> to vector<4x128xbf16>
    %c0_122 = arith.constant 0 : index
    %c0_123 = arith.constant 0 : index
    %146 = vector.load %arg11[%c0_122, %c0_123] : memref<128x128xbf16, #tpu.memory_space<vmem>>, vector<128x128xbf16>
    %cst_124 = arith.constant dense<0.000000e+00> : vector<4x128xf32>
    %147 = tpu.matmul %145, %146, %cst_124 {dimension_numbers = #tpu.dot_dimension_numbers<[1], [0], [0], [1], [0, 0, 1, 1], [], []>} : vector<4x128xbf16>, vector<128x128xbf16>, vector<4x128xf32> -> vector<4x128xf32>
    %cst_125 = arith.constant dense<0.000000e+00> : vector<128xf32>
    %148 = vector.multi_reduction <add>, %147, %cst_125 [0] : vector<4x128xf32> to vector<128xf32>
    %149 = vector.shape_cast %148 : vector<128xf32> to vector<1x128xf32>
    %cst_126 = arith.constant 4.000000e+00 : f32
    %150 = vector.broadcast %cst_126 : f32 to vector<1x128xf32>
    %151 = arith.divf %149, %150 : vector<1x128xf32>
    %c0_127 = arith.constant 0 : index
    %c0_128 = arith.constant 0 : index
    %152 = vector.load %arg12[%c0_127, %c0_128] : memref<1x128xf32, #tpu.memory_space<vmem>>, vector<1x128xf32>
    %153 = arith.addf %151, %152 : vector<1x128xf32>
    %cst_129 = arith.constant 0.000000e+00 : f32
    %154 = vector.broadcast %cst_129 : f32 to vector<1x128xf32>
    %155 = arith.cmpf oge, %153, %154 : vector<1x128xf32>
    %cst_130 = arith.constant 2.000000e-01 : f32
    %156 = vector.broadcast %cst_130 : f32 to vector<1x128xf32>
    %157 = arith.mulf %156, %153 : vector<1x128xf32>
    %158 = arith.select %155, %153, %157 : vector<1x128xi1>, vector<1x128xf32>
    %cst_131 = arith.constant 1.41421354 : f32
    %159 = vector.broadcast %cst_131 : f32 to vector<1x128xf32>
    %160 = arith.mulf %158, %159 : vector<1x128xf32>
    %c0_132 = arith.constant 0 : index
    %c0_133 = arith.constant 0 : index
    %c0_134 = arith.constant 0 : index
    %161 = vector.load %arg13[%c0_132, %c0_133, %c0_134] : memref<1x1x128xf32, #tpu.memory_space<vmem>>, vector<1x1x128xf32>
    %162 = vector.shape_cast %161 : vector<1x1x128xf32> to vector<1x128xf32>
    %163 = vector.shape_cast %160 : vector<1x128xf32> to vector<1x1x128xf32>
    tpu.vector_store %arg13[%c0_132, %c0_133, %c0_134], %163 {strides = array<i32>} : memref<1x1x128xf32, #tpu.memory_space<vmem>>, vector<1x1x128xf32>,
    return
  }
  func.func @transform_0(%arg0: i32) -> (i32, i32, i32) {
    %c0_i32 = arith.constant 0 : i32
    %c0_i32_0 = arith.constant 0 : i32
    %c0_i32_1 = arith.constant 0 : i32
    return %arg0, %c0_i32, %c0_i32_0 : i32, i32, i32
  }
  func.func @transform_1(%arg0: i32) -> (i32, i32, i32) {
    %c0_i32 = arith.constant 0 : i32
    %c0_i32_0 = arith.constant 0 : i32
    %c0_i32_1 = arith.constant 0 : i32
    %c0_i32_2 = arith.constant 0 : i32
    return %c0_i32, %c0_i32_0, %c0_i32_1 : i32, i32, i32
  }
  func.func @transform_2(%arg0: i32) -> (i32, i32) {
    %c0_i32 = arith.constant 0 : i32
    %c0_i32_0 = arith.constant 0 : i32
    %c0_i32_1 = arith.constant 0 : i32
    return %c0_i32, %c0_i32_0 : i32, i32
  }
  func.func @transform_3(%arg0: i32) -> (i32, i32) {
    %c0_i32 = arith.constant 0 : i32
    %c0_i32_0 = arith.constant 0 : i32
    %c0_i32_1 = arith.constant 0 : i32
    return %c0_i32, %c0_i32_0 : i32, i32
  }
  func.func @transform_4(%arg0: i32) -> (i32, i32, i32) {
    %c0_i32 = arith.constant 0 : i32
    %c0_i32_0 = arith.constant 0 : i32
    %c0_i32_1 = arith.constant 0 : i32
    %c0_i32_2 = arith.constant 0 : i32
    return %c0_i32, %c0_i32_0, %c0_i32_1 : i32, i32, i32
  }
  func.func @transform_5(%arg0: i32) -> (i32, i32) {
    %c0_i32 = arith.constant 0 : i32
    %c0_i32_0 = arith.constant 0 : i32
    %c0_i32_1 = arith.constant 0 : i32
    return %c0_i32, %c0_i32_0 : i32, i32
  }
  func.func @transform_6(%arg0: i32) -> (i32, i32) {
    %c0_i32 = arith.constant 0 : i32
    %c0_i32_0 = arith.constant 0 : i32
    %c0_i32_1 = arith.constant 0 : i32
    return %c0_i32, %c0_i32_0 : i32, i32
  }
  func.func @transform_7(%arg0: i32) -> (i32, i32, i32) {
    %c0_i32 = arith.constant 0 : i32
    %c0_i32_0 = arith.constant 0 : i32
    %c0_i32_1 = arith.constant 0 : i32
    %c0_i32_2 = arith.constant 0 : i32
    return %c0_i32, %c0_i32_0, %c0_i32_1 : i32, i32, i32
  }
  func.func @transform_8(%arg0: i32) -> (i32, i32) {
    %c0_i32 = arith.constant 0 : i32
    %c0_i32_0 = arith.constant 0 : i32
    %c0_i32_1 = arith.constant 0 : i32
    return %c0_i32, %c0_i32_0 : i32, i32
  }
  func.func @transform_9(%arg0: i32) -> (i32, i32) {
    %c0_i32 = arith.constant 0 : i32
    %c0_i32_0 = arith.constant 0 : i32
    %c0_i32_1 = arith.constant 0 : i32
    return %c0_i32, %c0_i32_0 : i32, i32
  }
  func.func @transform_10(%arg0: i32) -> (i32, i32) {
    %c0_i32 = arith.constant 0 : i32
    %c0_i32_0 = arith.constant 0 : i32
    %c0_i32_1 = arith.constant 0 : i32
    return %c0_i32, %c0_i32_0 : i32, i32
  }
  func.func @transform_11(%arg0: i32) -> (i32, i32) {
    %c0_i32 = arith.constant 0 : i32
    %c0_i32_0 = arith.constant 0 : i32
    %c0_i32_1 = arith.constant 0 : i32
    return %c0_i32, %c0_i32_0 : i32, i32
  }
  func.func @transform_12(%arg0: i32) -> (i32, i32, i32) {
    %c0_i32 = arith.constant 0 : i32
    %c0_i32_0 = arith.constant 0 : i32
    %c0_i32_1 = arith.constant 0 : i32
    return %arg0, %c0_i32, %c0_i32_0 : i32, i32, i32
  }
}

</mosaic_0001>

<llo_original>
// kernel: tpu_custom_call.1
$region0: #{tpu_custom_call.1}
  #allocation0 [shape = 'u32[]', space=smem, size = 0x4, offset = 0x4, fixed_abs, tag = 'smem constant byte address 0x4 - core index']
  #allocation1 [shape = 'u32[72,128]{1,0:T(1,128)}', space=vmem, size = 0x9000, scoped, tag = 'internal scratch']
  %s0 = inlined_call_operand.hbm [shape: bf16[2,256,128], index: 0, kind: input, shape index: {}]
  %s1 = inlined_call_operand.hbm [shape: bf16[9,64,256], index: 1, kind: input, shape index: {}]
  %s2 = inlined_call_operand.hbm [shape: bf16[1152,128], index: 2, kind: input, shape index: {}]
  %s3 = inlined_call_operand.vmem [shape: f32[1,128], index: 3, kind: input, shape index: {}]
  %s4 = inlined_call_operand.hbm [shape: bf16[9,16,64], index: 4, kind: input, shape index: {}]
  %s5 = inlined_call_operand.hbm [shape: bf16[1152,128], index: 5, kind: input, shape index: {}]
  %s6 = inlined_call_operand.vmem [shape: f32[1,128], index: 6, kind: input, shape index: {}]
  %s7 = inlined_call_operand.hbm [shape: bf16[9,4,16], index: 7, kind: input, shape index: {}]
  %s8 = inlined_call_operand.hbm [shape: bf16[1152,128], index: 8, kind: input, shape index: {}]
  %s9 = inlined_call_operand.vmem [shape: f32[1,128], index: 9, kind: input, shape index: {}]
  %s10 = inlined_call_operand.hbm [shape: bf16[128,128], index: 10, kind: input, shape index: {}]
  %s11 = inlined_call_operand.vmem [shape: f32[1,128], index: 11, kind: input, shape index: {}]
  %s12 = inlined_call_operand.hbm [shape: f32[2,1,128], index: 12, kind: output, shape index: {}]
  %s13 = sld [smem:[#allocation0]]
  $region113: #{tpu_custom_call.1} parent=0
    _
  %s15 = ssub.s32 1, %s13
  %s16 = scalar_select 0, %s15, %s13
  $region1: #{tpu_custom_call.1} parent=0
    #allocation2 [shape = 'u8[131072]{0}', space=vmem, size = 0x20000, scoped, tag = 'input window, operand 0']
    #allocation3 [shape = 's32[2]{0}', space=sflag, size = 0x8, scoped, tag = 'scoped memory for tpu_custom_call.1']
    #allocation4 [shape = 's32[2]{0}', space=sflag, size = 0x8, scoped, tag = 'scoped memory for tpu_custom_call.1']
    #allocation5 [shape = 'u8[294912]{0}', space=vmem, size = 0x48000, scoped, tag = 'input window, operand 1, single buffered']
    #allocation6 [shape = 's32[1]{0}', space=sflag, size = 0x4, scoped, tag = 'scoped memory for tpu_custom_call.1']
    #allocation7 [shape = 'u8[294912]{0}', space=vmem, size = 0x48000, scoped, tag = 'input window, operand 2, single buffered']
    #allocation8 [shape = 'u8[36864]{0}', space=vmem, size = 0x9000, scoped, tag = 'input window, operand 4, single buffered']
    #allocation9 [shape = 's32[1]{0}', space=sflag, size = 0x4, scoped, tag = 'scoped memory for tpu_custom_call.1']
    #allocation10 [shape = 'u8[294912]{0}', space=vmem, size = 0x48000, scoped, tag = 'input window, operand 5, single buffered']
    #allocation11 [shape = 'u8[9216]{0}', space=vmem, size = 0x2400, scoped, tag = 'input window, operand 7, single buffered']
    #allocation12 [shape = 's32[1]{0}', space=sflag, size = 0x4, scoped, tag = 'scoped memory for tpu_custom_call.1']
    #allocation13 [shape = 'u8[294912]{0}', space=vmem, size = 0x48000, scoped, tag = 'input window, operand 8, single buffered']
    #allocation14 [shape = 'u8[32768]{0}', space=vmem, size = 0x8000, scoped, tag = 'input window, operand 10, single buffered']
    #allocation15 [shape = 's32[1]{0}', space=sflag, size = 0x4, scoped, tag = 'scoped memory for tpu_custom_call.1']
    #allocation16 [shape = 'u8[1024]{0}', space=vmem, size = 0x400, scoped, tag = 'output window, operand 0']
    %17 = vsyncpa [#allocation3], 0
    %s18 = scalar_lea.sflag [#allocation3], 1
    %19 = vsyncpa %s18, 0
    %20 = vsyncpa [#allocation6], 0
    %21 = vsyncpa [#allocation9], 0
    %22 = vsyncpa [#allocation12], 0
    %23 = vsyncpa [#allocation15], 0
    %24 = vsyncpa [#allocation4], 0
    %s25 = scalar_lea.sflag [#allocation4], 1
    %26 = vsyncpa %s25, 0
    loop: start=0, step=1, limit=4
    $region2: #{tpu_custom_call.1} parent=1 // loop_pre_header
      _
    $region3: #{tpu_custom_call.1} parent=1 // loop_header
      %s28 = sphi 0, %s32
      %p29 = scmp.ge.s32.totalorder %s28, 4
      %s38 = sphi 0, %s40
      %s41 = sphi 0, %s38
      %s42 = sphi 0, %s41
      %s58 = sphi 0, %s42
      %s62 = sphi 0, %s62
      %s64 = sphi 0, %s62
      %s65 = sphi 0, %s64
      %s79 = sphi 0, %s65
      %s83 = sphi 0, %s83
      %s85 = sphi 0, %s83
      %s86 = sphi 0, %s85
      %s100 = sphi 0, %s86
      %s104 = sphi 0, %s104
      %s106 = sphi 0, %s104
      %s107 = sphi 0, %s106
      %s121 = sphi 0, %s107
      %s125 = sphi 0, %s125
      %s127 = sphi 0, %s125
      %s128 = sphi 0, %s127
      %s142 = sphi 0, %s128
      %s146 = sphi 0, %s146
      %s148 = sphi 0, %s146
      %s149 = sphi 0, %s148
      %s163 = sphi 0, %s149
      %s167 = sphi 0, %s167
      %s169 = sphi 0, %s167
      %s170 = sphi 0, %s169
      %s184 = sphi 0, %s170
      %s188 = sphi 0, %s188
      %s190 = sphi 0, %s188
      %s191 = sphi 0, %s190
      %s205 = sphi 0, %s191
      %s209 = sphi 0, %s209
      %s211 = sphi 0, %s209
      %s212 = sphi 0, %s211
      %s226 = sphi 0, %s212
      %s230 = sphi 0, %s230
      %s232 = sphi 0, %s230
      %s233 = sphi 0, %s232
      %s247 = sphi 0, %s233
      %s251 = sphi 0, %s251
      %s253 = sphi 0, %s251
      %s254 = sphi 0, %s253
      %s268 = sphi 0, %s254
      %s272 = sphi 0, %s272
      %s274 = sphi 0, %s272
      %s275 = sphi 0, %s274
      %s289 = sphi 0, %s275
      %s295 = sphi 0, %s297
      %s298 = sphi 0, %s295
      %s299 = sphi 0, %s298
      %s315 = sphi 0, %s299
    $region4: #{tpu_custom_call.1} parent=1 // loop_header_branch
      %31 = sbr.rel (%p29) target = $region8
    $region5: #{tpu_custom_call.1} parent=1 // loop_body
      %s33 = ssub.s32 %s28, 1
      %s34 = ssub.s32 %s28, 2
      %s35 = sadd.s32 %s28, 1
      %s36 = ssub.s32 %s28, %s35
      %p37 = scmp.eq.s32.totalorder %s36, 0
      %s39 = sadd.s32 %s38, 1
      %s40 = scalar_select %p37, %s38, %s39
      %p43 = pneg %p37
      %p44 = scmp.eq.s32.totalorder %s28, 1
      %p45 = por %p43, %p44
      %p46 = scmp.ne.s32.totalorder %s38, %s41
      %p47 = scmp.eq.s32.totalorder %s28, 0
      %p48 = por %p46, %p47
      %p49 = scmp.ne.s32.totalorder %s38, %s41
      %p50 = scmp.eq.s32.totalorder %s33, 1
      %p51 = por %p49, %p50
      %p52 = scmp.ne.s32.totalorder %s41, %s42
      %p53 = scmp.eq.s32.totalorder %s33, 0
      %p54 = por %p52, %p53
      %p55 = scmp.ne.s32.totalorder %s41, %s42
      %p56 = scmp.eq.s32.totalorder %s34, 1
      %p57 = por %p55, %p56
      %p59 = scmp.ne.s32.totalorder %s42, %s58
      %p60 = scmp.eq.s32.totalorder %s34, 0
      %p61 = por %p59, %p60
      %s63 = sadd.s32 %s62, 1
      %p66 = scmp.eq.s32.totalorder %s28, 1
      %p67 = scmp.ne.s32.totalorder %s62, %s64
      %p68 = scmp.eq.s32.totalorder %s28, 0
      %p69 = por %p67, %p68
      %p70 = scmp.ne.s32.totalorder %s62, %s64
      %p71 = scmp.eq.s32.totalorder %s33, 1
      %p72 = por %p70, %p71
      %p73 = scmp.ne.s32.totalorder %s64, %s65
      %p74 = scmp.eq.s32.totalorder %s33, 0
      %p75 = por %p73, %p74
      %p76 = scmp.ne.s32.totalorder %s64, %s65
      %p77 = scmp.eq.s32.totalorder %s34, 1
      %p78 = por %p76, %p77
      %p80 = scmp.ne.s32.totalorder %s65, %s79
      %p81 = scmp.eq.s32.totalorder %s34, 0
      %p82 = por %p80, %p81
      %s84 = sadd.s32 %s83, 1
      %p87 = scmp.eq.s32.totalorder %s28, 1
      %p88 = scmp.ne.s32.totalorder %s83, %s85
      %p89 = scmp.eq.s32.totalorder %s28, 0
      %p90 = por %p88, %p89
      %p91 = scmp.ne.s32.totalorder %s83, %s85
      %p92 = scmp.eq.s32.totalorder %s33, 1
      %p93 = por %p91, %p92
      %p94 = scmp.ne.s32.totalorder %s85, %s86
      %p95 = scmp.eq.s32.totalorder %s33, 0
      %p96 = por %p94, %p95
      %p97 = scmp.ne.s32.totalorder %s85, %s86
      %p98 = scmp.eq.s32.totalorder %s34, 1
      %p99 = por %p97, %p98
      %p101 = scmp.ne.s32.totalorder %s86, %s100
      %p102 = scmp.eq.s32.totalorder %s34, 0
      %p103 = por %p101, %p102
      %s105 = sadd.s32 %s104, 1
      %p108 = scmp.eq.s32.totalorder %s28, 1
      %p109 = scmp.ne.s32.totalorder %s104, %s106
      %p110 = scmp.eq.s32.totalorder %s28, 0
      %p111 = por %p109, %p110
      %p112 = scmp.ne.s32.totalorder %s104, %s106
      %p113 = scmp.eq.s32.totalorder %s33, 1
      %p114 = por %p112, %p113
      %p115 = scmp.ne.s32.totalorder %s106, %s107
      %p116 = scmp.eq.s32.totalorder %s33, 0
      %p117 = por %p115, %p116
      %p118 = scmp.ne.s32.totalorder %s106, %s107
      %p119 = scmp.eq.s32.totalorder %s34, 1
      %p120 = por %p118, %p119
      %p122 = scmp.ne.s32.totalorder %s107, %s121
      %p123 = scmp.eq.s32.totalorder %s34, 0
      %p124 = por %p122, %p123
      %s126 = sadd.s32 %s125, 1
      %p129 = scmp.eq.s32.totalorder %s28, 1
      %p130 = scmp.ne.s32.totalorder %s125, %s127
      %p131 = scmp.eq.s32.totalorder %s28, 0
      %p132 = por %p130, %p131
      %p133 = scmp.ne.s32.totalorder %s125, %s127
      %p134 = scmp.eq.s32.totalorder %s33, 1
      %p135 = por %p133, %p134
      %p136 = scmp.ne.s32.totalorder %s127, %s128
      %p137 = scmp.eq.s32.totalorder %s33, 0
      %p138 = por %p136, %p137
      %p139 = scmp.ne.s32.totalorder %s127, %s128
      %p140 = scmp.eq.s32.totalorder %s34, 1
      %p141 = por %p139, %p140
      %p143 = scmp.ne.s32.totalorder %s128, %s142
      %p144 = scmp.eq.s32.totalorder %s34, 0
      %p145 = por %p143, %p144
      %s147 = sadd.s32 %s146, 1
      %p150 = scmp.eq.s32.totalorder %s28, 1
      %p151 = scmp.ne.s32.totalorder %s146, %s148
      %p152 = scmp.eq.s32.totalorder %s28, 0
      %p153 = por %p151, %p152
      %p154 = scmp.ne.s32.totalorder %s146, %s148
      %p155 = scmp.eq.s32.totalorder %s33, 1
      %p156 = por %p154, %p155
      %p157 = scmp.ne.s32.totalorder %s148, %s149
      %p158 = scmp.eq.s32.totalorder %s33, 0
      %p159 = por %p157, %p158
      %p160 = scmp.ne.s32.totalorder %s148, %s149
      %p161 = scmp.eq.s32.totalorder %s34, 1
      %p162 = por %p160, %p161
      %p164 = scmp.ne.s32.totalorder %s149, %s163
      %p165 = scmp.eq.s32.totalorder %s34, 0
      %p166 = por %p164, %p165
      %s168 = sadd.s32 %s167, 1
      %p171 = scmp.eq.s32.totalorder %s28, 1
      %p172 = scmp.ne.s32.totalorder %s167, %s169
      %p173 = scmp.eq.s32.totalorder %s28, 0
      %p174 = por %p172, %p173
      %p175 = scmp.ne.s32.totalorder %s167, %s169
      %p176 = scmp.eq.s32.totalorder %s33, 1
      %p177 = por %p175, %p176
      %p178 = scmp.ne.s32.totalorder %s169, %s170
      %p179 = scmp.eq.s32.totalorder %s33, 0
      %p180 = por %p178, %p179
      %p181 = scmp.ne.s32.totalorder %s169, %s170
      %p182 = scmp.eq.s32.totalorder %s34, 1
      %p183 = por %p181, %p182
      %p185 = scmp.ne.s32.totalorder %s170, %s184
      %p186 = scmp.eq.s32.totalorder %s34, 0
      %p187 = por %p185, %p186
      %s189 = sadd.s32 %s188, 1
      %p192 = scmp.eq.s32.totalorder %s28, 1
      %p193 = scmp.ne.s32.totalorder %s188, %s190
      %p194 = scmp.eq.s32.totalorder %s28, 0
      %p195 = por %p193, %p194
      %p196 = scmp.ne.s32.totalorder %s188, %s190
      %p197 = scmp.eq.s32.totalorder %s33, 1
      %p198 = por %p196, %p197
      %p199 = scmp.ne.s32.totalorder %s190, %s191
      %p200 = scmp.eq.s32.totalorder %s33, 0
      %p201 = por %p199, %p200
      %p202 = scmp.ne.s32.totalorder %s190, %s191
      %p203 = scmp.eq.s32.totalorder %s34, 1
      %p204 = por %p202, %p203
      %p206 = scmp.ne.s32.totalorder %s191, %s205
      %p207 = scmp.eq.s32.totalorder %s34, 0
      %p208 = por %p206, %p207
      %s210 = sadd.s32 %s209, 1
      %p213 = scmp.eq.s32.totalorder %s28, 1
      %p214 = scmp.ne.s32.totalorder %s209, %s211
      %p215 = scmp.eq.s32.totalorder %s28, 0
      %p216 = por %p214, %p215
      %p217 = scmp.ne.s32.totalorder %s209, %s211
      %p218 = scmp.eq.s32.totalorder %s33, 1
      %p219 = por %p217, %p218
      %p220 = scmp.ne.s32.totalorder %s211, %s212
      %p221 = scmp.eq.s32.totalorder %s33, 0
      %p222 = por %p220, %p221
      %p223 = scmp.ne.s32.totalorder %s211, %s212
      %p224 = scmp.eq.s32.totalorder %s34, 1
      %p225 = por %p223, %p224
      %p227 = scmp.ne.s32.totalorder %s212, %s226
      %p228 = scmp.eq.s32.totalorder %s34, 0
      %p229 = por %p227, %p228
      %s231 = sadd.s32 %s230, 1
      %p234 = scmp.eq.s32.totalorder %s28, 1
      %p235 = scmp.ne.s32.totalorder %s230, %s232
      %p236 = scmp.eq.s32.totalorder %s28, 0
      %p237 = por %p235, %p236
      %p238 = scmp.ne.s32.totalorder %s230, %s232
      %p239 = scmp.eq.s32.totalorder %s33, 1
      %p240 = por %p238, %p239
      %p241 = scmp.ne.s32.totalorder %s232, %s233
      %p242 = scmp.eq.s32.totalorder %s33, 0
      %p243 = por %p241, %p242
      %p244 = scmp.ne.s32.totalorder %s232, %s233
      %p245 = scmp.eq.s32.totalorder %s34, 1
      %p246 = por %p244, %p245
      %p248 = scmp.ne.s32.totalorder %s233, %s247
      %p249 = scmp.eq.s32.totalorder %s34, 0
      %p250 = por %p248, %p249
      %s252 = sadd.s32 %s251, 1
      %p255 = scmp.eq.s32.totalorder %s28, 1
      %p256 = scmp.ne.s32.totalorder %s251, %s253
      %p257 = scmp.eq.s32.totalorder %s28, 0
      %p258 = por %p256, %p257
      %p259 = scmp.ne.s32.totalorder %s251, %s253
      %p260 = scmp.eq.s32.totalorder %s33, 1
      %p261 = por %p259, %p260
      %p262 = scmp.ne.s32.totalorder %s253, %s254
      %p263 = scmp.eq.s32.totalorder %s33, 0
      %p264 = por %p262, %p263
      %p265 = scmp.ne.s32.totalorder %s253, %s254
      %p266 = scmp.eq.s32.totalorder %s34, 1
      %p267 = por %p265, %p266
      %p269 = scmp.ne.s32.totalorder %s254, %s268
      %p270 = scmp.eq.s32.totalorder %s34, 0
      %p271 = por %p269, %p270
      %s273 = sadd.s32 %s272, 1
      %p276 = scmp.eq.s32.totalorder %s28, 1
      %p277 = scmp.ne.s32.totalorder %s272, %s274
      %p278 = scmp.eq.s32.totalorder %s28, 0
      %p279 = por %p277, %p278
      %p280 = scmp.ne.s32.totalorder %s272, %s274
      %p281 = scmp.eq.s32.totalorder %s33, 1
      %p282 = por %p280, %p281
      %p283 = scmp.ne.s32.totalorder %s274, %s275
      %p284 = scmp.eq.s32.totalorder %s33, 0
      %p285 = por %p283, %p284
      %p286 = scmp.ne.s32.totalorder %s274, %s275
      %p287 = scmp.eq.s32.totalorder %s34, 1
      %p288 = por %p286, %p287
      %p290 = scmp.ne.s32.totalorder %s275, %s289
      %p291 = scmp.eq.s32.totalorder %s34, 0
      %p292 = por %p290, %p291
      %s293 = ssub.s32 %s28, %s35
      %p294 = scmp.eq.s32.totalorder %s293, 0
      %s296 = sadd.s32 %s295, 1
      %s297 = scalar_select %p294, %s295, %s296
      %p300 = pneg %p294
      %p301 = scmp.eq.s32.totalorder %s28, 1
      %p302 = por %p300, %p301
      %p303 = scmp.ne.s32.totalorder %s295, %s298
      %p304 = scmp.eq.s32.totalorder %s28, 0
      %p305 = por %p303, %p304
      %p306 = scmp.ne.s32.totalorder %s295, %s298
      %p307 = scmp.eq.s32.totalorder %s33, 1
      %p308 = por %p306, %p307
      %p309 = scmp.ne.s32.totalorder %s298, %s299
      %p310 = scmp.eq.s32.totalorder %s33, 0
      %p311 = por %p309, %p310
      %p312 = scmp.ne.s32.totalorder %s298, %s299
      %p313 = scmp.eq.s32.totalorder %s34, 1
      %p314 = por %p312, %p313
      %p316 = scmp.ne.s32.totalorder %s299, %s315
      %p317 = scmp.eq.s32.totalorder %s34, 0
      %p318 = por %p316, %p317
      %p319 = scmp.le.s32.totalorder 1, %s28
      %p320 = scmp.lt.s32.totalorder %s28, 3
      %p321 = pnand %p319, %p320
      %p322 = pneg %p321
      // Predicated region
      $region9: #{tpu_custom_call.1} parent=5 // pred_check
        _
      $region10: #{tpu_custom_call.1} parent=5 // pred_check_branch
        %324 = sbr.rel (%p321) target = $region12
      $region11: #{tpu_custom_call.1} parent=5 // pred_region
        %s325 = ssub.s32 %s28, 1
        // Predicated region
        $region13: #{tpu_custom_call.1} parent=11 // pred_check
          %p326 = pneg %p75
        $region14: #{tpu_custom_call.1} parent=11 // pred_check_branch
          %328 = sbr.rel (%p326) target = $region16
        $region15: #{tpu_custom_call.1} parent=11 // pred_region
          %330 = vsyncadd [#allocation6], 0
          %s331 = sshll.u32 %s1, 4
          %s332 = int_to_ptr.hbm [resolvable:$true] %s331
          %s333 = sshll.u32 [#allocation5], 4
          %s334 = int_to_ptr.vmem [resolvable:$true] %s333
          %339 = dma.hbm_to_vmem [thread:$0]  %s332, 9216, %s334, [#allocation6], 128, 128, 8
        $region16: #{tpu_custom_call.1} parent=11 // pred_fallthru
          _
        // Predicated region
        $region17: #{tpu_custom_call.1} parent=11 // pred_check
          %p340 = pneg %p96
        $region18: #{tpu_custom_call.1} parent=11 // pred_check_branch
          %342 = sbr.rel (%p340) target = $region20
        $region19: #{tpu_custom_call.1} parent=11 // pred_region
          %344 = vsyncadd [#allocation6], 0
          %s345 = sshll.u32 %s2, 4
          %s346 = int_to_ptr.hbm [resolvable:$true] %s345
          %s347 = sshll.u32 [#allocation7], 4
          %s348 = int_to_ptr.vmem [resolvable:$true] %s347
          %353 = dma.hbm_to_vmem [thread:$0]  %s346, 9216, %s348, [#allocation6], 64, 64, 4
        $region20: #{tpu_custom_call.1} parent=11 // pred_fallthru
          _
        // Predicated region
        $region21: #{tpu_custom_call.1} parent=11 // pred_check
          %p354 = pneg %p117
        $region22: #{tpu_custom_call.1} parent=11 // pred_check_branch
          %356 = sbr.rel (%p354) target = $region24
        $region23: #{tpu_custom_call.1} parent=11 // pred_region
          _
        $region24: #{tpu_custom_call.1} parent=11 // pred_fallthru
          _
        // Predicated region
        $region25: #{tpu_custom_call.1} parent=11 // pred_check
          %p357 = pneg %p138
        $region26: #{tpu_custom_call.1} parent=11 // pred_check_branch
          %359 = sbr.rel (%p357) target = $region28
        $region27: #{tpu_custom_call.1} parent=11 // pred_region
          %361 = vsyncadd [#allocation9], 0
          %s362 = sshll.u32 %s4, 4
          %s363 = int_to_ptr.hbm [resolvable:$true] %s362
          %s364 = sshll.u32 [#allocation8], 4
          %s365 = int_to_ptr.vmem [resolvable:$true] %s364
          %370 = dma.hbm_to_vmem [thread:$0]  %s363, 1152, %s365, [#allocation9], 64, 64, 4
        $region28: #{tpu_custom_call.1} parent=11 // pred_fallthru
          _
        // Predicated region
        $region29: #{tpu_custom_call.1} parent=11 // pred_check
          %p371 = pneg %p159
        $region30: #{tpu_custom_call.1} parent=11 // pred_check_branch
          %373 = sbr.rel (%p371) target = $region32
        $region31: #{tpu_custom_call.1} parent=11 // pred_region
          %375 = vsyncadd [#allocation9], 0
          %s376 = sshll.u32 %s5, 4
          %s377 = int_to_ptr.hbm [resolvable:$true] %s376
          %s378 = sshll.u32 [#allocation10], 4
          %s379 = int_to_ptr.vmem [resolvable:$true] %s378
          %384 = dma.hbm_to_vmem [thread:$0]  %s377, 9216, %s379, [#allocation9], 64, 64, 4
        $region32: #{tpu_custom_call.1} parent=11 // pred_fallthru
          _
        // Predicated region
        $region33: #{tpu_custom_call.1} parent=11 // pred_check
          %p385 = pneg %p180
        $region34: #{tpu_custom_call.1} parent=11 // pred_check_branch
          %387 = sbr.rel (%p385) target = $region36
        $region35: #{tpu_custom_call.1} parent=11 // pred_region
          _
        $region36: #{tpu_custom_call.1} parent=11 // pred_fallthru
          _
        // Predicated region
        $region37: #{tpu_custom_call.1} parent=11 // pred_check
          %p388 = pneg %p201
        $region38: #{tpu_custom_call.1} parent=11 // pred_check_branch
          %390 = sbr.rel (%p388) target = $region40
        $region39: #{tpu_custom_call.1} parent=11 // pred_region
          %392 = vsyncadd [#allocation12], 0
          %s393 = sshll.u32 %s7, 4
          %s394 = int_to_ptr.hbm [resolvable:$true] %s393
          %s395 = sshll.u32 [#allocation11], 4
          %s396 = int_to_ptr.vmem [resolvable:$true] %s395
          %401 = dma.hbm_to_vmem [thread:$0]  %s394, 288, %s396, [#allocation12], 32, 32, 2
        $region40: #{tpu_custom_call.1} parent=11 // pred_fallthru
          _
        // Predicated region
        $region41: #{tpu_custom_call.1} parent=11 // pred_check
          %p402 = pneg %p222
        $region42: #{tpu_custom_call.1} parent=11 // pred_check_branch
          %404 = sbr.rel (%p402) target = $region44
        $region43: #{tpu_custom_call.1} parent=11 // pred_region
          %406 = vsyncadd [#allocation12], 0
          %s407 = sshll.u32 %s8, 4
          %s408 = int_to_ptr.hbm [resolvable:$true] %s407
          %s409 = sshll.u32 [#allocation13], 4
          %s410 = int_to_ptr.vmem [resolvable:$true] %s409
          %415 = dma.hbm_to_vmem [thread:$0]  %s408, 9216, %s410, [#allocation12], 64, 64, 4
        $region44: #{tpu_custom_call.1} parent=11 // pred_fallthru
          _
        // Predicated region
        $region45: #{tpu_custom_call.1} parent=11 // pred_check
          %p416 = pneg %p243
        $region46: #{tpu_custom_call.1} parent=11 // pred_check_branch
          %418 = sbr.rel (%p416) target = $region48
        $region47: #{tpu_custom_call.1} parent=11 // pred_region
          _
        $region48: #{tpu_custom_call.1} parent=11 // pred_fallthru
          _
        // Predicated region
        $region49: #{tpu_custom_call.1} parent=11 // pred_check
          %p419 = pneg %p264
        $region50: #{tpu_custom_call.1} parent=11 // pred_check_branch
          %421 = sbr.rel (%p419) target = $region52
        $region51: #{tpu_custom_call.1} parent=11 // pred_region
          %423 = vsyncadd [#allocation15], 0
          %s424 = sshll.u32 %s10, 4
          %s425 = int_to_ptr.hbm [resolvable:$true] %s424
          %s426 = sshll.u32 [#allocation14], 4
          %s427 = int_to_ptr.vmem [resolvable:$true] %s426
          %432 = dma.hbm_to_vmem [thread:$0]  %s425, 1024, %s427, [#allocation15], 64, 64, 4
        $region52: #{tpu_custom_call.1} parent=11 // pred_fallthru
          _
        // Predicated region
        $region53: #{tpu_custom_call.1} parent=11 // pred_check
          %p433 = pneg %p285
        $region54: #{tpu_custom_call.1} parent=11 // pred_check_branch
          %435 = sbr.rel (%p433) target = $region56
        $region55: #{tpu_custom_call.1} parent=11 // pred_region
          _
        $region56: #{tpu_custom_call.1} parent=11 // pred_fallthru
          _
      $region12: #{tpu_custom_call.1} parent=5 // pred_fallthru
        _
      %p436 = scmp.lt.s32.totalorder %s28, 2
      // Predicated region
      $region57: #{tpu_custom_call.1} parent=5 // pred_check
        %p437 = pneg %p436
      $region58: #{tpu_custom_call.1} parent=5 // pred_check_branch
        %439 = sbr.rel (%p437) target = $region60
      $region59: #{tpu_custom_call.1} parent=5 // pred_region
        // Predicated region
        $region61: #{tpu_custom_call.1} parent=59 // pred_check
          %p440 = pneg %p48
        $region62: #{tpu_custom_call.1} parent=59 // pred_check_branch
          %442 = sbr.rel (%p440) target = $region64
        $region63: #{tpu_custom_call.1} parent=59 // pred_region
          %s443 = sand.u32 %s38, 1
          %s444 = scalar_lea.sflag [#allocation3], %s443
          %s445 = sand.u32 %s38, 1
          %s446 = smul.addr %s445, 128
          %s447 = scalar_lea.vmem [#allocation2], %s446
          %449 = vsyncadd %s444, 0
          %s450 = smul.addr %s28, 32
          %s451 = smul.addr %s450, 4
          %s452 = scalar_lea.hbm %s0, %s451
          %s453 = sshll.u32 %s452, 4
          %s454 = int_to_ptr.hbm [resolvable:$true] %s453
          %s455 = sshll.u32 %s447, 4
          %s456 = int_to_ptr.vmem [resolvable:$true] %s455
          %461 = dma.hbm_to_vmem [thread:$0]  %s454, 2048, %s456, %s444, 64, 64, 4
        $region64: #{tpu_custom_call.1} parent=59 // pred_fallthru
          _
      $region60: #{tpu_custom_call.1} parent=5 // pred_fallthru
        _
      %p462 = scmp.le.s32.totalorder 1, %s28
      %p463 = scmp.lt.s32.totalorder %s28, 3
      %p464 = pnand %p462, %p463
      %p465 = pneg %p464
      // Predicated region
      $region65: #{tpu_custom_call.1} parent=5 // pred_check
        _
      $region66: #{tpu_custom_call.1} parent=5 // pred_check_branch
        %467 = sbr.rel (%p464) target = $region68
      $region67: #{tpu_custom_call.1} parent=5 // pred_region
        %s468 = ssub.s32 %s28, 1
        %s469 = sand.u32 %s41, 1
        %s470 = scalar_lea.sflag [#allocation3], %s469
        %s471 = sand.u32 %s41, 1
        %s472 = smul.addr %s471, 128
        %s473 = scalar_lea.vmem [#allocation2], %s472
        // Predicated region
        $region69: #{tpu_custom_call.1} parent=67 // pred_check
          %p474 = pneg %p54
        $region70: #{tpu_custom_call.1} parent=67 // pred_check_branch
          %476 = sbr.rel (%p474) target = $region72
        $region71: #{tpu_custom_call.1} parent=67 // pred_region
          %478 = dma.done %s470, 2048
        $region72: #{tpu_custom_call.1} parent=67 // pred_fallthru
          _
        // Predicated region
        $region73: #{tpu_custom_call.1} parent=67 // pred_check
          %p479 = pneg %p75
        $region74: #{tpu_custom_call.1} parent=67 // pred_check_branch
          %481 = sbr.rel (%p479) target = $region76
        $region75: #{tpu_custom_call.1} parent=67 // pred_region
          %483 = dma.done [#allocation6], 9216
        $region76: #{tpu_custom_call.1} parent=67 // pred_fallthru
          _
        // Predicated region
        $region77: #{tpu_custom_call.1} parent=67 // pred_check
          %p484 = pneg %p96
        $region78: #{tpu_custom_call.1} parent=67 // pred_check_branch
          %486 = sbr.rel (%p484) target = $region80
        $region79: #{tpu_custom_call.1} parent=67 // pred_region
          %488 = dma.done [#allocation6], 9216
        $region80: #{tpu_custom_call.1} parent=67 // pred_fallthru
          _
        // Predicated region
        $region81: #{tpu_custom_call.1} parent=67 // pred_check
          %p489 = pneg %p138
        $region82: #{tpu_custom_call.1} parent=67 // pred_check_branch
          %491 = sbr.rel (%p489) target = $region84
        $region83: #{tpu_custom_call.1} parent=67 // pred_region
          %493 = dma.done [#allocation9], 1152
        $region84: #{tpu_custom_call.1} parent=67 // pred_fallthru
          _
        // Predicated region
        $region85: #{tpu_custom_call.1} parent=67 // pred_check
          %p494 = pneg %p159
        $region86: #{tpu_custom_call.1} parent=67 // pred_check_branch
          %496 = sbr.rel (%p494) target = $region88
        $region87: #{tpu_custom_call.1} parent=67 // pred_region
          %498 = dma.done [#allocation9], 9216
        $region88: #{tpu_custom_call.1} parent=67 // pred_fallthru
          _
        // Predicated region
        $region89: #{tpu_custom_call.1} parent=67 // pred_check
          %p499 = pneg %p201
        $region90: #{tpu_custom_call.1} parent=67 // pred_check_branch
          %501 = sbr.rel (%p499) target = $region92
        $region91: #{tpu_custom_call.1} parent=67 // pred_region
          %503 = dma.done [#allocation12], 288
        $region92: #{tpu_custom_call.1} parent=67 // pred_fallthru
          _
        // Predicated region
        $region93: #{tpu_custom_call.1} parent=67 // pred_check
          %p504 = pneg %p222
        $region94: #{tpu_custom_call.1} parent=67 // pred_check_branch
          %506 = sbr.rel (%p504) target = $region96
        $region95: #{tpu_custom_call.1} parent=67 // pred_region
          %508 = dma.done [#allocation12], 9216
        $region96: #{tpu_custom_call.1} parent=67 // pred_fallthru
          _
        // Predicated region
        $region97: #{tpu_custom_call.1} parent=67 // pred_check
          %p509 = pneg %p264
        $region98: #{tpu_custom_call.1} parent=67 // pred_check_branch
          %511 = sbr.rel (%p509) target = $region100
        $region99: #{tpu_custom_call.1} parent=67 // pred_region
          %513 = dma.done [#allocation15], 1024
        $region100: #{tpu_custom_call.1} parent=67 // pred_fallthru
          _
        %s514 = sand.u32 %s41, 1
        %s515 = scalar_lea.sflag [#allocation3], %s514
        %s516 = sand.u32 %s41, 1
        %s517 = smul.addr %s516, 128
        %s518 = scalar_lea.vmem [#allocation2], %s517
        %p519 = pneg %p54
        %p520 = pneg %p51
        %p521 = pneg %p75
        %p522 = pneg %p72
        %p523 = pneg %p96
        %p524 = pneg %p93
        %p525 = pneg %p117
        %p526 = pneg %p114
        %p527 = pneg %p138
        %p528 = pneg %p135
        %p529 = pneg %p159
        %p530 = pneg %p156
        %p531 = pneg %p180
        %p532 = pneg %p177
        %p533 = pneg %p201
        %p534 = pneg %p198
        %p535 = pneg %p222
        %p536 = pneg %p219
        %p537 = pneg %p243
        %p538 = pneg %p240
        %p539 = pneg %p264
        %p540 = pneg %p261
        %p541 = pneg %p285
        %p542 = pneg %p282
        %p543 = pneg %p311
        %p544 = pneg %p308
        %s545 = sand.u32 %s298, 1
        %s546 = scalar_lea.sflag [#allocation4], %s545
        %s547 = sand.u32 %s298, 1
        %s548 = scalar_lea.vmem [#allocation16], %s547
        %v550 = vld [vmem:[%s473] sm:$0xf]
        %v551 = vld [vmem:[%s473 + $0x4] sm:$0xf]
        %v552 = vld [vmem:[%s473 + $0x8] sm:$0xf]
        %v553 = vld [vmem:[%s473 + $0xc] sm:$0xf]
        %v554 = vld [vmem:[%s473 + $0x10] sm:$0xf]
        %v555 = vld [vmem:[%s473 + $0x14] sm:$0xf]
        %v556 = vld [vmem:[%s473 + $0x18] sm:$0xf]
        %v557 = vld [vmem:[%s473 + $0x1c] sm:$0xf]
        %v558 = vld [vmem:[%s473 + $0x20] sm:$0xf]
        %v559 = vld [vmem:[%s473 + $0x24] sm:$0xf]
        %v560 = vld [vmem:[%s473 + $0x28] sm:$0xf]
        %v561 = vld [vmem:[%s473 + $0x2c] sm:$0xf]
        %v562 = vld [vmem:[%s473 + $0x30] sm:$0xf]
        %v563 = vld [vmem:[%s473 + $0x34] sm:$0xf]
        %v564 = vld [vmem:[%s473 + $0x38] sm:$0xf]
        %v565 = vld [vmem:[%s473 + $0x3c] sm:$0xf]
        %v566 = vld [vmem:[%s473 + $0x40] sm:$0xf]
        %v567 = vld [vmem:[%s473 + $0x44] sm:$0xf]
        %v568 = vld [vmem:[%s473 + $0x48] sm:$0xf]
        %v569 = vld [vmem:[%s473 + $0x4c] sm:$0xf]
        %v570 = vld [vmem:[%s473 + $0x50] sm:$0xf]
        %v571 = vld [vmem:[%s473 + $0x54] sm:$0xf]
        %v572 = vld [vmem:[%s473 + $0x58] sm:$0xf]
        %v573 = vld [vmem:[%s473 + $0x5c] sm:$0xf]
        %v574 = vld [vmem:[%s473 + $0x60] sm:$0xf]
        %v575 = vld [vmem:[%s473 + $0x64] sm:$0xf]
        %v576 = vld [vmem:[%s473 + $0x68] sm:$0xf]
        %v577 = vld [vmem:[%s473 + $0x6c] sm:$0xf]
        %v578 = vld [vmem:[%s473 + $0x70] sm:$0xf]
        %v579 = vld [vmem:[%s473 + $0x74] sm:$0xf]
        %v580 = vld [vmem:[%s473 + $0x78] sm:$0xf]
        %v581 = vld [vmem:[%s473 + $0x7c] sm:$0xf]
        %v582 = vld [vmem:[#allocation5] sm:$0xff]
        %v583 = vld [vmem:[#allocation5 + $0x8] sm:$0xff]
        %v584 = vld [vmem:[#allocation5 + $0x10] sm:$0xff]
        %v585 = vld [vmem:[#allocation5 + $0x18] sm:$0xff]
        %v586 = vld [vmem:[#allocation5 + $0x20] sm:$0xff]
        %v587 = vld [vmem:[#allocation5 + $0x28] sm:$0xff]
        %v588 = vld [vmem:[#allocation5 + $0x30] sm:$0xff]
        %v589 = vld [vmem:[#allocation5 + $0x38] sm:$0xff]
        %v598 = vunpack.c.l.b16 %v582
        %v599 = vunpack.c.h.b16 %v582
        %v600 = vunpack.c.l.b16 %v583
        %v601 = vunpack.c.h.b16 %v583
        %v602 = vunpack.c.l.b16 %v584
        %v603 = vunpack.c.h.b16 %v584
        %v604 = vunpack.c.l.b16 %v585
        %v605 = vunpack.c.h.b16 %v585
        %v606 = vunpack.c.l.b16 %v586
        %v607 = vunpack.c.h.b16 %v586
        %v608 = vunpack.c.l.b16 %v587
        %v609 = vunpack.c.h.b16 %v587
        %v610 = vunpack.c.l.b16 %v588
        %v611 = vunpack.c.h.b16 %v588
        %v612 = vunpack.c.l.b16 %v589
        %v613 = vunpack.c.h.b16 %v589
        %v614 = vpack.c.b16 %v600, %v598
        %v615 = vpack.c.b16 %v601, %v599
        %v616 = vpack.c.b16 %v604, %v602
        %v617 = vpack.c.b16 %v605, %v603
        %v618 = vpack.c.b16 %v608, %v606
        %v619 = vpack.c.b16 %v609, %v607
        %v620 = vpack.c.b16 %v612, %v610
        %v621 = vpack.c.b16 %v613, %v611
        %v662 = vunpack.c.l.b16 %v550
        %v663 = vunpack.c.l.b16 %v551
        %v664 = vunpack.c.l.b16 %v552
        %v665 = vunpack.c.l.b16 %v553
        %v666 = vunpack.c.l.b16 %v554
        %v667 = vunpack.c.l.b16 %v555
        %v668 = vunpack.c.l.b16 %v556
        %v669 = vunpack.c.l.b16 %v557
        %v670 = vunpack.c.l.b16 %v558
        %v671 = vunpack.c.l.b16 %v559
        %v672 = vunpack.c.l.b16 %v560
        %v673 = vunpack.c.l.b16 %v561
        %v674 = vunpack.c.l.b16 %v562
        %v675 = vunpack.c.l.b16 %v563
        %v676 = vunpack.c.l.b16 %v564
        %v677 = vunpack.c.l.b16 %v565
        %v678 = vunpack.c.l.b16 %v566
        %v679 = vunpack.c.l.b16 %v567
        %v680 = vunpack.c.l.b16 %v568
        %v681 = vunpack.c.l.b16 %v569
        %v682 = vunpack.c.l.b16 %v570
        %v683 = vunpack.c.l.b16 %v571
        %v684 = vunpack.c.l.b16 %v572
        %v685 = vunpack.c.l.b16 %v573
        %v686 = vunpack.c.l.b16 %v574
        %v687 = vunpack.c.l.b16 %v575
        %v688 = vunpack.c.l.b16 %v576
        %v689 = vunpack.c.l.b16 %v577
        %v690 = vunpack.c.l.b16 %v578
        %v691 = vunpack.c.l.b16 %v579
        %v692 = vunpack.c.l.b16 %v580
        %v693 = vunpack.c.l.b16 %v581
        %v694 = vpack.c.b16 %v663, %v662
        %v695 = vpack.c.b16 %v665, %v664
        %v696 = vpack.c.b16 %v667, %v666
        %v697 = vpack.c.b16 %v669, %v668
        %v698 = vpack.c.b16 %v671, %v670
        %v699 = vpack.c.b16 %v673, %v672
        %v700 = vpack.c.b16 %v675, %v674
        %v701 = vpack.c.b16 %v677, %v676
        %v702 = vpack.c.b16 %v679, %v678
        %v703 = vpack.c.b16 %v681, %v680
        %v704 = vpack.c.b16 %v683, %v682
        %v705 = vpack.c.b16 %v685, %v684
        %v706 = vpack.c.b16 %v687, %v686
        %v707 = vpack.c.b16 %v689, %v688
        %v708 = vpack.c.b16 %v691, %v690
        %v709 = vpack.c.b16 %v693, %v692
        %726 = vmatpush.bf16.msra.mxu0 %v701
        %727 = vmatpush.bf16.msra.mxu0 %v700
        %728 = vmatpush.bf16.msra.mxu0 %v699
        %729 = vmatpush.bf16.msra.mxu0 %v698
        %730 = vmatpush.bf16.msra.mxu0 %v697
        %731 = vmatpush.bf16.msra.mxu0 %v696
        %732 = vmatpush.bf16.msra.mxu0 %v695
        %733 = vmatpush.bf16.msra.mxu0 %v694
        %734 = vmatmul.bf16.gmra.mxu0 %v614
        %v735 = vpop.f32.mrf.mxu0
        %v736 = vadd.f32 0.0, %v735
        %v737 = vpop.f32.mrf.mxu0
        %v738 = vadd.f32 0.0, %v737
        %739 = vmatmul.bf16.gmra.mxu0 %v616
        %v740 = vpop.f32.mrf.mxu0
        %v741 = vadd.f32 0.0, %v740
        %v742 = vpop.f32.mrf.mxu0
        %v743 = vadd.f32 0.0, %v742
        %744 = vmatmul.bf16.gmra.mxu0 %v618
        %v745 = vpop.f32.mrf.mxu0
        %v746 = vadd.f32 0.0, %v745
        %v747 = vpop.f32.mrf.mxu0
        %v748 = vadd.f32 0.0, %v747
        %749 = vmatmul.bf16.gmra.mxu0 %v620
        %v750 = vpop.f32.mrf.mxu0
        %v751 = vadd.f32 0.0, %v750
        %v752 = vpop.f32.mrf.mxu0
        %v753 = vadd.f32 0.0, %v752
        %754 = vdwg.mxu0
        %755 = vmatpush.bf16.msra.mxu0 %v709
        %756 = vmatpush.bf16.msra.mxu0 %v708
        %757 = vmatpush.bf16.msra.mxu0 %v707
        %758 = vmatpush.bf16.msra.mxu0 %v706
        %759 = vmatpush.bf16.msra.mxu0 %v705
        %760 = vmatpush.bf16.msra.mxu0 %v704
        %761 = vmatpush.bf16.msra.mxu0 %v703
        %762 = vmatpush.bf16.msra.mxu0 %v702
        %763 = vmatmul.bf16.gmra.mxu0 %v615
        %v764 = vpop.f32.mrf.mxu0
        %v765 = vadd.f32 %v736, %v764
        %v766 = vpop.f32.mrf.mxu0
        %v767 = vadd.f32 %v738, %v766
        %768 = vmatmul.bf16.gmra.mxu0 %v617
        %v769 = vpop.f32.mrf.mxu0
        %v770 = vadd.f32 %v741, %v769
        %v771 = vpop.f32.mrf.mxu0
        %v772 = vadd.f32 %v743, %v771
        %773 = vmatmul.bf16.gmra.mxu0 %v619
        %v774 = vpop.f32.mrf.mxu0
        %v775 = vadd.f32 %v746, %v774
        %v776 = vpop.f32.mrf.mxu0
        %v777 = vadd.f32 %v748, %v776
        %778 = vmatmul.bf16.gmra.mxu0 %v621
        %v779 = vpop.f32.mrf.mxu0
        %v780 = vadd.f32 %v751, %v779
        %v781 = vpop.f32.mrf.mxu0
        %v782 = vadd.f32 %v753, %v781
        %783 = vdwg.mxu0
        %v784 = vpack.c.bf16 %v765, %v765
        %v785 = vpack.c.bf16 %v767, %v767
        %v786 = vpack.c.bf16 %v770, %v770
        %v787 = vpack.c.bf16 %v772, %v772
        %v788 = vpack.c.bf16 %v775, %v775
        %v789 = vpack.c.bf16 %v777, %v777
        %v790 = vpack.c.bf16 %v780, %v780
        %v791 = vpack.c.bf16 %v782, %v782
        %s792 = scalar_lea.vmem [#allocation5], 64
        %v793 = vld [vmem:[%s792] sm:$0xff]
        %v794 = vld [vmem:[%s792 + $0x8] sm:$0xff]
        %v795 = vld [vmem:[%s792 + $0x10] sm:$0xff]
        %v796 = vld [vmem:[%s792 + $0x18] sm:$0xff]
        %v797 = vld [vmem:[%s792 + $0x20] sm:$0xff]
        %v798 = vld [vmem:[%s792 + $0x28] sm:$0xff]
        %v799 = vld [vmem:[%s792 + $0x30] sm:$0xff]
        %v800 = vld [vmem:[%s792 + $0x38] sm:$0xff]
        %v809 = vunpack.c.l.b16 %v793
        %v810 = vunpack.c.h.b16 %v793
        %v811 = vunpack.c.l.b16 %v794
        %v812 = vunpack.c.h.b16 %v794
        %v813 = vunpack.c.l.b16 %v795
        %v814 = vunpack.c.h.b16 %v795
        %v815 = vunpack.c.l.b16 %v796
        %v816 = vunpack.c.h.b16 %v796
        %v817 = vunpack.c.l.b16 %v797
        %v818 = vunpack.c.h.b16 %v797
        %v819 = vunpack.c.l.b16 %v798
        %v820 = vunpack.c.h.b16 %v798
        %v821 = vunpack.c.l.b16 %v799
        %v822 = vunpack.c.h.b16 %v799
        %v823 = vunpack.c.l.b16 %v800
        %v824 = vunpack.c.h.b16 %v800
        %v825 = vpack.c.b16 %v811, %v809
        %v826 = vpack.c.b16 %v812, %v810
        %v827 = vpack.c.b16 %v815, %v813
        %v828 = vpack.c.b16 %v816, %v814
        %v829 = vpack.c.b16 %v819, %v817
        %v830 = vpack.c.b16 %v820, %v818
        %v831 = vpack.c.b16 %v823, %v821
        %v832 = vpack.c.b16 %v824, %v822
        %841 = vmatpush.bf16.msra.mxu0 %v701
        %842 = vmatpush.bf16.msra.mxu0 %v700
        %843 = vmatpush.bf16.msra.mxu0 %v699
        %844 = vmatpush.bf16.msra.mxu0 %v698
        %845 = vmatpush.bf16.msra.mxu0 %v697
        %846 = vmatpush.bf16.msra.mxu0 %v696
        %847 = vmatpush.bf16.msra.mxu0 %v695
        %848 = vmatpush.bf16.msra.mxu0 %v694
        %849 = vmatmul.bf16.gmra.mxu0 %v825
        %v850 = vpop.f32.mrf.mxu0
        %v851 = vadd.f32 0.0, %v850
        %v852 = vpop.f32.mrf.mxu0
        %v853 = vadd.f32 0.0, %v852
        %854 = vmatmul.bf16.gmra.mxu0 %v827
        %v855 = vpop.f32.mrf.mxu0
        %v856 = vadd.f32 0.0, %v855
        %v857 = vpop.f32.mrf.mxu0
        %v858 = vadd.f32 0.0, %v857
        %859 = vmatmul.bf16.gmra.mxu0 %v829
        %v860 = vpop.f32.mrf.mxu0
        %v861 = vadd.f32 0.0, %v860
        %v862 = vpop.f32.mrf.mxu0
        %v863 = vadd.f32 0.0, %v862
        %864 = vmatmul.bf16.gmra.mxu0 %v831
        %v865 = vpop.f32.mrf.mxu0
        %v866 = vadd.f32 0.0, %v865
        %v867 = vpop.f32.mrf.mxu0
        %v868 = vadd.f32 0.0, %v867
        %869 = vdwg.mxu0
        %870 = vmatpush.bf16.msra.mxu0 %v709
        %871 = vmatpush.bf16.msra.mxu0 %v708
        %872 = vmatpush.bf16.msra.mxu0 %v707
        %873 = vmatpush.bf16.msra.mxu0 %v706
        %874 = vmatpush.bf16.msra.mxu0 %v705
        %875 = vmatpush.bf16.msra.mxu0 %v704
        %876 = vmatpush.bf16.msra.mxu0 %v703
        %877 = vmatpush.bf16.msra.mxu0 %v702
        %878 = vmatmul.bf16.gmra.mxu0 %v826
        %v879 = vpop.f32.mrf.mxu0
        %v880 = vadd.f32 %v851, %v879
        %v881 = vpop.f32.mrf.mxu0
        %v882 = vadd.f32 %v853, %v881
        %883 = vmatmul.bf16.gmra.mxu0 %v828
        %v884 = vpop.f32.mrf.mxu0
        %v885 = vadd.f32 %v856, %v884
        %v886 = vpop.f32.mrf.mxu0
        %v887 = vadd.f32 %v858, %v886
        %888 = vmatmul.bf16.gmra.mxu0 %v830
        %v889 = vpop.f32.mrf.mxu0
        %v890 = vadd.f32 %v861, %v889
        %v891 = vpop.f32.mrf.mxu0
        %v892 = vadd.f32 %v863, %v891
        %893 = vmatmul.bf16.gmra.mxu0 %v832
        %v894 = vpop.f32.mrf.mxu0
        %v895 = vadd.f32 %v866, %v894
        %v896 = vpop.f32.mrf.mxu0
        %v897 = vadd.f32 %v868, %v896
        %898 = vdwg.mxu0
        %v899 = vpack.c.bf16 %v880, %v880
        %v900 = vpack.c.bf16 %v882, %v882
        %v901 = vpack.c.bf16 %v885, %v885
        %v902 = vpack.c.bf16 %v887, %v887
        %v903 = vpack.c.bf16 %v890, %v890
        %v904 = vpack.c.bf16 %v892, %v892
        %v905 = vpack.c.bf16 %v895, %v895
        %v906 = vpack.c.bf16 %v897, %v897
        %s907 = scalar_lea.vmem [#allocation5], 128
        %v908 = vld [vmem:[%s907] sm:$0xff]
        %v909 = vld [vmem:[%s907 + $0x8] sm:$0xff]
        %v910 = vld [vmem:[%s907 + $0x10] sm:$0xff]
        %v911 = vld [vmem:[%s907 + $0x18] sm:$0xff]
        %v912 = vld [vmem:[%s907 + $0x20] sm:$0xff]
        %v913 = vld [vmem:[%s907 + $0x28] sm:$0xff]
        %v914 = vld [vmem:[%s907 + $0x30] sm:$0xff]
        %v915 = vld [vmem:[%s907 + $0x38] sm:$0xff]
        %v924 = vunpack.c.l.b16 %v908
        %v925 = vunpack.c.h.b16 %v908
        %v926 = vunpack.c.l.b16 %v909
        %v927 = vunpack.c.h.b16 %v909
        %v928 = vunpack.c.l.b16 %v910
        %v929 = vunpack.c.h.b16 %v910
        %v930 = vunpack.c.l.b16 %v911
        %v931 = vunpack.c.h.b16 %v911
        %v932 = vunpack.c.l.b16 %v912
        %v933 = vunpack.c.h.b16 %v912
        %v934 = vunpack.c.l.b16 %v913
        %v935 = vunpack.c.h.b16 %v913
        %v936 = vunpack.c.l.b16 %v914
        %v937 = vunpack.c.h.b16 %v914
        %v938 = vunpack.c.l.b16 %v915
        %v939 = vunpack.c.h.b16 %v915
        %v940 = vpack.c.b16 %v926, %v924
        %v941 = vpack.c.b16 %v927, %v925
        %v942 = vpack.c.b16 %v930, %v928
        %v943 = vpack.c.b16 %v931, %v929
        %v944 = vpack.c.b16 %v934, %v932
        %v945 = vpack.c.b16 %v935, %v933
        %v946 = vpack.c.b16 %v938, %v936
        %v947 = vpack.c.b16 %v939, %v937
        %956 = vmatpush.bf16.msra.mxu0 %v701
        %957 = vmatpush.bf16.msra.mxu0 %v700
        %958 = vmatpush.bf16.msra.mxu0 %v699
        %959 = vmatpush.bf16.msra.mxu0 %v698
        %960 = vmatpush.bf16.msra.mxu0 %v697
        %961 = vmatpush.bf16.msra.mxu0 %v696
        %962 = vmatpush.bf16.msra.mxu0 %v695
        %963 = vmatpush.bf16.msra.mxu0 %v694
        %964 = vmatmul.bf16.gmra.mxu0 %v940
        %v965 = vpop.f32.mrf.mxu0
        %v966 = vadd.f32 0.0, %v965
        %v967 = vpop.f32.mrf.mxu0
        %v968 = vadd.f32 0.0, %v967
        %969 = vmatmul.bf16.gmra.mxu0 %v942
        %v970 = vpop.f32.mrf.mxu0
        %v971 = vadd.f32 0.0, %v970
        %v972 = vpop.f32.mrf.mxu0
        %v973 = vadd.f32 0.0, %v972
        %974 = vmatmul.bf16.gmra.mxu0 %v944
        %v975 = vpop.f32.mrf.mxu0
        %v976 = vadd.f32 0.0, %v975
        %v977 = vpop.f32.mrf.mxu0
        %v978 = vadd.f32 0.0, %v977
        %979 = vmatmul.bf16.gmra.mxu0 %v946
        %v980 = vpop.f32.mrf.mxu0
        %v981 = vadd.f32 0.0, %v980
        %v982 = vpop.f32.mrf.mxu0
        %v983 = vadd.f32 0.0, %v982
        %984 = vdwg.mxu0
        %985 = vmatpush.bf16.msra.mxu0 %v709
        %986 = vmatpush.bf16.msra.mxu0 %v708
        %987 = vmatpush.bf16.msra.mxu0 %v707
        %988 = vmatpush.bf16.msra.mxu0 %v706
        %989 = vmatpush.bf16.msra.mxu0 %v705
        %990 = vmatpush.bf16.msra.mxu0 %v704
        %991 = vmatpush.bf16.msra.mxu0 %v703
        %992 = vmatpush.bf16.msra.mxu0 %v702
        %993 = vmatmul.bf16.gmra.mxu0 %v941
        %v994 = vpop.f32.mrf.mxu0
        %v995 = vadd.f32 %v966, %v994
        %v996 = vpop.f32.mrf.mxu0
        %v997 = vadd.f32 %v968, %v996
        %998 = vmatmul.bf16.gmra.mxu0 %v943
        %v999 = vpop.f32.mrf.mxu0
        %v1000 = vadd.f32 %v971, %v999
        %v1001 = vpop.f32.mrf.mxu0
        %v1002 = vadd.f32 %v973, %v1001
        %1003 = vmatmul.bf16.gmra.mxu0 %v945
        %v1004 = vpop.f32.mrf.mxu0
        %v1005 = vadd.f32 %v976, %v1004
        %v1006 = vpop.f32.mrf.mxu0
        %v1007 = vadd.f32 %v978, %v1006
        %1008 = vmatmul.bf16.gmra.mxu0 %v947
        %v1009 = vpop.f32.mrf.mxu0
        %v1010 = vadd.f32 %v981, %v1009
        %v1011 = vpop.f32.mrf.mxu0
        %v1012 = vadd.f32 %v983, %v1011
        %1013 = vdwg.mxu0
        %v1014 = vpack.c.bf16 %v995, %v995
        %v1015 = vpack.c.bf16 %v997, %v997
        %v1016 = vpack.c.bf16 %v1000, %v1000
        %v1017 = vpack.c.bf16 %v1002, %v1002
        %v1018 = vpack.c.bf16 %v1005, %v1005
        %v1019 = vpack.c.bf16 %v1007, %v1007
        %v1020 = vpack.c.bf16 %v1010, %v1010
        %v1021 = vpack.c.bf16 %v1012, %v1012
        %s1022 = scalar_lea.vmem [#allocation5], 192
        %v1023 = vld [vmem:[%s1022] sm:$0xff]
        %v1024 = vld [vmem:[%s1022 + $0x8] sm:$0xff]
        %v1025 = vld [vmem:[%s1022 + $0x10] sm:$0xff]
        %v1026 = vld [vmem:[%s1022 + $0x18] sm:$0xff]
        %v1027 = vld [vmem:[%s1022 + $0x20] sm:$0xff]
        %v1028 = vld [vmem:[%s1022 + $0x28] sm:$0xff]
        %v1029 = vld [vmem:[%s1022 + $0x30] sm:$0xff]
        %v1030 = vld [vmem:[%s1022 + $0x38] sm:$0xff]
        %v1039 = vunpack.c.l.b16 %v1023
        %v1040 = vunpack.c.h.b16 %v1023
        %v1041 = vunpack.c.l.b16 %v1024
        %v1042 = vunpack.c.h.b16 %v1024
        %v1043 = vunpack.c.l.b16 %v1025
        %v1044 = vunpack.c.h.b16 %v1025
        %v1045 = vunpack.c.l.b16 %v1026
        %v1046 = vunpack.c.h.b16 %v1026
        %v1047 = vunpack.c.l.b16 %v1027
        %v1048 = vunpack.c.h.b16 %v1027
        %v1049 = vunpack.c.l.b16 %v1028
        %v1050 = vunpack.c.h.b16 %v1028
        %v1051 = vunpack.c.l.b16 %v1029
        %v1052 = vunpack.c.h.b16 %v1029
        %v1053 = vunpack.c.l.b16 %v1030
        %v1054 = vunpack.c.h.b16 %v1030
        %v1055 = vpack.c.b16 %v1041, %v1039
        %v1056 = vpack.c.b16 %v1042, %v1040
        %v1057 = vpack.c.b16 %v1045, %v1043
        %v1058 = vpack.c.b16 %v1046, %v1044
        %v1059 = vpack.c.b16 %v1049, %v1047
        %v1060 = vpack.c.b16 %v1050, %v1048
        %v1061 = vpack.c.b16 %v1053, %v1051
        %v1062 = vpack.c.b16 %v1054, %v1052
        %1071 = vmatpush.bf16.msra.mxu0 %v701
        %1072 = vmatpush.bf16.msra.mxu0 %v700
        %1073 = vmatpush.bf16.msra.mxu0 %v699
        %1074 = vmatpush.bf16.msra.mxu0 %v698
        %1075 = vmatpush.bf16.msra.mxu0 %v697
        %1076 = vmatpush.bf16.msra.mxu0 %v696
        %1077 = vmatpush.bf16.msra.mxu0 %v695
        %1078 = vmatpush.bf16.msra.mxu0 %v694
        %1079 = vmatmul.bf16.gmra.mxu0 %v1055
        %v1080 = vpop.f32.mrf.mxu0
        %v1081 = vadd.f32 0.0, %v1080
        %v1082 = vpop.f32.mrf.mxu0
        %v1083 = vadd.f32 0.0, %v1082
        %1084 = vmatmul.bf16.gmra.mxu0 %v1057
        %v1085 = vpop.f32.mrf.mxu0
        %v1086 = vadd.f32 0.0, %v1085
        %v1087 = vpop.f32.mrf.mxu0
        %v1088 = vadd.f32 0.0, %v1087
        %1089 = vmatmul.bf16.gmra.mxu0 %v1059
        %v1090 = vpop.f32.mrf.mxu0
        %v1091 = vadd.f32 0.0, %v1090
        %v1092 = vpop.f32.mrf.mxu0
        %v1093 = vadd.f32 0.0, %v1092
        %1094 = vmatmul.bf16.gmra.mxu0 %v1061
        %v1095 = vpop.f32.mrf.mxu0
        %v1096 = vadd.f32 0.0, %v1095
        %v1097 = vpop.f32.mrf.mxu0
        %v1098 = vadd.f32 0.0, %v1097
        %1099 = vdwg.mxu0
        %1100 = vmatpush.bf16.msra.mxu0 %v709
        %1101 = vmatpush.bf16.msra.mxu0 %v708
        %1102 = vmatpush.bf16.msra.mxu0 %v707
        %1103 = vmatpush.bf16.msra.mxu0 %v706
        %1104 = vmatpush.bf16.msra.mxu0 %v705
        %1105 = vmatpush.bf16.msra.mxu0 %v704
        %1106 = vmatpush.bf16.msra.mxu0 %v703
        %1107 = vmatpush.bf16.msra.mxu0 %v702
        %1108 = vmatmul.bf16.gmra.mxu0 %v1056
        %v1109 = vpop.f32.mrf.mxu0
        %v1110 = vadd.f32 %v1081, %v1109
        %v1111 = vpop.f32.mrf.mxu0
        %v1112 = vadd.f32 %v1083, %v1111
        %1113 = vmatmul.bf16.gmra.mxu0 %v1058
        %v1114 = vpop.f32.mrf.mxu0
        %v1115 = vadd.f32 %v1086, %v1114
        %v1116 = vpop.f32.mrf.mxu0
        %v1117 = vadd.f32 %v1088, %v1116
        %1118 = vmatmul.bf16.gmra.mxu0 %v1060
        %v1119 = vpop.f32.mrf.mxu0
        %v1120 = vadd.f32 %v1091, %v1119
        %v1121 = vpop.f32.mrf.mxu0
        %v1122 = vadd.f32 %v1093, %v1121
        %1123 = vmatmul.bf16.gmra.mxu0 %v1062
        %v1124 = vpop.f32.mrf.mxu0
        %v1125 = vadd.f32 %v1096, %v1124
        %v1126 = vpop.f32.mrf.mxu0
        %v1127 = vadd.f32 %v1098, %v1126
        %1128 = vdwg.mxu0
        %v1129 = vpack.c.bf16 %v1110, %v1110
        %v1130 = vpack.c.bf16 %v1112, %v1112
        %v1131 = vpack.c.bf16 %v1115, %v1115
        %v1132 = vpack.c.bf16 %v1117, %v1117
        %v1133 = vpack.c.bf16 %v1120, %v1120
        %v1134 = vpack.c.bf16 %v1122, %v1122
        %v1135 = vpack.c.bf16 %v1125, %v1125
        %v1136 = vpack.c.bf16 %v1127, %v1127
        %s1137 = scalar_lea.vmem [#allocation5], 256
        %v1138 = vld [vmem:[%s1137] sm:$0xff]
        %v1139 = vld [vmem:[%s1137 + $0x8] sm:$0xff]
        %v1140 = vld [vmem:[%s1137 + $0x10] sm:$0xff]
        %v1141 = vld [vmem:[%s1137 + $0x18] sm:$0xff]
        %v1142 = vld [vmem:[%s1137 + $0x20] sm:$0xff]
        %v1143 = vld [vmem:[%s1137 + $0x28] sm:$0xff]
        %v1144 = vld [vmem:[%s1137 + $0x30] sm:$0xff]
        %v1145 = vld [vmem:[%s1137 + $0x38] sm:$0xff]
        %v1154 = vunpack.c.l.b16 %v1138
        %v1155 = vunpack.c.h.b16 %v1138
        %v1156 = vunpack.c.l.b16 %v1139
        %v1157 = vunpack.c.h.b16 %v1139
        %v1158 = vunpack.c.l.b16 %v1140
        %v1159 = vunpack.c.h.b16 %v1140
        %v1160 = vunpack.c.l.b16 %v1141
        %v1161 = vunpack.c.h.b16 %v1141
        %v1162 = vunpack.c.l.b16 %v1142
        %v1163 = vunpack.c.h.b16 %v1142
        %v1164 = vunpack.c.l.b16 %v1143
        %v1165 = vunpack.c.h.b16 %v1143
        %v1166 = vunpack.c.l.b16 %v1144
        %v1167 = vunpack.c.h.b16 %v1144
        %v1168 = vunpack.c.l.b16 %v1145
        %v1169 = vunpack.c.h.b16 %v1145
        %v1170 = vpack.c.b16 %v1156, %v1154
        %v1171 = vpack.c.b16 %v1157, %v1155
        %v1172 = vpack.c.b16 %v1160, %v1158
        %v1173 = vpack.c.b16 %v1161, %v1159
        %v1174 = vpack.c.b16 %v1164, %v1162
        %v1175 = vpack.c.b16 %v1165, %v1163
        %v1176 = vpack.c.b16 %v1168, %v1166
        %v1177 = vpack.c.b16 %v1169, %v1167
        %1186 = vmatpush.bf16.msra.mxu0 %v701
        %1187 = vmatpush.bf16.msra.mxu0 %v700
        %1188 = vmatpush.bf16.msra.mxu0 %v699
        %1189 = vmatpush.bf16.msra.mxu0 %v698
        %1190 = vmatpush.bf16.msra.mxu0 %v697
        %1191 = vmatpush.bf16.msra.mxu0 %v696
        %1192 = vmatpush.bf16.msra.mxu0 %v695
        %1193 = vmatpush.bf16.msra.mxu0 %v694
        %1194 = vmatmul.bf16.gmra.mxu0 %v1170
        %v1195 = vpop.f32.mrf.mxu0
        %v1196 = vadd.f32 0.0, %v1195
        %v1197 = vpop.f32.mrf.mxu0
        %v1198 = vadd.f32 0.0, %v1197
        %1199 = vmatmul.bf16.gmra.mxu0 %v1172
        %v1200 = vpop.f32.mrf.mxu0
        %v1201 = vadd.f32 0.0, %v1200
        %v1202 = vpop.f32.mrf.mxu0
        %v1203 = vadd.f32 0.0, %v1202
        %1204 = vmatmul.bf16.gmra.mxu0 %v1174
        %v1205 = vpop.f32.mrf.mxu0
        %v1206 = vadd.f32 0.0, %v1205
        %v1207 = vpop.f32.mrf.mxu0
        %v1208 = vadd.f32 0.0, %v1207
        %1209 = vmatmul.bf16.gmra.mxu0 %v1176
        %v1210 = vpop.f32.mrf.mxu0
        %v1211 = vadd.f32 0.0, %v1210
        %v1212 = vpop.f32.mrf.mxu0
        %v1213 = vadd.f32 0.0, %v1212
        %1214 = vdwg.mxu0
        %1215 = vmatpush.bf16.msra.mxu0 %v709
        %1216 = vmatpush.bf16.msra.mxu0 %v708
        %1217 = vmatpush.bf16.msra.mxu0 %v707
        %1218 = vmatpush.bf16.msra.mxu0 %v706
        %1219 = vmatpush.bf16.msra.mxu0 %v705
        %1220 = vmatpush.bf16.msra.mxu0 %v704
        %1221 = vmatpush.bf16.msra.mxu0 %v703
        %1222 = vmatpush.bf16.msra.mxu0 %v702
        %1223 = vmatmul.bf16.gmra.mxu0 %v1171
        %v1224 = vpop.f32.mrf.mxu0
        %v1225 = vadd.f32 %v1196, %v1224
        %v1226 = vpop.f32.mrf.mxu0
        %v1227 = vadd.f32 %v1198, %v1226
        %1228 = vmatmul.bf16.gmra.mxu0 %v1173
        %v1229 = vpop.f32.mrf.mxu0
        %v1230 = vadd.f32 %v1201, %v1229
        %v1231 = vpop.f32.mrf.mxu0
        %v1232 = vadd.f32 %v1203, %v1231
        %1233 = vmatmul.bf16.gmra.mxu0 %v1175
        %v1234 = vpop.f32.mrf.mxu0
        %v1235 = vadd.f32 %v1206, %v1234
        %v1236 = vpop.f32.mrf.mxu0
        %v1237 = vadd.f32 %v1208, %v1236
        %1238 = vmatmul.bf16.gmra.mxu0 %v1177
        %v1239 = vpop.f32.mrf.mxu0
        %v1240 = vadd.f32 %v1211, %v1239
        %v1241 = vpop.f32.mrf.mxu0
        %v1242 = vadd.f32 %v1213, %v1241
        %1243 = vdwg.mxu0
        %v1244 = vpack.c.bf16 %v1225, %v1225
        %v1245 = vpack.c.bf16 %v1227, %v1227
        %v1246 = vpack.c.bf16 %v1230, %v1230
        %v1247 = vpack.c.bf16 %v1232, %v1232
        %v1248 = vpack.c.bf16 %v1235, %v1235
        %v1249 = vpack.c.bf16 %v1237, %v1237
        %v1250 = vpack.c.bf16 %v1240, %v1240
        %v1251 = vpack.c.bf16 %v1242, %v1242
        %s1252 = scalar_lea.vmem [#allocation5], 320
        %v1253 = vld [vmem:[%s1252] sm:$0xff]
        %v1254 = vld [vmem:[%s1252 + $0x8] sm:$0xff]
        %v1255 = vld [vmem:[%s1252 + $0x10] sm:$0xff]
        %v1256 = vld [vmem:[%s1252 + $0x18] sm:$0xff]
        %v1257 = vld [vmem:[%s1252 + $0x20] sm:$0xff]
        %v1258 = vld [vmem:[%s1252 + $0x28] sm:$0xff]
        %v1259 = vld [vmem:[%s1252 + $0x30] sm:$0xff]
        %v1260 = vld [vmem:[%s1252 + $0x38] sm:$0xff]
        %v1269 = vunpack.c.l.b16 %v1253
        %v1270 = vunpack.c.h.b16 %v1253
        %v1271 = vunpack.c.l.b16 %v1254
        %v1272 = vunpack.c.h.b16 %v1254
        %v1273 = vunpack.c.l.b16 %v1255
        %v1274 = vunpack.c.h.b16 %v1255
        %v1275 = vunpack.c.l.b16 %v1256
        %v1276 = vunpack.c.h.b16 %v1256
        %v1277 = vunpack.c.l.b16 %v1257
        %v1278 = vunpack.c.h.b16 %v1257
        %v1279 = vunpack.c.l.b16 %v1258
        %v1280 = vunpack.c.h.b16 %v1258
        %v1281 = vunpack.c.l.b16 %v1259
        %v1282 = vunpack.c.h.b16 %v1259
        %v1283 = vunpack.c.l.b16 %v1260
        %v1284 = vunpack.c.h.b16 %v1260
        %v1285 = vpack.c.b16 %v1271, %v1269
        %v1286 = vpack.c.b16 %v1272, %v1270
        %v1287 = vpack.c.b16 %v1275, %v1273
        %v1288 = vpack.c.b16 %v1276, %v1274
        %v1289 = vpack.c.b16 %v1279, %v1277
        %v1290 = vpack.c.b16 %v1280, %v1278
        %v1291 = vpack.c.b16 %v1283, %v1281
        %v1292 = vpack.c.b16 %v1284, %v1282
        %1301 = vmatpush.bf16.msra.mxu0 %v701
        %1302 = vmatpush.bf16.msra.mxu0 %v700
        %1303 = vmatpush.bf16.msra.mxu0 %v699
        %1304 = vmatpush.bf16.msra.mxu0 %v698
        %1305 = vmatpush.bf16.msra.mxu0 %v697
        %1306 = vmatpush.bf16.msra.mxu0 %v696
        %1307 = vmatpush.bf16.msra.mxu0 %v695
        %1308 = vmatpush.bf16.msra.mxu0 %v694
        %1309 = vmatmul.bf16.gmra.mxu0 %v1285
        %v1310 = vpop.f32.mrf.mxu0
        %v1311 = vadd.f32 0.0, %v1310
        %v1312 = vpop.f32.mrf.mxu0
        %v1313 = vadd.f32 0.0, %v1312
        %1314 = vmatmul.bf16.gmra.mxu0 %v1287
        %v1315 = vpop.f32.mrf.mxu0
        %v1316 = vadd.f32 0.0, %v1315
        %v1317 = vpop.f32.mrf.mxu0
        %v1318 = vadd.f32 0.0, %v1317
        %1319 = vmatmul.bf16.gmra.mxu0 %v1289
        %v1320 = vpop.f32.mrf.mxu0
        %v1321 = vadd.f32 0.0, %v1320
        %v1322 = vpop.f32.mrf.mxu0
        %v1323 = vadd.f32 0.0, %v1322
        %1324 = vmatmul.bf16.gmra.mxu0 %v1291
        %v1325 = vpop.f32.mrf.mxu0
        %v1326 = vadd.f32 0.0, %v1325
        %v1327 = vpop.f32.mrf.mxu0
        %v1328 = vadd.f32 0.0, %v1327
        %1329 = vdwg.mxu0
        %1330 = vmatpush.bf16.msra.mxu0 %v709
        %1331 = vmatpush.bf16.msra.mxu0 %v708
        %1332 = vmatpush.bf16.msra.mxu0 %v707
        %1333 = vmatpush.bf16.msra.mxu0 %v706
        %1334 = vmatpush.bf16.msra.mxu0 %v705
        %1335 = vmatpush.bf16.msra.mxu0 %v704
        %1336 = vmatpush.bf16.msra.mxu0 %v703
        %1337 = vmatpush.bf16.msra.mxu0 %v702
        %1338 = vmatmul.bf16.gmra.mxu0 %v1286
        %v1339 = vpop.f32.mrf.mxu0
        %v1340 = vadd.f32 %v1311, %v1339
        %v1341 = vpop.f32.mrf.mxu0
        %v1342 = vadd.f32 %v1313, %v1341
        %1343 = vmatmul.bf16.gmra.mxu0 %v1288
        %v1344 = vpop.f32.mrf.mxu0
        %v1345 = vadd.f32 %v1316, %v1344
        %v1346 = vpop.f32.mrf.mxu0
        %v1347 = vadd.f32 %v1318, %v1346
        %1348 = vmatmul.bf16.gmra.mxu0 %v1290
        %v1349 = vpop.f32.mrf.mxu0
        %v1350 = vadd.f32 %v1321, %v1349
        %v1351 = vpop.f32.mrf.mxu0
        %v1352 = vadd.f32 %v1323, %v1351
        %1353 = vmatmul.bf16.gmra.mxu0 %v1292
        %v1354 = vpop.f32.mrf.mxu0
        %v1355 = vadd.f32 %v1326, %v1354
        %v1356 = vpop.f32.mrf.mxu0
        %v1357 = vadd.f32 %v1328, %v1356
        %1358 = vdwg.mxu0
        %v1359 = vpack.c.bf16 %v1340, %v1340
        %v1360 = vpack.c.bf16 %v1342, %v1342
        %v1361 = vpack.c.bf16 %v1345, %v1345
        %v1362 = vpack.c.bf16 %v1347, %v1347
        %v1363 = vpack.c.bf16 %v1350, %v1350
        %v1364 = vpack.c.bf16 %v1352, %v1352
        %v1365 = vpack.c.bf16 %v1355, %v1355
        %v1366 = vpack.c.bf16 %v1357, %v1357
        %s1367 = scalar_lea.vmem [#allocation5], 384
        %v1368 = vld [vmem:[%s1367] sm:$0xff]
        %v1369 = vld [vmem:[%s1367 + $0x8] sm:$0xff]
        %v1370 = vld [vmem:[%s1367 + $0x10] sm:$0xff]
        %v1371 = vld [vmem:[%s1367 + $0x18] sm:$0xff]
        %v1372 = vld [vmem:[%s1367 + $0x20] sm:$0xff]
        %v1373 = vld [vmem:[%s1367 + $0x28] sm:$0xff]
        %v1374 = vld [vmem:[%s1367 + $0x30] sm:$0xff]
        %v1375 = vld [vmem:[%s1367 + $0x38] sm:$0xff]
        %v1384 = vunpack.c.l.b16 %v1368
        %v1385 = vunpack.c.h.b16 %v1368
        %v1386 = vunpack.c.l.b16 %v1369
        %v1387 = vunpack.c.h.b16 %v1369
        %v1388 = vunpack.c.l.b16 %v1370
        %v1389 = vunpack.c.h.b16 %v1370
        %v1390 = vunpack.c.l.b16 %v1371
        %v1391 = vunpack.c.h.b16 %v1371
        %v1392 = vunpack.c.l.b16 %v1372
        %v1393 = vunpack.c.h.b16 %v1372
        %v1394 = vunpack.c.l.b16 %v1373
        %v1395 = vunpack.c.h.b16 %v1373
        %v1396 = vunpack.c.l.b16 %v1374
        %v1397 = vunpack.c.h.b16 %v1374
        %v1398 = vunpack.c.l.b16 %v1375
        %v1399 = vunpack.c.h.b16 %v1375
        %v1400 = vpack.c.b16 %v1386, %v1384
        %v1401 = vpack.c.b16 %v1387, %v1385
        %v1402 = vpack.c.b16 %v1390, %v1388
        %v1403 = vpack.c.b16 %v1391, %v1389
        %v1404 = vpack.c.b16 %v1394, %v1392
        %v1405 = vpack.c.b16 %v1395, %v1393
        %v1406 = vpack.c.b16 %v1398, %v1396
        %v1407 = vpack.c.b16 %v1399, %v1397
        %1416 = vmatpush.bf16.msra.mxu0 %v701
        %1417 = vmatpush.bf16.msra.mxu0 %v700
        %1418 = vmatpush.bf16.msra.mxu0 %v699
        %1419 = vmatpush.bf16.msra.mxu0 %v698
        %1420 = vmatpush.bf16.msra.mxu0 %v697
        %1421 = vmatpush.bf16.msra.mxu0 %v696
        %1422 = vmatpush.bf16.msra.mxu0 %v695
        %1423 = vmatpush.bf16.msra.mxu0 %v694
        %1424 = vmatmul.bf16.gmra.mxu0 %v1400
        %v1425 = vpop.f32.mrf.mxu0
        %v1426 = vadd.f32 0.0, %v1425
        %v1427 = vpop.f32.mrf.mxu0
        %v1428 = vadd.f32 0.0, %v1427
        %1429 = vmatmul.bf16.gmra.mxu0 %v1402
        %v1430 = vpop.f32.mrf.mxu0
        %v1431 = vadd.f32 0.0, %v1430
        %v1432 = vpop.f32.mrf.mxu0
        %v1433 = vadd.f32 0.0, %v1432
        %1434 = vmatmul.bf16.gmra.mxu0 %v1404
        %v1435 = vpop.f32.mrf.mxu0
        %v1436 = vadd.f32 0.0, %v1435
        %v1437 = vpop.f32.mrf.mxu0
        %v1438 = vadd.f32 0.0, %v1437
        %1439 = vmatmul.bf16.gmra.mxu0 %v1406
        %v1440 = vpop.f32.mrf.mxu0
        %v1441 = vadd.f32 0.0, %v1440
        %v1442 = vpop.f32.mrf.mxu0
        %v1443 = vadd.f32 0.0, %v1442
        %1444 = vdwg.mxu0
        %1445 = vmatpush.bf16.msra.mxu0 %v709
        %1446 = vmatpush.bf16.msra.mxu0 %v708
        %1447 = vmatpush.bf16.msra.mxu0 %v707
        %1448 = vmatpush.bf16.msra.mxu0 %v706
        %1449 = vmatpush.bf16.msra.mxu0 %v705
        %1450 = vmatpush.bf16.msra.mxu0 %v704
        %1451 = vmatpush.bf16.msra.mxu0 %v703
        %1452 = vmatpush.bf16.msra.mxu0 %v702
        %1453 = vmatmul.bf16.gmra.mxu0 %v1401
        %v1454 = vpop.f32.mrf.mxu0
        %v1455 = vadd.f32 %v1426, %v1454
        %v1456 = vpop.f32.mrf.mxu0
        %v1457 = vadd.f32 %v1428, %v1456
        %1458 = vmatmul.bf16.gmra.mxu0 %v1403
        %v1459 = vpop.f32.mrf.mxu0
        %v1460 = vadd.f32 %v1431, %v1459
        %v1461 = vpop.f32.mrf.mxu0
        %v1462 = vadd.f32 %v1433, %v1461
        %1463 = vmatmul.bf16.gmra.mxu0 %v1405
        %v1464 = vpop.f32.mrf.mxu0
        %v1465 = vadd.f32 %v1436, %v1464
        %v1466 = vpop.f32.mrf.mxu0
        %v1467 = vadd.f32 %v1438, %v1466
        %1468 = vmatmul.bf16.gmra.mxu0 %v1407
        %v1469 = vpop.f32.mrf.mxu0
        %v1470 = vadd.f32 %v1441, %v1469
        %v1471 = vpop.f32.mrf.mxu0
        %v1472 = vadd.f32 %v1443, %v1471
        %1473 = vdwg.mxu0
        %v1474 = vpack.c.bf16 %v1455, %v1455
        %v1475 = vpack.c.bf16 %v1457, %v1457
        %v1476 = vpack.c.bf16 %v1460, %v1460
        %v1477 = vpack.c.bf16 %v1462, %v1462
        %v1478 = vpack.c.bf16 %v1465, %v1465
        %v1479 = vpack.c.bf16 %v1467, %v1467
        %v1480 = vpack.c.bf16 %v1470, %v1470
        %v1481 = vpack.c.bf16 %v1472, %v1472
        %s1482 = scalar_lea.vmem [#allocation5], 448
        %v1483 = vld [vmem:[%s1482] sm:$0xff]
        %v1484 = vld [vmem:[%s1482 + $0x8] sm:$0xff]
        %v1485 = vld [vmem:[%s1482 + $0x10] sm:$0xff]
        %v1486 = vld [vmem:[%s1482 + $0x18] sm:$0xff]
        %v1487 = vld [vmem:[%s1482 + $0x20] sm:$0xff]
        %v1488 = vld [vmem:[%s1482 + $0x28] sm:$0xff]
        %v1489 = vld [vmem:[%s1482 + $0x30] sm:$0xff]
        %v1490 = vld [vmem:[%s1482 + $0x38] sm:$0xff]
        %v1499 = vunpack.c.l.b16 %v1483
        %v1500 = vunpack.c.h.b16 %v1483
        %v1501 = vunpack.c.l.b16 %v1484
        %v1502 = vunpack.c.h.b16 %v1484
        %v1503 = vunpack.c.l.b16 %v1485
        %v1504 = vunpack.c.h.b16 %v1485
        %v1505 = vunpack.c.l.b16 %v1486
        %v1506 = vunpack.c.h.b16 %v1486
        %v1507 = vunpack.c.l.b16 %v1487
        %v1508 = vunpack.c.h.b16 %v1487
        %v1509 = vunpack.c.l.b16 %v1488
        %v1510 = vunpack.c.h.b16 %v1488
        %v1511 = vunpack.c.l.b16 %v1489
        %v1512 = vunpack.c.h.b16 %v1489
        %v1513 = vunpack.c.l.b16 %v1490
        %v1514 = vunpack.c.h.b16 %v1490
        %v1515 = vpack.c.b16 %v1501, %v1499
        %v1516 = vpack.c.b16 %v1502, %v1500
        %v1517 = vpack.c.b16 %v1505, %v1503
        %v1518 = vpack.c.b16 %v1506, %v1504
        %v1519 = vpack.c.b16 %v1509, %v1507
        %v1520 = vpack.c.b16 %v1510, %v1508
        %v1521 = vpack.c.b16 %v1513, %v1511
        %v1522 = vpack.c.b16 %v1514, %v1512
        %1531 = vmatpush.bf16.msra.mxu0 %v701
        %1532 = vmatpush.bf16.msra.mxu0 %v700
        %1533 = vmatpush.bf16.msra.mxu0 %v699
        %1534 = vmatpush.bf16.msra.mxu0 %v698
        %1535 = vmatpush.bf16.msra.mxu0 %v697
        %1536 = vmatpush.bf16.msra.mxu0 %v696
        %1537 = vmatpush.bf16.msra.mxu0 %v695
        %1538 = vmatpush.bf16.msra.mxu0 %v694
        %1539 = vmatmul.bf16.gmra.mxu0 %v1515
        %v1540 = vpop.f32.mrf.mxu0
        %v1541 = vadd.f32 0.0, %v1540
        %v1542 = vpop.f32.mrf.mxu0
        %v1543 = vadd.f32 0.0, %v1542
        %1544 = vmatmul.bf16.gmra.mxu0 %v1517
        %v1545 = vpop.f32.mrf.mxu0
        %v1546 = vadd.f32 0.0, %v1545
        %v1547 = vpop.f32.mrf.mxu0
        %v1548 = vadd.f32 0.0, %v1547
        %1549 = vmatmul.bf16.gmra.mxu0 %v1519
        %v1550 = vpop.f32.mrf.mxu0
        %v1551 = vadd.f32 0.0, %v1550
        %v1552 = vpop.f32.mrf.mxu0
        %v1553 = vadd.f32 0.0, %v1552
        %1554 = vmatmul.bf16.gmra.mxu0 %v1521
        %v1555 = vpop.f32.mrf.mxu0
        %v1556 = vadd.f32 0.0, %v1555
        %v1557 = vpop.f32.mrf.mxu0
        %v1558 = vadd.f32 0.0, %v1557
        %1559 = vdwg.mxu0
        %1560 = vmatpush.bf16.msra.mxu0 %v709
        %1561 = vmatpush.bf16.msra.mxu0 %v708
        %1562 = vmatpush.bf16.msra.mxu0 %v707
        %1563 = vmatpush.bf16.msra.mxu0 %v706
        %1564 = vmatpush.bf16.msra.mxu0 %v705
        %1565 = vmatpush.bf16.msra.mxu0 %v704
        %1566 = vmatpush.bf16.msra.mxu0 %v703
        %1567 = vmatpush.bf16.msra.mxu0 %v702
        %1568 = vmatmul.bf16.gmra.mxu0 %v1516
        %v1569 = vpop.f32.mrf.mxu0
        %v1570 = vadd.f32 %v1541, %v1569
        %v1571 = vpop.f32.mrf.mxu0
        %v1572 = vadd.f32 %v1543, %v1571
        %1573 = vmatmul.bf16.gmra.mxu0 %v1518
        %v1574 = vpop.f32.mrf.mxu0
        %v1575 = vadd.f32 %v1546, %v1574
        %v1576 = vpop.f32.mrf.mxu0
        %v1577 = vadd.f32 %v1548, %v1576
        %1578 = vmatmul.bf16.gmra.mxu0 %v1520
        %v1579 = vpop.f32.mrf.mxu0
        %v1580 = vadd.f32 %v1551, %v1579
        %v1581 = vpop.f32.mrf.mxu0
        %v1582 = vadd.f32 %v1553, %v1581
        %1583 = vmatmul.bf16.gmra.mxu0 %v1522
        %v1584 = vpop.f32.mrf.mxu0
        %v1585 = vadd.f32 %v1556, %v1584
        %v1586 = vpop.f32.mrf.mxu0
        %v1587 = vadd.f32 %v1558, %v1586
        %1588 = vdwg.mxu0
        %v1589 = vpack.c.bf16 %v1570, %v1570
        %v1590 = vpack.c.bf16 %v1572, %v1572
        %v1591 = vpack.c.bf16 %v1575, %v1575
        %v1592 = vpack.c.bf16 %v1577, %v1577
        %v1593 = vpack.c.bf16 %v1580, %v1580
        %v1594 = vpack.c.bf16 %v1582, %v1582
        %v1595 = vpack.c.bf16 %v1585, %v1585
        %v1596 = vpack.c.bf16 %v1587, %v1587
        %s1597 = scalar_lea.vmem [#allocation5], 512
        %v1598 = vld [vmem:[%s1597] sm:$0xff]
        %v1599 = vld [vmem:[%s1597 + $0x8] sm:$0xff]
        %v1600 = vld [vmem:[%s1597 + $0x10] sm:$0xff]
        %v1601 = vld [vmem:[%s1597 + $0x18] sm:$0xff]
        %v1602 = vld [vmem:[%s1597 + $0x20] sm:$0xff]
        %v1603 = vld [vmem:[%s1597 + $0x28] sm:$0xff]
        %v1604 = vld [vmem:[%s1597 + $0x30] sm:$0xff]
        %v1605 = vld [vmem:[%s1597 + $0x38] sm:$0xff]
        %v1614 = vunpack.c.l.b16 %v1598
        %v1615 = vunpack.c.h.b16 %v1598
        %v1616 = vunpack.c.l.b16 %v1599
        %v1617 = vunpack.c.h.b16 %v1599
        %v1618 = vunpack.c.l.b16 %v1600
        %v1619 = vunpack.c.h.b16 %v1600
        %v1620 = vunpack.c.l.b16 %v1601
        %v1621 = vunpack.c.h.b16 %v1601
        %v1622 = vunpack.c.l.b16 %v1602
        %v1623 = vunpack.c.h.b16 %v1602
        %v1624 = vunpack.c.l.b16 %v1603
        %v1625 = vunpack.c.h.b16 %v1603
        %v1626 = vunpack.c.l.b16 %v1604
        %v1627 = vunpack.c.h.b16 %v1604
        %v1628 = vunpack.c.l.b16 %v1605
        %v1629 = vunpack.c.h.b16 %v1605
        %v1630 = vpack.c.b16 %v1616, %v1614
        %v1631 = vpack.c.b16 %v1617, %v1615
        %v1632 = vpack.c.b16 %v1620, %v1618
        %v1633 = vpack.c.b16 %v1621, %v1619
        %v1634 = vpack.c.b16 %v1624, %v1622
        %v1635 = vpack.c.b16 %v1625, %v1623
        %v1636 = vpack.c.b16 %v1628, %v1626
        %v1637 = vpack.c.b16 %v1629, %v1627
        %1646 = vmatpush.bf16.msra.mxu0 %v701
        %1647 = vmatpush.bf16.msra.mxu0 %v700
        %1648 = vmatpush.bf16.msra.mxu0 %v699
        %1649 = vmatpush.bf16.msra.mxu0 %v698
        %1650 = vmatpush.bf16.msra.mxu0 %v697
        %1651 = vmatpush.bf16.msra.mxu0 %v696
        %1652 = vmatpush.bf16.msra.mxu0 %v695
        %1653 = vmatpush.bf16.msra.mxu0 %v694
        %1654 = vmatmul.bf16.gmra.mxu0 %v1630
        %v1655 = vpop.f32.mrf.mxu0
        %v1656 = vadd.f32 0.0, %v1655
        %v1657 = vpop.f32.mrf.mxu0
        %v1658 = vadd.f32 0.0, %v1657
        %1659 = vmatmul.bf16.gmra.mxu0 %v1632
        %v1660 = vpop.f32.mrf.mxu0
        %v1661 = vadd.f32 0.0, %v1660
        %v1662 = vpop.f32.mrf.mxu0
        %v1663 = vadd.f32 0.0, %v1662
        %1664 = vmatmul.bf16.gmra.mxu0 %v1634
        %v1665 = vpop.f32.mrf.mxu0
        %v1666 = vadd.f32 0.0, %v1665
        %v1667 = vpop.f32.mrf.mxu0
        %v1668 = vadd.f32 0.0, %v1667
        %1669 = vmatmul.bf16.gmra.mxu0 %v1636
        %v1670 = vpop.f32.mrf.mxu0
        %v1671 = vadd.f32 0.0, %v1670
        %v1672 = vpop.f32.mrf.mxu0
        %v1673 = vadd.f32 0.0, %v1672
        %1674 = vdwg.mxu0
        %1675 = vmatpush.bf16.msra.mxu0 %v709
        %1676 = vmatpush.bf16.msra.mxu0 %v708
        %1677 = vmatpush.bf16.msra.mxu0 %v707
        %1678 = vmatpush.bf16.msra.mxu0 %v706
        %1679 = vmatpush.bf16.msra.mxu0 %v705
        %1680 = vmatpush.bf16.msra.mxu0 %v704
        %1681 = vmatpush.bf16.msra.mxu0 %v703
        %1682 = vmatpush.bf16.msra.mxu0 %v702
        %1683 = vmatmul.bf16.gmra.mxu0 %v1631
        %v1684 = vpop.f32.mrf.mxu0
        %v1685 = vadd.f32 %v1656, %v1684
        %v1686 = vpop.f32.mrf.mxu0
        %v1687 = vadd.f32 %v1658, %v1686
        %1688 = vmatmul.bf16.gmra.mxu0 %v1633
        %v1689 = vpop.f32.mrf.mxu0
        %v1690 = vadd.f32 %v1661, %v1689
        %v1691 = vpop.f32.mrf.mxu0
        %v1692 = vadd.f32 %v1663, %v1691
        %1693 = vmatmul.bf16.gmra.mxu0 %v1635
        %v1694 = vpop.f32.mrf.mxu0
        %v1695 = vadd.f32 %v1666, %v1694
        %v1696 = vpop.f32.mrf.mxu0
        %v1697 = vadd.f32 %v1668, %v1696
        %1698 = vmatmul.bf16.gmra.mxu0 %v1637
        %v1699 = vpop.f32.mrf.mxu0
        %v1700 = vadd.f32 %v1671, %v1699
        %v1701 = vpop.f32.mrf.mxu0
        %v1702 = vadd.f32 %v1673, %v1701
        %1703 = vdwg.mxu0
        %v1704 = vpack.c.bf16 %v1685, %v1685
        %v1705 = vpack.c.bf16 %v1687, %v1687
        %v1706 = vpack.c.bf16 %v1690, %v1690
        %v1707 = vpack.c.bf16 %v1692, %v1692
        %v1708 = vpack.c.bf16 %v1695, %v1695
        %v1709 = vpack.c.bf16 %v1697, %v1697
        %v1710 = vpack.c.bf16 %v1700, %v1700
        %v1711 = vpack.c.bf16 %v1702, %v1702
        %v1720 = vunpack.c.l.b16 %v784
        %v1721 = vunpack.c.l.b16 %v785
        %v1722 = vunpack.c.l.b16 %v786
        %v1723 = vunpack.c.l.b16 %v787
        %v1724 = vunpack.c.l.b16 %v788
        %v1725 = vunpack.c.l.b16 %v789
        %v1726 = vunpack.c.l.b16 %v790
        %v1727 = vunpack.c.l.b16 %v791
        %v1728 = vpack.c.b16 %v1721, %v1720
        %v1729 = vpack.c.b16 %v1723, %v1722
        %v1730 = vpack.c.b16 %v1725, %v1724
        %v1731 = vpack.c.b16 %v1727, %v1726
        %v1744 = vunpack.c.l.b16 %v899
        %v1745 = vunpack.c.l.b16 %v900
        %v1746 = vunpack.c.l.b16 %v901
        %v1747 = vunpack.c.l.b16 %v902
        %v1748 = vunpack.c.l.b16 %v903
        %v1749 = vunpack.c.l.b16 %v904
        %v1750 = vunpack.c.l.b16 %v905
        %v1751 = vunpack.c.l.b16 %v906
        %v1752 = vpack.c.b16 %v1745, %v1744
        %v1753 = vpack.c.b16 %v1747, %v1746
        %v1754 = vpack.c.b16 %v1749, %v1748
        %v1755 = vpack.c.b16 %v1751, %v1750
        %v1768 = vunpack.c.l.b16 %v1014
        %v1769 = vunpack.c.l.b16 %v1015
        %v1770 = vunpack.c.l.b16 %v1016
        %v1771 = vunpack.c.l.b16 %v1017
        %v1772 = vunpack.c.l.b16 %v1018
        %v1773 = vunpack.c.l.b16 %v1019
        %v1774 = vunpack.c.l.b16 %v1020
        %v1775 = vunpack.c.l.b16 %v1021
        %v1776 = vpack.c.b16 %v1769, %v1768
        %v1777 = vpack.c.b16 %v1771, %v1770
        %v1778 = vpack.c.b16 %v1773, %v1772
        %v1779 = vpack.c.b16 %v1775, %v1774
        %v1792 = vunpack.c.l.b16 %v1129
        %v1793 = vunpack.c.l.b16 %v1130
        %v1794 = vunpack.c.l.b16 %v1131
        %v1795 = vunpack.c.l.b16 %v1132
        %v1796 = vunpack.c.l.b16 %v1133
        %v1797 = vunpack.c.l.b16 %v1134
        %v1798 = vunpack.c.l.b16 %v1135
        %v1799 = vunpack.c.l.b16 %v1136
        %v1800 = vpack.c.b16 %v1793, %v1792
        %v1801 = vpack.c.b16 %v1795, %v1794
        %v1802 = vpack.c.b16 %v1797, %v1796
        %v1803 = vpack.c.b16 %v1799, %v1798
        %v1816 = vunpack.c.l.b16 %v1244
        %v1817 = vunpack.c.l.b16 %v1245
        %v1818 = vunpack.c.l.b16 %v1246
        %v1819 = vunpack.c.l.b16 %v1247
        %v1820 = vunpack.c.l.b16 %v1248
        %v1821 = vunpack.c.l.b16 %v1249
        %v1822 = vunpack.c.l.b16 %v1250
        %v1823 = vunpack.c.l.b16 %v1251
        %v1824 = vpack.c.b16 %v1817, %v1816
        %v1825 = vpack.c.b16 %v1819, %v1818
        %v1826 = vpack.c.b16 %v1821, %v1820
        %v1827 = vpack.c.b16 %v1823, %v1822
        %v1840 = vunpack.c.l.b16 %v1359
        %v1841 = vunpack.c.l.b16 %v1360
        %v1842 = vunpack.c.l.b16 %v1361
        %v1843 = vunpack.c.l.b16 %v1362
        %v1844 = vunpack.c.l.b16 %v1363
        %v1845 = vunpack.c.l.b16 %v1364
        %v1846 = vunpack.c.l.b16 %v1365
        %v1847 = vunpack.c.l.b16 %v1366
        %v1848 = vpack.c.b16 %v1841, %v1840
        %v1849 = vpack.c.b16 %v1843, %v1842
        %v1850 = vpack.c.b16 %v1845, %v1844
        %v1851 = vpack.c.b16 %v1847, %v1846
        %v1864 = vunpack.c.l.b16 %v1474
        %v1865 = vunpack.c.l.b16 %v1475
        %v1866 = vunpack.c.l.b16 %v1476
        %v1867 = vunpack.c.l.b16 %v1477
        %v1868 = vunpack.c.l.b16 %v1478
        %v1869 = vunpack.c.l.b16 %v1479
        %v1870 = vunpack.c.l.b16 %v1480
        %v1871 = vunpack.c.l.b16 %v1481
        %v1872 = vpack.c.b16 %v1865, %v1864
        %v1873 = vpack.c.b16 %v1867, %v1866
        %v1874 = vpack.c.b16 %v1869, %v1868
        %v1875 = vpack.c.b16 %v1871, %v1870
        %v1888 = vunpack.c.l.b16 %v1589
        %v1889 = vunpack.c.l.b16 %v1590
        %v1890 = vunpack.c.l.b16 %v1591
        %v1891 = vunpack.c.l.b16 %v1592
        %v1892 = vunpack.c.l.b16 %v1593
        %v1893 = vunpack.c.l.b16 %v1594
        %v1894 = vunpack.c.l.b16 %v1595
        %v1895 = vunpack.c.l.b16 %v1596
        %v1896 = vpack.c.b16 %v1889, %v1888
        %v1897 = vpack.c.b16 %v1891, %v1890
        %v1898 = vpack.c.b16 %v1893, %v1892
        %v1899 = vpack.c.b16 %v1895, %v1894
        %v1912 = vunpack.c.l.b16 %v1704
        %v1913 = vunpack.c.l.b16 %v1705
        %v1914 = vunpack.c.l.b16 %v1706
        %v1915 = vunpack.c.l.b16 %v1707
        %v1916 = vunpack.c.l.b16 %v1708
        %v1917 = vunpack.c.l.b16 %v1709
        %v1918 = vunpack.c.l.b16 %v1710
        %v1919 = vunpack.c.l.b16 %v1711
        %v1920 = vpack.c.b16 %v1913, %v1912
        %v1921 = vpack.c.b16 %v1915, %v1914
        %v1922 = vpack.c.b16 %v1917, %v1916
        %v1923 = vpack.c.b16 %v1919, %v1918
        %v1928 = vld [vmem:[#allocation7] sm:$0xf]
        %v1929 = vld [vmem:[#allocation7 + $0x4] sm:$0xf]
        %v1930 = vld [vmem:[#allocation7 + $0x8] sm:$0xf]
        %v1931 = vld [vmem:[#allocation7 + $0xc] sm:$0xf]
        %v1932 = vld [vmem:[#allocation7 + $0x10] sm:$0xf]
        %v1933 = vld [vmem:[#allocation7 + $0x14] sm:$0xf]
        %v1934 = vld [vmem:[#allocation7 + $0x18] sm:$0xf]
        %v1935 = vld [vmem:[#allocation7 + $0x1c] sm:$0xf]
        %v1936 = vld [vmem:[#allocation7 + $0x20] sm:$0xf]
        %v1937 = vld [vmem:[#allocation7 + $0x24] sm:$0xf]
        %v1938 = vld [vmem:[#allocation7 + $0x28] sm:$0xf]
        %v1939 = vld [vmem:[#allocation7 + $0x2c] sm:$0xf]
        %v1940 = vld [vmem:[#allocation7 + $0x30] sm:$0xf]
        %v1941 = vld [vmem:[#allocation7 + $0x34] sm:$0xf]
        %v1942 = vld [vmem:[#allocation7 + $0x38] sm:$0xf]
        %v1943 = vld [vmem:[#allocation7 + $0x3c] sm:$0xf]
        %v1944 = vld [vmem:[#allocation7 + $0x40] sm:$0xf]
        %v1945 = vld [vmem:[#allocation7 + $0x44] sm:$0xf]
        %v1946 = vld [vmem:[#allocation7 + $0x48] sm:$0xf]
        %v1947 = vld [vmem:[#allocation7 + $0x4c] sm:$0xf]
        %v1948 = vld [vmem:[#allocation7 + $0x50] sm:$0xf]
        %v1949 = vld [vmem:[#allocation7 + $0x54] sm:$0xf]
        %v1950 = vld [vmem:[#allocation7 + $0x58] sm:$0xf]
        %v1951 = vld [vmem:[#allocation7 + $0x5c] sm:$0xf]
        %v1952 = vld [vmem:[#allocation7 + $0x60] sm:$0xf]
        %v1953 = vld [vmem:[#allocation7 + $0x64] sm:$0xf]
        %v1954 = vld [vmem:[#allocation7 + $0x68] sm:$0xf]
        %v1955 = vld [vmem:[#allocation7 + $0x6c] sm:$0xf]
        %v1956 = vld [vmem:[#allocation7 + $0x70] sm:$0xf]
        %v1957 = vld [vmem:[#allocation7 + $0x74] sm:$0xf]
        %v1958 = vld [vmem:[#allocation7 + $0x78] sm:$0xf]
        %v1959 = vld [vmem:[#allocation7 + $0x7c] sm:$0xf]
        %v1960 = vld [vmem:[#allocation7 + $0x80] sm:$0xf]
        %v1961 = vld [vmem:[#allocation7 + $0x84] sm:$0xf]
        %v1962 = vld [vmem:[#allocation7 + $0x88] sm:$0xf]
        %v1963 = vld [vmem:[#allocation7 + $0x8c] sm:$0xf]
        %v1964 = vld [vmem:[#allocation7 + $0x90] sm:$0xf]
        %v1965 = vld [vmem:[#allocation7 + $0x94] sm:$0xf]
        %v1966 = vld [vmem:[#allocation7 + $0x98] sm:$0xf]
        %v1967 = vld [vmem:[#allocation7 + $0x9c] sm:$0xf]
        %v1968 = vld [vmem:[#allocation7 + $0xa0] sm:$0xf]
        %v1969 = vld [vmem:[#allocation7 + $0xa4] sm:$0xf]
        %v1970 = vld [vmem:[#allocation7 + $0xa8] sm:$0xf]
        %v1971 = vld [vmem:[#allocation7 + $0xac] sm:$0xf]
        %v1972 = vld [vmem:[#allocation7 + $0xb0] sm:$0xf]
        %v1973 = vld [vmem:[#allocation7 + $0xb4] sm:$0xf]
        %v1974 = vld [vmem:[#allocation7 + $0xb8] sm:$0xf]
        %v1975 = vld [vmem:[#allocation7 + $0xbc] sm:$0xf]
        %v1976 = vld [vmem:[#allocation7 + $0xc0] sm:$0xf]
        %v1977 = vld [vmem:[#allocation7 + $0xc4] sm:$0xf]
        %v1978 = vld [vmem:[#allocation7 + $0xc8] sm:$0xf]
        %v1979 = vld [vmem:[#allocation7 + $0xcc] sm:$0xf]
        %v1980 = vld [vmem:[#allocation7 + $0xd0] sm:$0xf]
        %v1981 = vld [vmem:[#allocation7 + $0xd4] sm:$0xf]
        %v1982 = vld [vmem:[#allocation7 + $0xd8] sm:$0xf]
        %v1983 = vld [vmem:[#allocation7 + $0xdc] sm:$0xf]
        %v1984 = vld [vmem:[#allocation7 + $0xe0] sm:$0xf]
        %v1985 = vld [vmem:[#allocation7 + $0xe4] sm:$0xf]
        %v1986 = vld [vmem:[#allocation7 + $0xe8] sm:$0xf]
        %v1987 = vld [vmem:[#allocation7 + $0xec] sm:$0xf]
        %v1988 = vld [vmem:[#allocation7 + $0xf0] sm:$0xf]
        %v1989 = vld [vmem:[#allocation7 + $0xf4] sm:$0xf]
        %v1990 = vld [vmem:[#allocation7 + $0xf8] sm:$0xf]
        %v1991 = vld [vmem:[#allocation7 + $0xfc] sm:$0xf]
        %v1992 = vld [vmem:[#allocation7 + $0x100] sm:$0xf]
        %v1993 = vld [vmem:[#allocation7 + $0x104] sm:$0xf]
        %v1994 = vld [vmem:[#allocation7 + $0x108] sm:$0xf]
        %v1995 = vld [vmem:[#allocation7 + $0x10c] sm:$0xf]
        %v1996 = vld [vmem:[#allocation7 + $0x110] sm:$0xf]
        %v1997 = vld [vmem:[#allocation7 + $0x114] sm:$0xf]
        %v1998 = vld [vmem:[#allocation7 + $0x118] sm:$0xf]
        %v1999 = vld [vmem:[#allocation7 + $0x11c] sm:$0xf]
        %v2000 = vld [vmem:[#allocation7 + $0x120] sm:$0xf]
        %v2001 = vld [vmem:[#allocation7 + $0x124] sm:$0xf]
        %v2002 = vld [vmem:[#allocation7 + $0x128] sm:$0xf]
        %v2003 = vld [vmem:[#allocation7 + $0x12c] sm:$0xf]
        %v2004 = vld [vmem:[#allocation7 + $0x130] sm:$0xf]
        %v2005 = vld [vmem:[#allocation7 + $0x134] sm:$0xf]
        %v2006 = vld [vmem:[#allocation7 + $0x138] sm:$0xf]
        %v2007 = vld [vmem:[#allocation7 + $0x13c] sm:$0xf]
        %v2008 = vld [vmem:[#allocation7 + $0x140] sm:$0xf]
        %v2009 = vld [vmem:[#allocation7 + $0x144] sm:$0xf]
        %v2010 = vld [vmem:[#allocation7 + $0x148] sm:$0xf]
        %v2011 = vld [vmem:[#allocation7 + $0x14c] sm:$0xf]
        %v2012 = vld [vmem:[#allocation7 + $0x150] sm:$0xf]
        %v2013 = vld [vmem:[#allocation7 + $0x154] sm:$0xf]
        %v2014 = vld [vmem:[#allocation7 + $0x158] sm:$0xf]
        %v2015 = vld [vmem:[#allocation7 + $0x15c] sm:$0xf]
        %v2016 = vld [vmem:[#allocation7 + $0x160] sm:$0xf]
        %v2017 = vld [vmem:[#allocation7 + $0x164] sm:$0xf]
        %v2018 = vld [vmem:[#allocation7 + $0x168] sm:$0xf]
        %v2019 = vld [vmem:[#allocation7 + $0x16c] sm:$0xf]
        %v2020 = vld [vmem:[#allocation7 + $0x170] sm:$0xf]
        %v2021 = vld [vmem:[#allocation7 + $0x174] sm:$0xf]
        %v2022 = vld [vmem:[#allocation7 + $0x178] sm:$0xf]
        %v2023 = vld [vmem:[#allocation7 + $0x17c] sm:$0xf]
        %v2024 = vld [vmem:[#allocation7 + $0x180] sm:$0xf]
        %v2025 = vld [vmem:[#allocation7 + $0x184] sm:$0xf]
        %v2026 = vld [vmem:[#allocation7 + $0x188] sm:$0xf]
        %v2027 = vld [vmem:[#allocation7 + $0x18c] sm:$0xf]
        %v2028 = vld [vmem:[#allocation7 + $0x190] sm:$0xf]
        %v2029 = vld [vmem:[#allocation7 + $0x194] sm:$0xf]
        %v2030 = vld [vmem:[#allocation7 + $0x198] sm:$0xf]
        %v2031 = vld [vmem:[#allocation7 + $0x19c] sm:$0xf]
        %v2032 = vld [vmem:[#allocation7 + $0x1a0] sm:$0xf]
        %v2033 = vld [vmem:[#allocation7 + $0x1a4] sm:$0xf]
        %v2034 = vld [vmem:[#allocation7 + $0x1a8] sm:$0xf]
        %v2035 = vld [vmem:[#allocation7 + $0x1ac] sm:$0xf]
        %v2036 = vld [vmem:[#allocation7 + $0x1b0] sm:$0xf]
        %v2037 = vld [vmem:[#allocation7 + $0x1b4] sm:$0xf]
        %v2038 = vld [vmem:[#allocation7 + $0x1b8] sm:$0xf]
        %v2039 = vld [vmem:[#allocation7 + $0x1bc] sm:$0xf]
        %v2040 = vld [vmem:[#allocation7 + $0x1c0] sm:$0xf]
        %v2041 = vld [vmem:[#allocation7 + $0x1c4] sm:$0xf]
        %v2042 = vld [vmem:[#allocation7 + $0x1c8] sm:$0xf]
        %v2043 = vld [vmem:[#allocation7 + $0x1cc] sm:$0xf]
        %v2044 = vld [vmem:[#allocation7 + $0x1d0] sm:$0xf]
        %v2045 = vld [vmem:[#allocation7 + $0x1d4] sm:$0xf]
        %v2046 = vld [vmem:[#allocation7 + $0x1d8] sm:$0xf]
        %v2047 = vld [vmem:[#allocation7 + $0x1dc] sm:$0xf]
        %v2048 = vld [vmem:[#allocation7 + $0x1e0] sm:$0xf]
        %v2049 = vld [vmem:[#allocation7 + $0x1e4] sm:$0xf]
        %v2050 = vld [vmem:[#allocation7 + $0x1e8] sm:$0xf]
        %v2051 = vld [vmem:[#allocation7 + $0x1ec] sm:$0xf]
        %v2052 = vld [vmem:[#allocation7 + $0x1f0] sm:$0xf]
        %v2053 = vld [vmem:[#allocation7 + $0x1f4] sm:$0xf]
        %v2054 = vld [vmem:[#allocation7 + $0x1f8] sm:$0xf]
        %v2055 = vld [vmem:[#allocation7 + $0x1fc] sm:$0xf]
        %v2056 = vld [vmem:[#allocation7 + $0x200] sm:$0xf]
        %v2057 = vld [vmem:[#allocation7 + $0x204] sm:$0xf]
        %v2058 = vld [vmem:[#allocation7 + $0x208] sm:$0xf]
        %v2059 = vld [vmem:[#allocation7 + $0x20c] sm:$0xf]
        %v2060 = vld [vmem:[#allocation7 + $0x210] sm:$0xf]
        %v2061 = vld [vmem:[#allocation7 + $0x214] sm:$0xf]
        %v2062 = vld [vmem:[#allocation7 + $0x218] sm:$0xf]
        %v2063 = vld [vmem:[#allocation7 + $0x21c] sm:$0xf]
        %v2064 = vld [vmem:[#allocation7 + $0x220] sm:$0xf]
        %v2065 = vld [vmem:[#allocation7 + $0x224] sm:$0xf]
        %v2066 = vld [vmem:[#allocation7 + $0x228] sm:$0xf]
        %v2067 = vld [vmem:[#allocation7 + $0x22c] sm:$0xf]
        %v2068 = vld [vmem:[#allocation7 + $0x230] sm:$0xf]
        %v2069 = vld [vmem:[#allocation7 + $0x234] sm:$0xf]
        %v2070 = vld [vmem:[#allocation7 + $0x238] sm:$0xf]
        %v2071 = vld [vmem:[#allocation7 + $0x23c] sm:$0xf]
        %v2072 = vld [vmem:[%s3] sm:$0x1]
        %v2074 = vperm.slane %v2072, 0
        %v2220 = vunpack.c.l.b16 %v1928
        %v2221 = vunpack.c.l.b16 %v1929
        %v2222 = vunpack.c.l.b16 %v1930
        %v2223 = vunpack.c.l.b16 %v1931
        %v2224 = vunpack.c.l.b16 %v1932
        %v2225 = vunpack.c.l.b16 %v1933
        %v2226 = vunpack.c.l.b16 %v1934
        %v2227 = vunpack.c.l.b16 %v1935
        %v2228 = vunpack.c.l.b16 %v1936
        %v2229 = vunpack.c.l.b16 %v1937
        %v2230 = vunpack.c.l.b16 %v1938
        %v2231 = vunpack.c.l.b16 %v1939
        %v2232 = vunpack.c.l.b16 %v1940
        %v2233 = vunpack.c.l.b16 %v1941
        %v2234 = vunpack.c.l.b16 %v1942
        %v2235 = vunpack.c.l.b16 %v1943
        %v2236 = vunpack.c.l.b16 %v1944
        %v2237 = vunpack.c.l.b16 %v1945
        %v2238 = vunpack.c.l.b16 %v1946
        %v2239 = vunpack.c.l.b16 %v1947
        %v2240 = vunpack.c.l.b16 %v1948
        %v2241 = vunpack.c.l.b16 %v1949
        %v2242 = vunpack.c.l.b16 %v1950
        %v2243 = vunpack.c.l.b16 %v1951
        %v2244 = vunpack.c.l.b16 %v1952
        %v2245 = vunpack.c.l.b16 %v1953
        %v2246 = vunpack.c.l.b16 %v1954
        %v2247 = vunpack.c.l.b16 %v1955
        %v2248 = vunpack.c.l.b16 %v1956
        %v2249 = vunpack.c.l.b16 %v1957
        %v2250 = vunpack.c.l.b16 %v1958
        %v2251 = vunpack.c.l.b16 %v1959
        %v2252 = vunpack.c.l.b16 %v1960
        %v2253 = vunpack.c.l.b16 %v1961
        %v2254 = vunpack.c.l.b16 %v1962
        %v2255 = vunpack.c.l.b16 %v1963
        %v2256 = vunpack.c.l.b16 %v1964
        %v2257 = vunpack.c.l.b16 %v1965
        %v2258 = vunpack.c.l.b16 %v1966
        %v2259 = vunpack.c.l.b16 %v1967
        %v2260 = vunpack.c.l.b16 %v1968
        %v2261 = vunpack.c.l.b16 %v1969
        %v2262 = vunpack.c.l.b16 %v1970
        %v2263 = vunpack.c.l.b16 %v1971
        %v2264 = vunpack.c.l.b16 %v1972
        %v2265 = vunpack.c.l.b16 %v1973
        %v2266 = vunpack.c.l.b16 %v1974
        %v2267 = vunpack.c.l.b16 %v1975
        %v2268 = vunpack.c.l.b16 %v1976
        %v2269 = vunpack.c.l.b16 %v1977
        %v2270 = vunpack.c.l.b16 %v1978
        %v2271 = vunpack.c.l.b16 %v1979
        %v2272 = vunpack.c.l.b16 %v1980
        %v2273 = vunpack.c.l.b16 %v1981
        %v2274 = vunpack.c.l.b16 %v1982
        %v2275 = vunpack.c.l.b16 %v1983
        %v2276 = vunpack.c.l.b16 %v1984
        %v2277 = vunpack.c.l.b16 %v1985
        %v2278 = vunpack.c.l.b16 %v1986
        %v2279 = vunpack.c.l.b16 %v1987
        %v2280 = vunpack.c.l.b16 %v1988
        %v2281 = vunpack.c.l.b16 %v1989
        %v2282 = vunpack.c.l.b16 %v1990
        %v2283 = vunpack.c.l.b16 %v1991
        %v2284 = vunpack.c.l.b16 %v1992
        %v2285 = vunpack.c.l.b16 %v1993
        %v2286 = vunpack.c.l.b16 %v1994
        %v2287 = vunpack.c.l.b16 %v1995
        %v2288 = vunpack.c.l.b16 %v1996
        %v2289 = vunpack.c.l.b16 %v1997
        %v2290 = vunpack.c.l.b16 %v1998
        %v2291 = vunpack.c.l.b16 %v1999
        %v2292 = vunpack.c.l.b16 %v2000
        %v2293 = vunpack.c.l.b16 %v2001
        %v2294 = vunpack.c.l.b16 %v2002
        %v2295 = vunpack.c.l.b16 %v2003
        %v2296 = vunpack.c.l.b16 %v2004
        %v2297 = vunpack.c.l.b16 %v2005
        %v2298 = vunpack.c.l.b16 %v2006
        %v2299 = vunpack.c.l.b16 %v2007
        %v2300 = vunpack.c.l.b16 %v2008
        %v2301 = vunpack.c.l.b16 %v2009
        %v2302 = vunpack.c.l.b16 %v2010
        %v2303 = vunpack.c.l.b16 %v2011
        %v2304 = vunpack.c.l.b16 %v2012
        %v2305 = vunpack.c.l.b16 %v2013
        %v2306 = vunpack.c.l.b16 %v2014
        %v2307 = vunpack.c.l.b16 %v2015
        %v2308 = vunpack.c.l.b16 %v2016
        %v2309 = vunpack.c.l.b16 %v2017
        %v2310 = vunpack.c.l.b16 %v2018
        %v2311 = vunpack.c.l.b16 %v2019
        %v2312 = vunpack.c.l.b16 %v2020
        %v2313 = vunpack.c.l.b16 %v2021
        %v2314 = vunpack.c.l.b16 %v2022
        %v2315 = vunpack.c.l.b16 %v2023
        %v2316 = vunpack.c.l.b16 %v2024
        %v2317 = vunpack.c.l.b16 %v2025
        %v2318 = vunpack.c.l.b16 %v2026
        %v2319 = vunpack.c.l.b16 %v2027
        %v2320 = vunpack.c.l.b16 %v2028
        %v2321 = vunpack.c.l.b16 %v2029
        %v2322 = vunpack.c.l.b16 %v2030
        %v2323 = vunpack.c.l.b16 %v2031
        %v2324 = vunpack.c.l.b16 %v2032
        %v2325 = vunpack.c.l.b16 %v2033
        %v2326 = vunpack.c.l.b16 %v2034
        %v2327 = vunpack.c.l.b16 %v2035
        %v2328 = vunpack.c.l.b16 %v2036
        %v2329 = vunpack.c.l.b16 %v2037
        %v2330 = vunpack.c.l.b16 %v2038
        %v2331 = vunpack.c.l.b16 %v2039
        %v2332 = vunpack.c.l.b16 %v2040
        %v2333 = vunpack.c.l.b16 %v2041
        %v2334 = vunpack.c.l.b16 %v2042
        %v2335 = vunpack.c.l.b16 %v2043
        %v2336 = vunpack.c.l.b16 %v2044
        %v2337 = vunpack.c.l.b16 %v2045
        %v2338 = vunpack.c.l.b16 %v2046
        %v2339 = vunpack.c.l.b16 %v2047
        %v2340 = vunpack.c.l.b16 %v2048
        %v2341 = vunpack.c.l.b16 %v2049
        %v2342 = vunpack.c.l.b16 %v2050
        %v2343 = vunpack.c.l.b16 %v2051
        %v2344 = vunpack.c.l.b16 %v2052
        %v2345 = vunpack.c.l.b16 %v2053
        %v2346 = vunpack.c.l.b16 %v2054
        %v2347 = vunpack.c.l.b16 %v2055
        %v2348 = vunpack.c.l.b16 %v2056
        %v2349 = vunpack.c.l.b16 %v2057
        %v2350 = vunpack.c.l.b16 %v2058
        %v2351 = vunpack.c.l.b16 %v2059
        %v2352 = vunpack.c.l.b16 %v2060
        %v2353 = vunpack.c.l.b16 %v2061
        %v2354 = vunpack.c.l.b16 %v2062
        %v2355 = vunpack.c.l.b16 %v2063
        %v2356 = vunpack.c.l.b16 %v2064
        %v2357 = vunpack.c.l.b16 %v2065
        %v2358 = vunpack.c.l.b16 %v2066
        %v2359 = vunpack.c.l.b16 %v2067
        %v2360 = vunpack.c.l.b16 %v2068
        %v2361 = vunpack.c.l.b16 %v2069
        %v2362 = vunpack.c.l.b16 %v2070
        %v2363 = vunpack.c.l.b16 %v2071
        %v2364 = vpack.c.b16 %v2221, %v2220
        %v2365 = vpack.c.b16 %v2223, %v2222
        %v2366 = vpack.c.b16 %v2225, %v2224
        %v2367 = vpack.c.b16 %v2227, %v2226
        %v2368 = vpack.c.b16 %v2229, %v2228
        %v2369 = vpack.c.b16 %v2231, %v2230
        %v2370 = vpack.c.b16 %v2233, %v2232
        %v2371 = vpack.c.b16 %v2235, %v2234
        %v2372 = vpack.c.b16 %v2237, %v2236
        %v2373 = vpack.c.b16 %v2239, %v2238
        %v2374 = vpack.c.b16 %v2241, %v2240
        %v2375 = vpack.c.b16 %v2243, %v2242
        %v2376 = vpack.c.b16 %v2245, %v2244
        %v2377 = vpack.c.b16 %v2247, %v2246
        %v2378 = vpack.c.b16 %v2249, %v2248
        %v2379 = vpack.c.b16 %v2251, %v2250
        %v2380 = vpack.c.b16 %v2253, %v2252
        %v2381 = vpack.c.b16 %v2255, %v2254
        %v2382 = vpack.c.b16 %v2257, %v2256
        %v2383 = vpack.c.b16 %v2259, %v2258
        %v2384 = vpack.c.b16 %v2261, %v2260
        %v2385 = vpack.c.b16 %v2263, %v2262
        %v2386 = vpack.c.b16 %v2265, %v2264
        %v2387 = vpack.c.b16 %v2267, %v2266
        %v2388 = vpack.c.b16 %v2269, %v2268
        %v2389 = vpack.c.b16 %v2271, %v2270
        %v2390 = vpack.c.b16 %v2273, %v2272
        %v2391 = vpack.c.b16 %v2275, %v2274
        %v2392 = vpack.c.b16 %v2277, %v2276
        %v2393 = vpack.c.b16 %v2279, %v2278
        %v2394 = vpack.c.b16 %v2281, %v2280
        %v2395 = vpack.c.b16 %v2283, %v2282
        %v2396 = vpack.c.b16 %v2285, %v2284
        %v2397 = vpack.c.b16 %v2287, %v2286
        %v2398 = vpack.c.b16 %v2289, %v2288
        %v2399 = vpack.c.b16 %v2291, %v2290
        %v2400 = vpack.c.b16 %v2293, %v2292
        %v2401 = vpack.c.b16 %v2295, %v2294
        %v2402 = vpack.c.b16 %v2297, %v2296
        %v2403 = vpack.c.b16 %v2299, %v2298
        %v2404 = vpack.c.b16 %v2301, %v2300
        %v2405 = vpack.c.b16 %v2303, %v2302
        %v2406 = vpack.c.b16 %v2305, %v2304
        %v2407 = vpack.c.b16 %v2307, %v2306
        %v2408 = vpack.c.b16 %v2309, %v2308
        %v2409 = vpack.c.b16 %v2311, %v2310
        %v2410 = vpack.c.b16 %v2313, %v2312
        %v2411 = vpack.c.b16 %v2315, %v2314
        %v2412 = vpack.c.b16 %v2317, %v2316
        %v2413 = vpack.c.b16 %v2319, %v2318
        %v2414 = vpack.c.b16 %v2321, %v2320
        %v2415 = vpack.c.b16 %v2323, %v2322
        %v2416 = vpack.c.b16 %v2325, %v2324
        %v2417 = vpack.c.b16 %v2327, %v2326
        %v2418 = vpack.c.b16 %v2329, %v2328
        %v2419 = vpack.c.b16 %v2331, %v2330
        %v2420 = vpack.c.b16 %v2333, %v2332
        %v2421 = vpack.c.b16 %v2335, %v2334
        %v2422 = vpack.c.b16 %v2337, %v2336
        %v2423 = vpack.c.b16 %v2339, %v2338
        %v2424 = vpack.c.b16 %v2341, %v2340
        %v2425 = vpack.c.b16 %v2343, %v2342
        %v2426 = vpack.c.b16 %v2345, %v2344
        %v2427 = vpack.c.b16 %v2347, %v2346
        %v2428 = vpack.c.b16 %v2349, %v2348
        %v2429 = vpack.c.b16 %v2351, %v2350
        %v2430 = vpack.c.b16 %v2353, %v2352
        %v2431 = vpack.c.b16 %v2355, %v2354
        %v2432 = vpack.c.b16 %v2357, %v2356
        %v2433 = vpack.c.b16 %v2359, %v2358
        %v2434 = vpack.c.b16 %v2361, %v2360
        %v2435 = vpack.c.b16 %v2363, %v2362
        %2508 = vmatpush.bf16.msra.mxu0 %v2371
        %2509 = vmatpush.bf16.msra.mxu0 %v2370
        %2510 = vmatpush.bf16.msra.mxu0 %v2369
        %2511 = vmatpush.bf16.msra.mxu0 %v2368
        %2512 = vmatpush.bf16.msra.mxu0 %v2367
        %2513 = vmatpush.bf16.msra.mxu0 %v2366
        %2514 = vmatpush.bf16.msra.mxu0 %v2365
        %2515 = vmatpush.bf16.msra.mxu0 %v2364
        %2516 = vmatmul.bf16.gmra.mxu0 %v1728
        %v2517 = vpop.f32.mrf.mxu0
        %v2518 = vadd.f32 %v2074, %v2517
        %v2519 = vpop.f32.mrf.mxu0
        %v2520 = vadd.f32 %v2074, %v2519
        %2521 = vmatmul.bf16.gmra.mxu0 %v1729
        %v2522 = vpop.f32.mrf.mxu0
        %v2523 = vadd.f32 %v2074, %v2522
        %v2524 = vpop.f32.mrf.mxu0
        %v2525 = vadd.f32 %v2074, %v2524
        %2526 = vmatmul.bf16.gmra.mxu0 %v1730
        %v2527 = vpop.f32.mrf.mxu0
        %v2528 = vadd.f32 %v2074, %v2527
        %v2529 = vpop.f32.mrf.mxu0
        %v2530 = vadd.f32 %v2074, %v2529
        %2531 = vmatmul.bf16.gmra.mxu0 %v1731
        %v2532 = vpop.f32.mrf.mxu0
        %v2533 = vadd.f32 %v2074, %v2532
        %v2534 = vpop.f32.mrf.mxu0
        %v2535 = vadd.f32 %v2074, %v2534
        %2536 = vdwg.mxu0
        %2537 = vmatpush.bf16.msra.mxu0 %v2379
        %2538 = vmatpush.bf16.msra.mxu0 %v2378
        %2539 = vmatpush.bf16.msra.mxu0 %v2377
        %2540 = vmatpush.bf16.msra.mxu0 %v2376
        %2541 = vmatpush.bf16.msra.mxu0 %v2375
        %2542 = vmatpush.bf16.msra.mxu0 %v2374
        %2543 = vmatpush.bf16.msra.mxu0 %v2373
        %2544 = vmatpush.bf16.msra.mxu0 %v2372
        %2545 = vmatmul.bf16.gmra.mxu0 %v1752
        %v2546 = vpop.f32.mrf.mxu0
        %v2547 = vadd.f32 %v2518, %v2546
        %v2548 = vpop.f32.mrf.mxu0
        %v2549 = vadd.f32 %v2520, %v2548
        %2550 = vmatmul.bf16.gmra.mxu0 %v1753
        %v2551 = vpop.f32.mrf.mxu0
        %v2552 = vadd.f32 %v2523, %v2551
        %v2553 = vpop.f32.mrf.mxu0
        %v2554 = vadd.f32 %v2525, %v2553
        %2555 = vmatmul.bf16.gmra.mxu0 %v1754
        %v2556 = vpop.f32.mrf.mxu0
        %v2557 = vadd.f32 %v2528, %v2556
        %v2558 = vpop.f32.mrf.mxu0
        %v2559 = vadd.f32 %v2530, %v2558
        %2560 = vmatmul.bf16.gmra.mxu0 %v1755
        %v2561 = vpop.f32.mrf.mxu0
        %v2562 = vadd.f32 %v2533, %v2561
        %v2563 = vpop.f32.mrf.mxu0
        %v2564 = vadd.f32 %v2535, %v2563
        %2565 = vdwg.mxu0
        %2566 = vmatpush.bf16.msra.mxu0 %v2387
        %2567 = vmatpush.bf16.msra.mxu0 %v2386
        %2568 = vmatpush.bf16.msra.mxu0 %v2385
        %2569 = vmatpush.bf16.msra.mxu0 %v2384
        %2570 = vmatpush.bf16.msra.mxu0 %v2383
        %2571 = vmatpush.bf16.msra.mxu0 %v2382
        %2572 = vmatpush.bf16.msra.mxu0 %v2381
        %2573 = vmatpush.bf16.msra.mxu0 %v2380
        %2574 = vmatmul.bf16.gmra.mxu0 %v1776
        %v2575 = vpop.f32.mrf.mxu0
        %v2576 = vadd.f32 %v2547, %v2575
        %v2577 = vpop.f32.mrf.mxu0
        %v2578 = vadd.f32 %v2549, %v2577
        %2579 = vmatmul.bf16.gmra.mxu0 %v1777
        %v2580 = vpop.f32.mrf.mxu0
        %v2581 = vadd.f32 %v2552, %v2580
        %v2582 = vpop.f32.mrf.mxu0
        %v2583 = vadd.f32 %v2554, %v2582
        %2584 = vmatmul.bf16.gmra.mxu0 %v1778
        %v2585 = vpop.f32.mrf.mxu0
        %v2586 = vadd.f32 %v2557, %v2585
        %v2587 = vpop.f32.mrf.mxu0
        %v2588 = vadd.f32 %v2559, %v2587
        %2589 = vmatmul.bf16.gmra.mxu0 %v1779
        %v2590 = vpop.f32.mrf.mxu0
        %v2591 = vadd.f32 %v2562, %v2590
        %v2592 = vpop.f32.mrf.mxu0
        %v2593 = vadd.f32 %v2564, %v2592
        %2594 = vdwg.mxu0
        %2595 = vmatpush.bf16.msra.mxu0 %v2395
        %2596 = vmatpush.bf16.msra.mxu0 %v2394
        %2597 = vmatpush.bf16.msra.mxu0 %v2393
        %2598 = vmatpush.bf16.msra.mxu0 %v2392
        %2599 = vmatpush.bf16.msra.mxu0 %v2391
        %2600 = vmatpush.bf16.msra.mxu0 %v2390
        %2601 = vmatpush.bf16.msra.mxu0 %v2389
        %2602 = vmatpush.bf16.msra.mxu0 %v2388
        %2603 = vmatmul.bf16.gmra.mxu0 %v1800
        %v2604 = vpop.f32.mrf.mxu0
        %v2605 = vadd.f32 %v2576, %v2604
        %v2606 = vpop.f32.mrf.mxu0
        %v2607 = vadd.f32 %v2578, %v2606
        %2608 = vmatmul.bf16.gmra.mxu0 %v1801
        %v2609 = vpop.f32.mrf.mxu0
        %v2610 = vadd.f32 %v2581, %v2609
        %v2611 = vpop.f32.mrf.mxu0
        %v2612 = vadd.f32 %v2583, %v2611
        %2613 = vmatmul.bf16.gmra.mxu0 %v1802
        %v2614 = vpop.f32.mrf.mxu0
        %v2615 = vadd.f32 %v2586, %v2614
        %v2616 = vpop.f32.mrf.mxu0
        %v2617 = vadd.f32 %v2588, %v2616
        %2618 = vmatmul.bf16.gmra.mxu0 %v1803
        %v2619 = vpop.f32.mrf.mxu0
        %v2620 = vadd.f32 %v2591, %v2619
        %v2621 = vpop.f32.mrf.mxu0
        %v2622 = vadd.f32 %v2593, %v2621
        %2623 = vdwg.mxu0
        %2624 = vmatpush.bf16.msra.mxu0 %v2403
        %2625 = vmatpush.bf16.msra.mxu0 %v2402
        %2626 = vmatpush.bf16.msra.mxu0 %v2401
        %2627 = vmatpush.bf16.msra.mxu0 %v2400
        %2628 = vmatpush.bf16.msra.mxu0 %v2399
        %2629 = vmatpush.bf16.msra.mxu0 %v2398
        %2630 = vmatpush.bf16.msra.mxu0 %v2397
        %2631 = vmatpush.bf16.msra.mxu0 %v2396
        %2632 = vmatmul.bf16.gmra.mxu0 %v1824
        %v2633 = vpop.f32.mrf.mxu0
        %v2634 = vadd.f32 %v2605, %v2633
        %v2635 = vpop.f32.mrf.mxu0
        %v2636 = vadd.f32 %v2607, %v2635
        %2637 = vmatmul.bf16.gmra.mxu0 %v1825
        %v2638 = vpop.f32.mrf.mxu0
        %v2639 = vadd.f32 %v2610, %v2638
        %v2640 = vpop.f32.mrf.mxu0
        %v2641 = vadd.f32 %v2612, %v2640
        %2642 = vmatmul.bf16.gmra.mxu0 %v1826
        %v2643 = vpop.f32.mrf.mxu0
        %v2644 = vadd.f32 %v2615, %v2643
        %v2645 = vpop.f32.mrf.mxu0
        %v2646 = vadd.f32 %v2617, %v2645
        %2647 = vmatmul.bf16.gmra.mxu0 %v1827
        %v2648 = vpop.f32.mrf.mxu0
        %v2649 = vadd.f32 %v2620, %v2648
        %v2650 = vpop.f32.mrf.mxu0
        %v2651 = vadd.f32 %v2622, %v2650
        %2652 = vdwg.mxu0
        %2653 = vmatpush.bf16.msra.mxu0 %v2411
        %2654 = vmatpush.bf16.msra.mxu0 %v2410
        %2655 = vmatpush.bf16.msra.mxu0 %v2409
        %2656 = vmatpush.bf16.msra.mxu0 %v2408
        %2657 = vmatpush.bf16.msra.mxu0 %v2407
        %2658 = vmatpush.bf16.msra.mxu0 %v2406
        %2659 = vmatpush.bf16.msra.mxu0 %v2405
        %2660 = vmatpush.bf16.msra.mxu0 %v2404
        %2661 = vmatmul.bf16.gmra.mxu0 %v1848
        %v2662 = vpop.f32.mrf.mxu0
        %v2663 = vadd.f32 %v2634, %v2662
        %v2664 = vpop.f32.mrf.mxu0
        %v2665 = vadd.f32 %v2636, %v2664
        %2666 = vmatmul.bf16.gmra.mxu0 %v1849
        %v2667 = vpop.f32.mrf.mxu0
        %v2668 = vadd.f32 %v2639, %v2667
        %v2669 = vpop.f32.mrf.mxu0
        %v2670 = vadd.f32 %v2641, %v2669
        %2671 = vmatmul.bf16.gmra.mxu0 %v1850
        %v2672 = vpop.f32.mrf.mxu0
        %v2673 = vadd.f32 %v2644, %v2672
        %v2674 = vpop.f32.mrf.mxu0
        %v2675 = vadd.f32 %v2646, %v2674
        %2676 = vmatmul.bf16.gmra.mxu0 %v1851
        %v2677 = vpop.f32.mrf.mxu0
        %v2678 = vadd.f32 %v2649, %v2677
        %v2679 = vpop.f32.mrf.mxu0
        %v2680 = vadd.f32 %v2651, %v2679
        %2681 = vdwg.mxu0
        %2682 = vmatpush.bf16.msra.mxu0 %v2419
        %2683 = vmatpush.bf16.msra.mxu0 %v2418
        %2684 = vmatpush.bf16.msra.mxu0 %v2417
        %2685 = vmatpush.bf16.msra.mxu0 %v2416
        %2686 = vmatpush.bf16.msra.mxu0 %v2415
        %2687 = vmatpush.bf16.msra.mxu0 %v2414
        %2688 = vmatpush.bf16.msra.mxu0 %v2413
        %2689 = vmatpush.bf16.msra.mxu0 %v2412
        %2690 = vmatmul.bf16.gmra.mxu0 %v1872
        %v2691 = vpop.f32.mrf.mxu0
        %v2692 = vadd.f32 %v2663, %v2691
        %v2693 = vpop.f32.mrf.mxu0
        %v2694 = vadd.f32 %v2665, %v2693
        %2695 = vmatmul.bf16.gmra.mxu0 %v1873
        %v2696 = vpop.f32.mrf.mxu0
        %v2697 = vadd.f32 %v2668, %v2696
        %v2698 = vpop.f32.mrf.mxu0
        %v2699 = vadd.f32 %v2670, %v2698
        %2700 = vmatmul.bf16.gmra.mxu0 %v1874
        %v2701 = vpop.f32.mrf.mxu0
        %v2702 = vadd.f32 %v2673, %v2701
        %v2703 = vpop.f32.mrf.mxu0
        %v2704 = vadd.f32 %v2675, %v2703
        %2705 = vmatmul.bf16.gmra.mxu0 %v1875
        %v2706 = vpop.f32.mrf.mxu0
        %v2707 = vadd.f32 %v2678, %v2706
        %v2708 = vpop.f32.mrf.mxu0
        %v2709 = vadd.f32 %v2680, %v2708
        %2710 = vdwg.mxu0
        %2711 = vmatpush.bf16.msra.mxu0 %v2427
        %2712 = vmatpush.bf16.msra.mxu0 %v2426
        %2713 = vmatpush.bf16.msra.mxu0 %v2425
        %2714 = vmatpush.bf16.msra.mxu0 %v2424
        %2715 = vmatpush.bf16.msra.mxu0 %v2423
        %2716 = vmatpush.bf16.msra.mxu0 %v2422
        %2717 = vmatpush.bf16.msra.mxu0 %v2421
        %2718 = vmatpush.bf16.msra.mxu0 %v2420
        %2719 = vmatmul.bf16.gmra.mxu0 %v1896
        %v2720 = vpop.f32.mrf.mxu0
        %v2721 = vadd.f32 %v2692, %v2720
        %v2722 = vpop.f32.mrf.mxu0
        %v2723 = vadd.f32 %v2694, %v2722
        %2724 = vmatmul.bf16.gmra.mxu0 %v1897
        %v2725 = vpop.f32.mrf.mxu0
        %v2726 = vadd.f32 %v2697, %v2725
        %v2727 = vpop.f32.mrf.mxu0
        %v2728 = vadd.f32 %v2699, %v2727
        %2729 = vmatmul.bf16.gmra.mxu0 %v1898
        %v2730 = vpop.f32.mrf.mxu0
        %v2731 = vadd.f32 %v2702, %v2730
        %v2732 = vpop.f32.mrf.mxu0
        %v2733 = vadd.f32 %v2704, %v2732
        %2734 = vmatmul.bf16.gmra.mxu0 %v1899
        %v2735 = vpop.f32.mrf.mxu0
        %v2736 = vadd.f32 %v2707, %v2735
        %v2737 = vpop.f32.mrf.mxu0
        %v2738 = vadd.f32 %v2709, %v2737
        %2739 = vdwg.mxu0
        %2740 = vmatpush.bf16.msra.mxu0 %v2435
        %2741 = vmatpush.bf16.msra.mxu0 %v2434
        %2742 = vmatpush.bf16.msra.mxu0 %v2433
        %2743 = vmatpush.bf16.msra.mxu0 %v2432
        %2744 = vmatpush.bf16.msra.mxu0 %v2431
        %2745 = vmatpush.bf16.msra.mxu0 %v2430
        %2746 = vmatpush.bf16.msra.mxu0 %v2429
        %2747 = vmatpush.bf16.msra.mxu0 %v2428
        %2748 = vmatmul.bf16.gmra.mxu0 %v1920
        %v2749 = vpop.f32.mrf.mxu0
        %v2750 = vadd.f32 %v2721, %v2749
        %v2751 = vpop.f32.mrf.mxu0
        %v2752 = vadd.f32 %v2723, %v2751
        %2753 = vmatmul.bf16.gmra.mxu0 %v1921
        %v2754 = vpop.f32.mrf.mxu0
        %v2755 = vadd.f32 %v2726, %v2754
        %v2756 = vpop.f32.mrf.mxu0
        %v2757 = vadd.f32 %v2728, %v2756
        %2758 = vmatmul.bf16.gmra.mxu0 %v1922
        %v2759 = vpop.f32.mrf.mxu0
        %v2760 = vadd.f32 %v2731, %v2759
        %v2761 = vpop.f32.mrf.mxu0
        %v2762 = vadd.f32 %v2733, %v2761
        %2763 = vmatmul.bf16.gmra.mxu0 %v1923
        %v2764 = vpop.f32.mrf.mxu0
        %v2765 = vadd.f32 %v2736, %v2764
        %v2766 = vpop.f32.mrf.mxu0
        %v2767 = vadd.f32 %v2738, %v2766
        %2768 = vdwg.mxu0
        %vm2769 = vcmp.ge.f32.partialorder %v2750, 0.0
        %vm2770 = vcmp.ge.f32.partialorder %v2752, 0.0
        %vm2771 = vcmp.ge.f32.partialorder %v2755, 0.0
        %vm2772 = vcmp.ge.f32.partialorder %v2757, 0.0
        %vm2773 = vcmp.ge.f32.partialorder %v2760, 0.0
        %vm2774 = vcmp.ge.f32.partialorder %v2762, 0.0
        %vm2775 = vcmp.ge.f32.partialorder %v2765, 0.0
        %vm2776 = vcmp.ge.f32.partialorder %v2767, 0.0
        %v2777 = vmul.f32 %v2750, 0.2
        %v2778 = vmul.f32 %v2752, 0.2
        %v2779 = vmul.f32 %v2755, 0.2
        %v2780 = vmul.f32 %v2757, 0.2
        %v2781 = vmul.f32 %v2760, 0.2
        %v2782 = vmul.f32 %v2762, 0.2
        %v2783 = vmul.f32 %v2765, 0.2
        %v2784 = vmul.f32 %v2767, 0.2
        %v2785 = vsel %vm2769, %v2750, %v2777
        %v2786 = vsel %vm2770, %v2752, %v2778
        %v2787 = vsel %vm2771, %v2755, %v2779
        %v2788 = vsel %vm2772, %v2757, %v2780
        %v2789 = vsel %vm2773, %v2760, %v2781
        %v2790 = vsel %vm2774, %v2762, %v2782
        %v2791 = vsel %vm2775, %v2765, %v2783
        %v2792 = vsel %vm2776, %v2767, %v2784
        %v2793 = vpack.c.bf16 %v2786, %v2785
        %v2794 = vpack.c.bf16 %v2788, %v2787
        %v2795 = vpack.c.bf16 %v2790, %v2789
        %v2796 = vpack.c.bf16 %v2792, %v2791
        %v2797 = vld [vmem:[#allocation8] sm:$0xf]
        %v2798 = vld [vmem:[#allocation8 + $0x4] sm:$0xf]
        %v2801 = vunpack.c.l.b16 %v2797
        %v2802 = vunpack.c.l.b16 %v2798
        %v2803 = vpack.c.b16 %v2802, %v2801
        %vm2804 = vcmask 523264
        %v2806 = vsel %vm2804, %v2803, 0
        %2808 = vmatpush.bf16.msra.mxu0 0
        %2809 = vmatpush.bf16.msra.mxu0 0
        %2810 = vmatpush.bf16.msra.mxu0 0
        %2811 = vmatpush.bf16.msra.mxu0 0
        %2812 = vmatpush.bf16.msra.mxu0 %v2796
        %2813 = vmatpush.bf16.msra.mxu0 %v2795
        %2814 = vmatpush.bf16.msra.mxu0 %v2794
        %2815 = vmatpush.bf16.msra.mxu0 %v2793
        %2816 = vmatmul.bf16.gmra.mxu0 %v2806
        %v2817 = vpop.f32.mrf.mxu0
        %v2818 = vadd.f32 0.0, %v2817
        %v2819 = vpop.f32.mrf.mxu0
        %v2820 = vadd.f32 0.0, %v2819
        %2821 = vdwg.mxu0
        %v2822 = vpack.c.bf16 %v2818, %v2818
        %v2823 = vpack.c.bf16 %v2820, %v2820
        %s2824 = scalar_lea.vmem [#allocation8], 8
        %v2825 = vld [vmem:[%s2824] sm:$0xf]
        %v2826 = vld [vmem:[%s2824 + $0x4] sm:$0xf]
        %v2829 = vunpack.c.l.b16 %v2825
        %v2830 = vunpack.c.l.b16 %v2826
        %v2831 = vpack.c.b16 %v2830, %v2829
        %v2833 = vsel %vm2804, %v2831, 0
        %2835 = vmatpush.bf16.msra.mxu0 0
        %2836 = vmatpush.bf16.msra.mxu0 0
        %2837 = vmatpush.bf16.msra.mxu0 0
        %2838 = vmatpush.bf16.msra.mxu0 0
        %2839 = vmatpush.bf16.msra.mxu0 %v2796
        %2840 = vmatpush.bf16.msra.mxu0 %v2795
        %2841 = vmatpush.bf16.msra.mxu0 %v2794
        %2842 = vmatpush.bf16.msra.mxu0 %v2793
        %2843 = vmatmul.bf16.gmra.mxu0 %v2833
        %v2844 = vpop.f32.mrf.mxu0
        %v2845 = vadd.f32 0.0, %v2844
        %v2846 = vpop.f32.mrf.mxu0
        %v2847 = vadd.f32 0.0, %v2846
        %2848 = vdwg.mxu0
        %v2849 = vpack.c.bf16 %v2845, %v2845
        %v2850 = vpack.c.bf16 %v2847, %v2847
        %s2851 = scalar_lea.vmem [#allocation8], 16
        %v2852 = vld [vmem:[%s2851] sm:$0xf]
        %v2853 = vld [vmem:[%s2851 + $0x4] sm:$0xf]
        %v2856 = vunpack.c.l.b16 %v2852
        %v2857 = vunpack.c.l.b16 %v2853
        %v2858 = vpack.c.b16 %v2857, %v2856
        %v2860 = vsel %vm2804, %v2858, 0
        %2862 = vmatpush.bf16.msra.mxu0 0
        %2863 = vmatpush.bf16.msra.mxu0 0
        %2864 = vmatpush.bf16.msra.mxu0 0
        %2865 = vmatpush.bf16.msra.mxu0 0
        %2866 = vmatpush.bf16.msra.mxu0 %v2796
        %2867 = vmatpush.bf16.msra.mxu0 %v2795
        %2868 = vmatpush.bf16.msra.mxu0 %v2794
        %2869 = vmatpush.bf16.msra.mxu0 %v2793
        %2870 = vmatmul.bf16.gmra.mxu0 %v2860
        %v2871 = vpop.f32.mrf.mxu0
        %v2872 = vadd.f32 0.0, %v2871
        %v2873 = vpop.f32.mrf.mxu0
        %v2874 = vadd.f32 0.0, %v2873
        %2875 = vdwg.mxu0
        %v2876 = vpack.c.bf16 %v2872, %v2872
        %v2877 = vpack.c.bf16 %v2874, %v2874
        %s2878 = scalar_lea.vmem [#allocation8], 24
        %v2879 = vld [vmem:[%s2878] sm:$0xf]
        %v2880 = vld [vmem:[%s2878 + $0x4] sm:$0xf]
        %v2883 = vunpack.c.l.b16 %v2879
        %v2884 = vunpack.c.l.b16 %v2880
        %v2885 = vpack.c.b16 %v2884, %v2883
        %v2887 = vsel %vm2804, %v2885, 0
        %2889 = vmatpush.bf16.msra.mxu0 0
        %2890 = vmatpush.bf16.msra.mxu0 0
        %2891 = vmatpush.bf16.msra.mxu0 0
        %2892 = vmatpush.bf16.msra.mxu0 0
        %2893 = vmatpush.bf16.msra.mxu0 %v2796
        %2894 = vmatpush.bf16.msra.mxu0 %v2795
        %2895 = vmatpush.bf16.msra.mxu0 %v2794
        %2896 = vmatpush.bf16.msra.mxu0 %v2793
        %2897 = vmatmul.bf16.gmra.mxu0 %v2887
        %v2898 = vpop.f32.mrf.mxu0
        %v2899 = vadd.f32 0.0, %v2898
        %v2900 = vpop.f32.mrf.mxu0
        %v2901 = vadd.f32 0.0, %v2900
        %2902 = vdwg.mxu0
        %v2903 = vpack.c.bf16 %v2899, %v2899
        %v2904 = vpack.c.bf16 %v2901, %v2901
        %s2905 = scalar_lea.vmem [#allocation8], 32
        %v2906 = vld [vmem:[%s2905] sm:$0xf]
        %v2907 = vld [vmem:[%s2905 + $0x4] sm:$0xf]
        %v2910 = vunpack.c.l.b16 %v2906
        %v2911 = vunpack.c.l.b16 %v2907
        %v2912 = vpack.c.b16 %v2911, %v2910
        %v2914 = vsel %vm2804, %v2912, 0
        %2916 = vmatpush.bf16.msra.mxu0 0
        %2917 = vmatpush.bf16.msra.mxu0 0
        %2918 = vmatpush.bf16.msra.mxu0 0
        %2919 = vmatpush.bf16.msra.mxu0 0
        %2920 = vmatpush.bf16.msra.mxu0 %v2796
        %2921 = vmatpush.bf16.msra.mxu0 %v2795
        %2922 = vmatpush.bf16.msra.mxu0 %v2794
        %2923 = vmatpush.bf16.msra.mxu0 %v2793
        %2924 = vmatmul.bf16.gmra.mxu0 %v2914
        %v2925 = vpop.f32.mrf.mxu0
        %v2926 = vadd.f32 0.0, %v2925
        %v2927 = vpop.f32.mrf.mxu0
        %v2928 = vadd.f32 0.0, %v2927
        %2929 = vdwg.mxu0
        %v2930 = vpack.c.bf16 %v2926, %v2926
        %v2931 = vpack.c.bf16 %v2928, %v2928
        %s2932 = scalar_lea.vmem [#allocation8], 40
        %v2933 = vld [vmem:[%s2932] sm:$0xf]
        %v2934 = vld [vmem:[%s2932 + $0x4] sm:$0xf]
        %v2937 = vunpack.c.l.b16 %v2933
        %v2938 = vunpack.c.l.b16 %v2934
        %v2939 = vpack.c.b16 %v2938, %v2937
        %v2941 = vsel %vm2804, %v2939, 0
        %2943 = vmatpush.bf16.msra.mxu0 0
        %2944 = vmatpush.bf16.msra.mxu0 0
        %2945 = vmatpush.bf16.msra.mxu0 0
        %2946 = vmatpush.bf16.msra.mxu0 0
        %2947 = vmatpush.bf16.msra.mxu0 %v2796
        %2948 = vmatpush.bf16.msra.mxu0 %v2795
        %2949 = vmatpush.bf16.msra.mxu0 %v2794
        %2950 = vmatpush.bf16.msra.mxu0 %v2793
        %2951 = vmatmul.bf16.gmra.mxu0 %v2941
        %v2952 = vpop.f32.mrf.mxu0
        %v2953 = vadd.f32 0.0, %v2952
        %v2954 = vpop.f32.mrf.mxu0
        %v2955 = vadd.f32 0.0, %v2954
        %2956 = vdwg.mxu0
        %v2957 = vpack.c.bf16 %v2953, %v2953
        %v2958 = vpack.c.bf16 %v2955, %v2955
        %s2959 = scalar_lea.vmem [#allocation8], 48
        %v2960 = vld [vmem:[%s2959] sm:$0xf]
        %v2961 = vld [vmem:[%s2959 + $0x4] sm:$0xf]
        %v2964 = vunpack.c.l.b16 %v2960
        %v2965 = vunpack.c.l.b16 %v2961
        %v2966 = vpack.c.b16 %v2965, %v2964
        %v2968 = vsel %vm2804, %v2966, 0
        %2970 = vmatpush.bf16.msra.mxu0 0
        %2971 = vmatpush.bf16.msra.mxu0 0
        %2972 = vmatpush.bf16.msra.mxu0 0
        %2973 = vmatpush.bf16.msra.mxu0 0
        %2974 = vmatpush.bf16.msra.mxu0 %v2796
        %2975 = vmatpush.bf16.msra.mxu0 %v2795
        %2976 = vmatpush.bf16.msra.mxu0 %v2794
        %2977 = vmatpush.bf16.msra.mxu0 %v2793
        %2978 = vmatmul.bf16.gmra.mxu0 %v2968
        %v2979 = vpop.f32.mrf.mxu0
        %v2980 = vadd.f32 0.0, %v2979
        %v2981 = vpop.f32.mrf.mxu0
        %v2982 = vadd.f32 0.0, %v2981
        %2983 = vdwg.mxu0
        %v2984 = vpack.c.bf16 %v2980, %v2980
        %v2985 = vpack.c.bf16 %v2982, %v2982
        %s2986 = scalar_lea.vmem [#allocation8], 56
        %v2987 = vld [vmem:[%s2986] sm:$0xf]
        %v2988 = vld [vmem:[%s2986 + $0x4] sm:$0xf]
        %v2991 = vunpack.c.l.b16 %v2987
        %v2992 = vunpack.c.l.b16 %v2988
        %v2993 = vpack.c.b16 %v2992, %v2991
        %v2995 = vsel %vm2804, %v2993, 0
        %2997 = vmatpush.bf16.msra.mxu0 0
        %2998 = vmatpush.bf16.msra.mxu0 0
        %2999 = vmatpush.bf16.msra.mxu0 0
        %3000 = vmatpush.bf16.msra.mxu0 0
        %3001 = vmatpush.bf16.msra.mxu0 %v2796
        %3002 = vmatpush.bf16.msra.mxu0 %v2795
        %3003 = vmatpush.bf16.msra.mxu0 %v2794
        %3004 = vmatpush.bf16.msra.mxu0 %v2793
        %3005 = vmatmul.bf16.gmra.mxu0 %v2995
        %v3006 = vpop.f32.mrf.mxu0
        %v3007 = vadd.f32 0.0, %v3006
        %v3008 = vpop.f32.mrf.mxu0
        %v3009 = vadd.f32 0.0, %v3008
        %3010 = vdwg.mxu0
        %v3011 = vpack.c.bf16 %v3007, %v3007
        %v3012 = vpack.c.bf16 %v3009, %v3009
        %s3013 = scalar_lea.vmem [#allocation8], 64
        %v3014 = vld [vmem:[%s3013] sm:$0xf]
        %v3015 = vld [vmem:[%s3013 + $0x4] sm:$0xf]
        %v3018 = vunpack.c.l.b16 %v3014
        %v3019 = vunpack.c.l.b16 %v3015
        %v3020 = vpack.c.b16 %v3019, %v3018
        %v3022 = vsel %vm2804, %v3020, 0
        %3024 = vmatpush.bf16.msra.mxu0 0
        %3025 = vmatpush.bf16.msra.mxu0 0
        %3026 = vmatpush.bf16.msra.mxu0 0
        %3027 = vmatpush.bf16.msra.mxu0 0
        %3028 = vmatpush.bf16.msra.mxu0 %v2796
        %3029 = vmatpush.bf16.msra.mxu0 %v2795
        %3030 = vmatpush.bf16.msra.mxu0 %v2794
        %3031 = vmatpush.bf16.msra.mxu0 %v2793
        %3032 = vmatmul.bf16.gmra.mxu0 %v3022
        %v3033 = vpop.f32.mrf.mxu0
        %v3034 = vadd.f32 0.0, %v3033
        %v3035 = vpop.f32.mrf.mxu0
        %v3036 = vadd.f32 0.0, %v3035
        %3037 = vdwg.mxu0
        %v3038 = vpack.c.bf16 %v3034, %v3034
        %v3039 = vpack.c.bf16 %v3036, %v3036
        %v3042 = vunpack.c.l.b16 %v2822
        %v3043 = vunpack.c.l.b16 %v2823
        %v3044 = vpack.c.b16 %v3043, %v3042
        %v3048 = vunpack.c.l.b16 %v2849
        %v3049 = vunpack.c.l.b16 %v2850
        %v3050 = vpack.c.b16 %v3049, %v3048
        %v3054 = vunpack.c.l.b16 %v2876
        %v3055 = vunpack.c.l.b16 %v2877
        %v3056 = vpack.c.b16 %v3055, %v3054
        %v3060 = vunpack.c.l.b16 %v2903
        %v3061 = vunpack.c.l.b16 %v2904
        %v3062 = vpack.c.b16 %v3061, %v3060
        %v3066 = vunpack.c.l.b16 %v2930
        %v3067 = vunpack.c.l.b16 %v2931
        %v3068 = vpack.c.b16 %v3067, %v3066
        %v3072 = vunpack.c.l.b16 %v2957
        %v3073 = vunpack.c.l.b16 %v2958
        %v3074 = vpack.c.b16 %v3073, %v3072
        %v3078 = vunpack.c.l.b16 %v2984
        %v3079 = vunpack.c.l.b16 %v2985
        %v3080 = vpack.c.b16 %v3079, %v3078
        %v3084 = vunpack.c.l.b16 %v3011
        %v3085 = vunpack.c.l.b16 %v3012
        %v3086 = vpack.c.b16 %v3085, %v3084
        %v3090 = vunpack.c.l.b16 %v3038
        %v3091 = vunpack.c.l.b16 %v3039
        %v3092 = vpack.c.b16 %v3091, %v3090
        %v3094 = vld [vmem:[#allocation10] sm:$0xf]
        %v3095 = vld [vmem:[#allocation10 + $0x4] sm:$0xf]
        %v3096 = vld [vmem:[#allocation10 + $0x8] sm:$0xf]
        %v3097 = vld [vmem:[#allocation10 + $0xc] sm:$0xf]
        %v3098 = vld [vmem:[#allocation10 + $0x10] sm:$0xf]
        %v3099 = vld [vmem:[#allocation10 + $0x14] sm:$0xf]
        %v3100 = vld [vmem:[#allocation10 + $0x18] sm:$0xf]
        %v3101 = vld [vmem:[#allocation10 + $0x1c] sm:$0xf]
        %v3102 = vld [vmem:[#allocation10 + $0x20] sm:$0xf]
        %v3103 = vld [vmem:[#allocation10 + $0x24] sm:$0xf]
        %v3104 = vld [vmem:[#allocation10 + $0x28] sm:$0xf]
        %v3105 = vld [vmem:[#allocation10 + $0x2c] sm:$0xf]
        %v3106 = vld [vmem:[#allocation10 + $0x30] sm:$0xf]
        %v3107 = vld [vmem:[#allocation10 + $0x34] sm:$0xf]
        %v3108 = vld [vmem:[#allocation10 + $0x38] sm:$0xf]
        %v3109 = vld [vmem:[#allocation10 + $0x3c] sm:$0xf]
        %v3110 = vld [vmem:[#allocation10 + $0x40] sm:$0xf]
        %v3111 = vld [vmem:[#allocation10 + $0x44] sm:$0xf]
        %v3112 = vld [vmem:[#allocation10 + $0x48] sm:$0xf]
        %v3113 = vld [vmem:[#allocation10 + $0x4c] sm:$0xf]
        %v3114 = vld [vmem:[#allocation10 + $0x50] sm:$0xf]
        %v3115 = vld [vmem:[#allocation10 + $0x54] sm:$0xf]
        %v3116 = vld [vmem:[#allocation10 + $0x58] sm:$0xf]
        %v3117 = vld [vmem:[#allocation10 + $0x5c] sm:$0xf]
        %v3118 = vld [vmem:[#allocation10 + $0x60] sm:$0xf]
        %v3119 = vld [vmem:[#allocation10 + $0x64] sm:$0xf]
        %v3120 = vld [vmem:[#allocation10 + $0x68] sm:$0xf]
        %v3121 = vld [vmem:[#allocation10 + $0x6c] sm:$0xf]
        %v3122 = vld [vmem:[#allocation10 + $0x70] sm:$0xf]
        %v3123 = vld [vmem:[#allocation10 + $0x74] sm:$0xf]
        %v3124 = vld [vmem:[#allocation10 + $0x78] sm:$0xf]
        %v3125 = vld [vmem:[#allocation10 + $0x7c] sm:$0xf]
        %v3126 = vld [vmem:[#allocation10 + $0x80] sm:$0xf]
        %v3127 = vld [vmem:[#allocation10 + $0x84] sm:$0xf]
        %v3128 = vld [vmem:[#allocation10 + $0x88] sm:$0xf]
        %v3129 = vld [vmem:[#allocation10 + $0x8c] sm:$0xf]
        %v3130 = vld [vmem:[#allocation10 + $0x90] sm:$0xf]
        %v3131 = vld [vmem:[#allocation10 + $0x94] sm:$0xf]
        %v3132 = vld [vmem:[#allocation10 + $0x98] sm:$0xf]
        %v3133 = vld [vmem:[#allocation10 + $0x9c] sm:$0xf]
        %v3134 = vld [vmem:[#allocation10 + $0xa0] sm:$0xf]
        %v3135 = vld [vmem:[#allocation10 + $0xa4] sm:$0xf]
        %v3136 = vld [vmem:[#allocation10 + $0xa8] sm:$0xf]
        %v3137 = vld [vmem:[#allocation10 + $0xac] sm:$0xf]
        %v3138 = vld [vmem:[#allocation10 + $0xb0] sm:$0xf]
        %v3139 = vld [vmem:[#allocation10 + $0xb4] sm:$0xf]
        %v3140 = vld [vmem:[#allocation10 + $0xb8] sm:$0xf]
        %v3141 = vld [vmem:[#allocation10 + $0xbc] sm:$0xf]
        %v3142 = vld [vmem:[#allocation10 + $0xc0] sm:$0xf]
        %v3143 = vld [vmem:[#allocation10 + $0xc4] sm:$0xf]
        %v3144 = vld [vmem:[#allocation10 + $0xc8] sm:$0xf]
        %v3145 = vld [vmem:[#allocation10 + $0xcc] sm:$0xf]
        %v3146 = vld [vmem:[#allocation10 + $0xd0] sm:$0xf]
        %v3147 = vld [vmem:[#allocation10 + $0xd4] sm:$0xf]
        %v3148 = vld [vmem:[#allocation10 + $0xd8] sm:$0xf]
        %v3149 = vld [vmem:[#allocation10 + $0xdc] sm:$0xf]
        %v3150 = vld [vmem:[#allocation10 + $0xe0] sm:$0xf]
        %v3151 = vld [vmem:[#allocation10 + $0xe4] sm:$0xf]
        %v3152 = vld [vmem:[#allocation10 + $0xe8] sm:$0xf]
        %v3153 = vld [vmem:[#allocation10 + $0xec] sm:$0xf]
        %v3154 = vld [vmem:[#allocation10 + $0xf0] sm:$0xf]
        %v3155 = vld [vmem:[#allocation10 + $0xf4] sm:$0xf]
        %v3156 = vld [vmem:[#allocation10 + $0xf8] sm:$0xf]
        %v3157 = vld [vmem:[#allocation10 + $0xfc] sm:$0xf]
        %v3158 = vld [vmem:[#allocation10 + $0x100] sm:$0xf]
        %v3159 = vld [vmem:[#allocation10 + $0x104] sm:$0xf]
        %v3160 = vld [vmem:[#allocation10 + $0x108] sm:$0xf]
        %v3161 = vld [vmem:[#allocation10 + $0x10c] sm:$0xf]
        %v3162 = vld [vmem:[#allocation10 + $0x110] sm:$0xf]
        %v3163 = vld [vmem:[#allocation10 + $0x114] sm:$0xf]
        %v3164 = vld [vmem:[#allocation10 + $0x118] sm:$0xf]
        %v3165 = vld [vmem:[#allocation10 + $0x11c] sm:$0xf]
        %v3166 = vld [vmem:[#allocation10 + $0x120] sm:$0xf]
        %v3167 = vld [vmem:[#allocation10 + $0x124] sm:$0xf]
        %v3168 = vld [vmem:[#allocation10 + $0x128] sm:$0xf]
        %v3169 = vld [vmem:[#allocation10 + $0x12c] sm:$0xf]
        %v3170 = vld [vmem:[#allocation10 + $0x130] sm:$0xf]
        %v3171 = vld [vmem:[#allocation10 + $0x134] sm:$0xf]
        %v3172 = vld [vmem:[#allocation10 + $0x138] sm:$0xf]
        %v3173 = vld [vmem:[#allocation10 + $0x13c] sm:$0xf]
        %v3174 = vld [vmem:[#allocation10 + $0x140] sm:$0xf]
        %v3175 = vld [vmem:[#allocation10 + $0x144] sm:$0xf]
        %v3176 = vld [vmem:[#allocation10 + $0x148] sm:$0xf]
        %v3177 = vld [vmem:[#allocation10 + $0x14c] sm:$0xf]
        %v3178 = vld [vmem:[#allocation10 + $0x150] sm:$0xf]
        %v3179 = vld [vmem:[#allocation10 + $0x154] sm:$0xf]
        %v3180 = vld [vmem:[#allocation10 + $0x158] sm:$0xf]
        %v3181 = vld [vmem:[#allocation10 + $0x15c] sm:$0xf]
        %v3182 = vld [vmem:[#allocation10 + $0x160] sm:$0xf]
        %v3183 = vld [vmem:[#allocation10 + $0x164] sm:$0xf]
        %v3184 = vld [vmem:[#allocation10 + $0x168] sm:$0xf]
        %v3185 = vld [vmem:[#allocation10 + $0x16c] sm:$0xf]
        %v3186 = vld [vmem:[#allocation10 + $0x170] sm:$0xf]
        %v3187 = vld [vmem:[#allocation10 + $0x174] sm:$0xf]
        %v3188 = vld [vmem:[#allocation10 + $0x178] sm:$0xf]
        %v3189 = vld [vmem:[#allocation10 + $0x17c] sm:$0xf]
        %v3190 = vld [vmem:[#allocation10 + $0x180] sm:$0xf]
        %v3191 = vld [vmem:[#allocation10 + $0x184] sm:$0xf]
        %v3192 = vld [vmem:[#allocation10 + $0x188] sm:$0xf]
        %v3193 = vld [vmem:[#allocation10 + $0x18c] sm:$0xf]
        %v3194 = vld [vmem:[#allocation10 + $0x190] sm:$0xf]
        %v3195 = vld [vmem:[#allocation10 + $0x194] sm:$0xf]
        %v3196 = vld [vmem:[#allocation10 + $0x198] sm:$0xf]
        %v3197 = vld [vmem:[#allocation10 + $0x19c] sm:$0xf]
        %v3198 = vld [vmem:[#allocation10 + $0x1a0] sm:$0xf]
        %v3199 = vld [vmem:[#allocation10 + $0x1a4] sm:$0xf]
        %v3200 = vld [vmem:[#allocation10 + $0x1a8] sm:$0xf]
        %v3201 = vld [vmem:[#allocation10 + $0x1ac] sm:$0xf]
        %v3202 = vld [vmem:[#allocation10 + $0x1b0] sm:$0xf]
        %v3203 = vld [vmem:[#allocation10 + $0x1b4] sm:$0xf]
        %v3204 = vld [vmem:[#allocation10 + $0x1b8] sm:$0xf]
        %v3205 = vld [vmem:[#allocation10 + $0x1bc] sm:$0xf]
        %v3206 = vld [vmem:[#allocation10 + $0x1c0] sm:$0xf]
        %v3207 = vld [vmem:[#allocation10 + $0x1c4] sm:$0xf]
        %v3208 = vld [vmem:[#allocation10 + $0x1c8] sm:$0xf]
        %v3209 = vld [vmem:[#allocation10 + $0x1cc] sm:$0xf]
        %v3210 = vld [vmem:[#allocation10 + $0x1d0] sm:$0xf]
        %v3211 = vld [vmem:[#allocation10 + $0x1d4] sm:$0xf]
        %v3212 = vld [vmem:[#allocation10 + $0x1d8] sm:$0xf]
        %v3213 = vld [vmem:[#allocation10 + $0x1dc] sm:$0xf]
        %v3214 = vld [vmem:[#allocation10 + $0x1e0] sm:$0xf]
        %v3215 = vld [vmem:[#allocation10 + $0x1e4] sm:$0xf]
        %v3216 = vld [vmem:[#allocation10 + $0x1e8] sm:$0xf]
        %v3217 = vld [vmem:[#allocation10 + $0x1ec] sm:$0xf]
        %v3218 = vld [vmem:[#allocation10 + $0x1f0] sm:$0xf]
        %v3219 = vld [vmem:[#allocation10 + $0x1f4] sm:$0xf]
        %v3220 = vld [vmem:[#allocation10 + $0x1f8] sm:$0xf]
        %v3221 = vld [vmem:[#allocation10 + $0x1fc] sm:$0xf]
        %v3222 = vld [vmem:[#allocation10 + $0x200] sm:$0xf]
        %v3223 = vld [vmem:[#allocation10 + $0x204] sm:$0xf]
        %v3224 = vld [vmem:[#allocation10 + $0x208] sm:$0xf]
        %v3225 = vld [vmem:[#allocation10 + $0x20c] sm:$0xf]
        %v3226 = vld [vmem:[#allocation10 + $0x210] sm:$0xf]
        %v3227 = vld [vmem:[#allocation10 + $0x214] sm:$0xf]
        %v3228 = vld [vmem:[#allocation10 + $0x218] sm:$0xf]
        %v3229 = vld [vmem:[#allocation10 + $0x21c] sm:$0xf]
        %v3230 = vld [vmem:[#allocation10 + $0x220] sm:$0xf]
        %v3231 = vld [vmem:[#allocation10 + $0x224] sm:$0xf]
        %v3232 = vld [vmem:[#allocation10 + $0x228] sm:$0xf]
        %v3233 = vld [vmem:[#allocation10 + $0x22c] sm:$0xf]
        %v3234 = vld [vmem:[#allocation10 + $0x230] sm:$0xf]
        %v3235 = vld [vmem:[#allocation10 + $0x234] sm:$0xf]
        %v3236 = vld [vmem:[#allocation10 + $0x238] sm:$0xf]
        %v3237 = vld [vmem:[#allocation10 + $0x23c] sm:$0xf]
        %v3238 = vld [vmem:[%s6] sm:$0x1]
        %v3240 = vperm.slane %v3238, 0
        %v3386 = vunpack.c.l.b16 %v3094
        %v3387 = vunpack.c.l.b16 %v3095
        %v3388 = vunpack.c.l.b16 %v3096
        %v3389 = vunpack.c.l.b16 %v3097
        %v3390 = vunpack.c.l.b16 %v3098
        %v3391 = vunpack.c.l.b16 %v3099
        %v3392 = vunpack.c.l.b16 %v3100
        %v3393 = vunpack.c.l.b16 %v3101
        %v3394 = vunpack.c.l.b16 %v3102
        %v3395 = vunpack.c.l.b16 %v3103
        %v3396 = vunpack.c.l.b16 %v3104
        %v3397 = vunpack.c.l.b16 %v3105
        %v3398 = vunpack.c.l.b16 %v3106
        %v3399 = vunpack.c.l.b16 %v3107
        %v3400 = vunpack.c.l.b16 %v3108
        %v3401 = vunpack.c.l.b16 %v3109
        %v3402 = vunpack.c.l.b16 %v3110
        %v3403 = vunpack.c.l.b16 %v3111
        %v3404 = vunpack.c.l.b16 %v3112
        %v3405 = vunpack.c.l.b16 %v3113
        %v3406 = vunpack.c.l.b16 %v3114
        %v3407 = vunpack.c.l.b16 %v3115
        %v3408 = vunpack.c.l.b16 %v3116
        %v3409 = vunpack.c.l.b16 %v3117
        %v3410 = vunpack.c.l.b16 %v3118
        %v3411 = vunpack.c.l.b16 %v3119
        %v3412 = vunpack.c.l.b16 %v3120
        %v3413 = vunpack.c.l.b16 %v3121
        %v3414 = vunpack.c.l.b16 %v3122
        %v3415 = vunpack.c.l.b16 %v3123
        %v3416 = vunpack.c.l.b16 %v3124
        %v3417 = vunpack.c.l.b16 %v3125
        %v3418 = vunpack.c.l.b16 %v3126
        %v3419 = vunpack.c.l.b16 %v3127
        %v3420 = vunpack.c.l.b16 %v3128
        %v3421 = vunpack.c.l.b16 %v3129
        %v3422 = vunpack.c.l.b16 %v3130
        %v3423 = vunpack.c.l.b16 %v3131
        %v3424 = vunpack.c.l.b16 %v3132
        %v3425 = vunpack.c.l.b16 %v3133
        %v3426 = vunpack.c.l.b16 %v3134
        %v3427 = vunpack.c.l.b16 %v3135
        %v3428 = vunpack.c.l.b16 %v3136
        %v3429 = vunpack.c.l.b16 %v3137
        %v3430 = vunpack.c.l.b16 %v3138
        %v3431 = vunpack.c.l.b16 %v3139
        %v3432 = vunpack.c.l.b16 %v3140
        %v3433 = vunpack.c.l.b16 %v3141
        %v3434 = vunpack.c.l.b16 %v3142
        %v3435 = vunpack.c.l.b16 %v3143
        %v3436 = vunpack.c.l.b16 %v3144
        %v3437 = vunpack.c.l.b16 %v3145
        %v3438 = vunpack.c.l.b16 %v3146
        %v3439 = vunpack.c.l.b16 %v3147
        %v3440 = vunpack.c.l.b16 %v3148
        %v3441 = vunpack.c.l.b16 %v3149
        %v3442 = vunpack.c.l.b16 %v3150
        %v3443 = vunpack.c.l.b16 %v3151
        %v3444 = vunpack.c.l.b16 %v3152
        %v3445 = vunpack.c.l.b16 %v3153
        %v3446 = vunpack.c.l.b16 %v3154
        %v3447 = vunpack.c.l.b16 %v3155
        %v3448 = vunpack.c.l.b16 %v3156
        %v3449 = vunpack.c.l.b16 %v3157
        %v3450 = vunpack.c.l.b16 %v3158
        %v3451 = vunpack.c.l.b16 %v3159
        %v3452 = vunpack.c.l.b16 %v3160
        %v3453 = vunpack.c.l.b16 %v3161
        %v3454 = vunpack.c.l.b16 %v3162
        %v3455 = vunpack.c.l.b16 %v3163
        %v3456 = vunpack.c.l.b16 %v3164
        %v3457 = vunpack.c.l.b16 %v3165
        %v3458 = vunpack.c.l.b16 %v3166
        %v3459 = vunpack.c.l.b16 %v3167
        %v3460 = vunpack.c.l.b16 %v3168
        %v3461 = vunpack.c.l.b16 %v3169
        %v3462 = vunpack.c.l.b16 %v3170
        %v3463 = vunpack.c.l.b16 %v3171
        %v3464 = vunpack.c.l.b16 %v3172
        %v3465 = vunpack.c.l.b16 %v3173
        %v3466 = vunpack.c.l.b16 %v3174
        %v3467 = vunpack.c.l.b16 %v3175
        %v3468 = vunpack.c.l.b16 %v3176
        %v3469 = vunpack.c.l.b16 %v3177
        %v3470 = vunpack.c.l.b16 %v3178
        %v3471 = vunpack.c.l.b16 %v3179
        %v3472 = vunpack.c.l.b16 %v3180
        %v3473 = vunpack.c.l.b16 %v3181
        %v3474 = vunpack.c.l.b16 %v3182
        %v3475 = vunpack.c.l.b16 %v3183
        %v3476 = vunpack.c.l.b16 %v3184
        %v3477 = vunpack.c.l.b16 %v3185
        %v3478 = vunpack.c.l.b16 %v3186
        %v3479 = vunpack.c.l.b16 %v3187
        %v3480 = vunpack.c.l.b16 %v3188
        %v3481 = vunpack.c.l.b16 %v3189
        %v3482 = vunpack.c.l.b16 %v3190
        %v3483 = vunpack.c.l.b16 %v3191
        %v3484 = vunpack.c.l.b16 %v3192
        %v3485 = vunpack.c.l.b16 %v3193
        %v3486 = vunpack.c.l.b16 %v3194
        %v3487 = vunpack.c.l.b16 %v3195
        %v3488 = vunpack.c.l.b16 %v3196
        %v3489 = vunpack.c.l.b16 %v3197
        %v3490 = vunpack.c.l.b16 %v3198
        %v3491 = vunpack.c.l.b16 %v3199
        %v3492 = vunpack.c.l.b16 %v3200
        %v3493 = vunpack.c.l.b16 %v3201
        %v3494 = vunpack.c.l.b16 %v3202
        %v3495 = vunpack.c.l.b16 %v3203
        %v3496 = vunpack.c.l.b16 %v3204
        %v3497 = vunpack.c.l.b16 %v3205
        %v3498 = vunpack.c.l.b16 %v3206
        %v3499 = vunpack.c.l.b16 %v3207
        %v3500 = vunpack.c.l.b16 %v3208
        %v3501 = vunpack.c.l.b16 %v3209
        %v3502 = vunpack.c.l.b16 %v3210
        %v3503 = vunpack.c.l.b16 %v3211
        %v3504 = vunpack.c.l.b16 %v3212
        %v3505 = vunpack.c.l.b16 %v3213
        %v3506 = vunpack.c.l.b16 %v3214
        %v3507 = vunpack.c.l.b16 %v3215
        %v3508 = vunpack.c.l.b16 %v3216
        %v3509 = vunpack.c.l.b16 %v3217
        %v3510 = vunpack.c.l.b16 %v3218
        %v3511 = vunpack.c.l.b16 %v3219
        %v3512 = vunpack.c.l.b16 %v3220
        %v3513 = vunpack.c.l.b16 %v3221
        %v3514 = vunpack.c.l.b16 %v3222
        %v3515 = vunpack.c.l.b16 %v3223
        %v3516 = vunpack.c.l.b16 %v3224
        %v3517 = vunpack.c.l.b16 %v3225
        %v3518 = vunpack.c.l.b16 %v3226
        %v3519 = vunpack.c.l.b16 %v3227
        %v3520 = vunpack.c.l.b16 %v3228
        %v3521 = vunpack.c.l.b16 %v3229
        %v3522 = vunpack.c.l.b16 %v3230
        %v3523 = vunpack.c.l.b16 %v3231
        %v3524 = vunpack.c.l.b16 %v3232
        %v3525 = vunpack.c.l.b16 %v3233
        %v3526 = vunpack.c.l.b16 %v3234
        %v3527 = vunpack.c.l.b16 %v3235
        %v3528 = vunpack.c.l.b16 %v3236
        %v3529 = vunpack.c.l.b16 %v3237
        %v3530 = vpack.c.b16 %v3387, %v3386
        %v3531 = vpack.c.b16 %v3389, %v3388
        %v3532 = vpack.c.b16 %v3391, %v3390
        %v3533 = vpack.c.b16 %v3393, %v3392
        %v3534 = vpack.c.b16 %v3395, %v3394
        %v3535 = vpack.c.b16 %v3397, %v3396
        %v3536 = vpack.c.b16 %v3399, %v3398
        %v3537 = vpack.c.b16 %v3401, %v3400
        %v3538 = vpack.c.b16 %v3403, %v3402
        %v3539 = vpack.c.b16 %v3405, %v3404
        %v3540 = vpack.c.b16 %v3407, %v3406
        %v3541 = vpack.c.b16 %v3409, %v3408
        %v3542 = vpack.c.b16 %v3411, %v3410
        %v3543 = vpack.c.b16 %v3413, %v3412
        %v3544 = vpack.c.b16 %v3415, %v3414
        %v3545 = vpack.c.b16 %v3417, %v3416
        %v3546 = vpack.c.b16 %v3419, %v3418
        %v3547 = vpack.c.b16 %v3421, %v3420
        %v3548 = vpack.c.b16 %v3423, %v3422
        %v3549 = vpack.c.b16 %v3425, %v3424
        %v3550 = vpack.c.b16 %v3427, %v3426
        %v3551 = vpack.c.b16 %v3429, %v3428
        %v3552 = vpack.c.b16 %v3431, %v3430
        %v3553 = vpack.c.b16 %v3433, %v3432
        %v3554 = vpack.c.b16 %v3435, %v3434
        %v3555 = vpack.c.b16 %v3437, %v3436
        %v3556 = vpack.c.b16 %v3439, %v3438
        %v3557 = vpack.c.b16 %v3441, %v3440
        %v3558 = vpack.c.b16 %v3443, %v3442
        %v3559 = vpack.c.b16 %v3445, %v3444
        %v3560 = vpack.c.b16 %v3447, %v3446
        %v3561 = vpack.c.b16 %v3449, %v3448
        %v3562 = vpack.c.b16 %v3451, %v3450
        %v3563 = vpack.c.b16 %v3453, %v3452
        %v3564 = vpack.c.b16 %v3455, %v3454
        %v3565 = vpack.c.b16 %v3457, %v3456
        %v3566 = vpack.c.b16 %v3459, %v3458
        %v3567 = vpack.c.b16 %v3461, %v3460
        %v3568 = vpack.c.b16 %v3463, %v3462
        %v3569 = vpack.c.b16 %v3465, %v3464
        %v3570 = vpack.c.b16 %v3467, %v3466
        %v3571 = vpack.c.b16 %v3469, %v3468
        %v3572 = vpack.c.b16 %v3471, %v3470
        %v3573 = vpack.c.b16 %v3473, %v3472
        %v3574 = vpack.c.b16 %v3475, %v3474
        %v3575 = vpack.c.b16 %v3477, %v3476
        %v3576 = vpack.c.b16 %v3479, %v3478
        %v3577 = vpack.c.b16 %v3481, %v3480
        %v3578 = vpack.c.b16 %v3483, %v3482
        %v3579 = vpack.c.b16 %v3485, %v3484
        %v3580 = vpack.c.b16 %v3487, %v3486
        %v3581 = vpack.c.b16 %v3489, %v3488
        %v3582 = vpack.c.b16 %v3491, %v3490
        %v3583 = vpack.c.b16 %v3493, %v3492
        %v3584 = vpack.c.b16 %v3495, %v3494
        %v3585 = vpack.c.b16 %v3497, %v3496
        %v3586 = vpack.c.b16 %v3499, %v3498
        %v3587 = vpack.c.b16 %v3501, %v3500
        %v3588 = vpack.c.b16 %v3503, %v3502
        %v3589 = vpack.c.b16 %v3505, %v3504
        %v3590 = vpack.c.b16 %v3507, %v3506
        %v3591 = vpack.c.b16 %v3509, %v3508
        %v3592 = vpack.c.b16 %v3511, %v3510
        %v3593 = vpack.c.b16 %v3513, %v3512
        %v3594 = vpack.c.b16 %v3515, %v3514
        %v3595 = vpack.c.b16 %v3517, %v3516
        %v3596 = vpack.c.b16 %v3519, %v3518
        %v3597 = vpack.c.b16 %v3521, %v3520
        %v3598 = vpack.c.b16 %v3523, %v3522
        %v3599 = vpack.c.b16 %v3525, %v3524
        %v3600 = vpack.c.b16 %v3527, %v3526
        %v3601 = vpack.c.b16 %v3529, %v3528
        %3674 = vmatpush.bf16.msra.mxu0 %v3537
        %3675 = vmatpush.bf16.msra.mxu0 %v3536
        %3676 = vmatpush.bf16.msra.mxu0 %v3535
        %3677 = vmatpush.bf16.msra.mxu0 %v3534
        %3678 = vmatpush.bf16.msra.mxu0 %v3533
        %3679 = vmatpush.bf16.msra.mxu0 %v3532
        %3680 = vmatpush.bf16.msra.mxu0 %v3531
        %3681 = vmatpush.bf16.msra.mxu0 %v3530
        %3682 = vmatmul.bf16.gmra.mxu0 %v3044
        %v3683 = vpop.f32.mrf.mxu0
        %v3684 = vadd.f32 %v3240, %v3683
        %v3685 = vpop.f32.mrf.mxu0
        %v3686 = vadd.f32 %v3240, %v3685
        %3687 = vdwg.mxu0
        %3688 = vmatpush.bf16.msra.mxu0 %v3545
        %3689 = vmatpush.bf16.msra.mxu0 %v3544
        %3690 = vmatpush.bf16.msra.mxu0 %v3543
        %3691 = vmatpush.bf16.msra.mxu0 %v3542
        %3692 = vmatpush.bf16.msra.mxu0 %v3541
        %3693 = vmatpush.bf16.msra.mxu0 %v3540
        %3694 = vmatpush.bf16.msra.mxu0 %v3539
        %3695 = vmatpush.bf16.msra.mxu0 %v3538
        %3696 = vmatmul.bf16.gmra.mxu0 %v3050
        %v3697 = vpop.f32.mrf.mxu0
        %v3698 = vadd.f32 %v3684, %v3697
        %v3699 = vpop.f32.mrf.mxu0
        %v3700 = vadd.f32 %v3686, %v3699
        %3701 = vdwg.mxu0
        %3702 = vmatpush.bf16.msra.mxu0 %v3553
        %3703 = vmatpush.bf16.msra.mxu0 %v3552
        %3704 = vmatpush.bf16.msra.mxu0 %v3551
        %3705 = vmatpush.bf16.msra.mxu0 %v3550
        %3706 = vmatpush.bf16.msra.mxu0 %v3549
        %3707 = vmatpush.bf16.msra.mxu0 %v3548
        %3708 = vmatpush.bf16.msra.mxu0 %v3547
        %3709 = vmatpush.bf16.msra.mxu0 %v3546
        %3710 = vmatmul.bf16.gmra.mxu0 %v3056
        %v3711 = vpop.f32.mrf.mxu0
        %v3712 = vadd.f32 %v3698, %v3711
        %v3713 = vpop.f32.mrf.mxu0
        %v3714 = vadd.f32 %v3700, %v3713
        %3715 = vdwg.mxu0
        %3716 = vmatpush.bf16.msra.mxu0 %v3561
        %3717 = vmatpush.bf16.msra.mxu0 %v3560
        %3718 = vmatpush.bf16.msra.mxu0 %v3559
        %3719 = vmatpush.bf16.msra.mxu0 %v3558
        %3720 = vmatpush.bf16.msra.mxu0 %v3557
        %3721 = vmatpush.bf16.msra.mxu0 %v3556
        %3722 = vmatpush.bf16.msra.mxu0 %v3555
        %3723 = vmatpush.bf16.msra.mxu0 %v3554
        %3724 = vmatmul.bf16.gmra.mxu0 %v3062
        %v3725 = vpop.f32.mrf.mxu0
        %v3726 = vadd.f32 %v3712, %v3725
        %v3727 = vpop.f32.mrf.mxu0
        %v3728 = vadd.f32 %v3714, %v3727
        %3729 = vdwg.mxu0
        %3730 = vmatpush.bf16.msra.mxu0 %v3569
        %3731 = vmatpush.bf16.msra.mxu0 %v3568
        %3732 = vmatpush.bf16.msra.mxu0 %v3567
        %3733 = vmatpush.bf16.msra.mxu0 %v3566
        %3734 = vmatpush.bf16.msra.mxu0 %v3565
        %3735 = vmatpush.bf16.msra.mxu0 %v3564
        %3736 = vmatpush.bf16.msra.mxu0 %v3563
        %3737 = vmatpush.bf16.msra.mxu0 %v3562
        %3738 = vmatmul.bf16.gmra.mxu0 %v3068
        %v3739 = vpop.f32.mrf.mxu0
        %v3740 = vadd.f32 %v3726, %v3739
        %v3741 = vpop.f32.mrf.mxu0
        %v3742 = vadd.f32 %v3728, %v3741
        %3743 = vdwg.mxu0
        %3744 = vmatpush.bf16.msra.mxu0 %v3577
        %3745 = vmatpush.bf16.msra.mxu0 %v3576
        %3746 = vmatpush.bf16.msra.mxu0 %v3575
        %3747 = vmatpush.bf16.msra.mxu0 %v3574
        %3748 = vmatpush.bf16.msra.mxu0 %v3573
        %3749 = vmatpush.bf16.msra.mxu0 %v3572
        %3750 = vmatpush.bf16.msra.mxu0 %v3571
        %3751 = vmatpush.bf16.msra.mxu0 %v3570
        %3752 = vmatmul.bf16.gmra.mxu0 %v3074
        %v3753 = vpop.f32.mrf.mxu0
        %v3754 = vadd.f32 %v3740, %v3753
        %v3755 = vpop.f32.mrf.mxu0
        %v3756 = vadd.f32 %v3742, %v3755
        %3757 = vdwg.mxu0
        %3758 = vmatpush.bf16.msra.mxu0 %v3585
        %3759 = vmatpush.bf16.msra.mxu0 %v3584
        %3760 = vmatpush.bf16.msra.mxu0 %v3583
        %3761 = vmatpush.bf16.msra.mxu0 %v3582
        %3762 = vmatpush.bf16.msra.mxu0 %v3581
        %3763 = vmatpush.bf16.msra.mxu0 %v3580
        %3764 = vmatpush.bf16.msra.mxu0 %v3579
        %3765 = vmatpush.bf16.msra.mxu0 %v3578
        %3766 = vmatmul.bf16.gmra.mxu0 %v3080
        %v3767 = vpop.f32.mrf.mxu0
        %v3768 = vadd.f32 %v3754, %v3767
        %v3769 = vpop.f32.mrf.mxu0
        %v3770 = vadd.f32 %v3756, %v3769
        %3771 = vdwg.mxu0
        %3772 = vmatpush.bf16.msra.mxu0 %v3593
        %3773 = vmatpush.bf16.msra.mxu0 %v3592
        %3774 = vmatpush.bf16.msra.mxu0 %v3591
        %3775 = vmatpush.bf16.msra.mxu0 %v3590
        %3776 = vmatpush.bf16.msra.mxu0 %v3589
        %3777 = vmatpush.bf16.msra.mxu0 %v3588
        %3778 = vmatpush.bf16.msra.mxu0 %v3587
        %3779 = vmatpush.bf16.msra.mxu0 %v3586
        %3780 = vmatmul.bf16.gmra.mxu0 %v3086
        %v3781 = vpop.f32.mrf.mxu0
        %v3782 = vadd.f32 %v3768, %v3781
        %v3783 = vpop.f32.mrf.mxu0
        %v3784 = vadd.f32 %v3770, %v3783
        %3785 = vdwg.mxu0
        %3786 = vmatpush.bf16.msra.mxu0 %v3601
        %3787 = vmatpush.bf16.msra.mxu0 %v3600
        %3788 = vmatpush.bf16.msra.mxu0 %v3599
        %3789 = vmatpush.bf16.msra.mxu0 %v3598
        %3790 = vmatpush.bf16.msra.mxu0 %v3597
        %3791 = vmatpush.bf16.msra.mxu0 %v3596
        %3792 = vmatpush.bf16.msra.mxu0 %v3595
        %3793 = vmatpush.bf16.msra.mxu0 %v3594
        %3794 = vmatmul.bf16.gmra.mxu0 %v3092
        %v3795 = vpop.f32.mrf.mxu0
        %v3796 = vadd.f32 %v3782, %v3795
        %v3797 = vpop.f32.mrf.mxu0
        %v3798 = vadd.f32 %v3784, %v3797
        %3799 = vdwg.mxu0
        %vm3800 = vcmp.ge.f32.partialorder %v3796, 0.0
        %vm3801 = vcmp.ge.f32.partialorder %v3798, 0.0
        %v3802 = vmul.f32 %v3796, 0.2
        %v3803 = vmul.f32 %v3798, 0.2
        %v3804 = vsel %vm3800, %v3796, %v3802
        %v3805 = vsel %vm3801, %v3798, %v3803
        %v3806 = vpack.c.bf16 %v3805, %v3804
        %v3807 = vld [vmem:[#allocation11] sm:$0x3]
        %vm3808 = vcmask 130048
        %v3810 = vsel %vm3808, %v3807, 0
        %3812 = vmatpush.bf16.msra.mxu0 0
        %3813 = vmatpush.bf16.msra.mxu0 0
        %3814 = vmatpush.bf16.msra.mxu0 0
        %3815 = vmatpush.bf16.msra.mxu0 0
        %3816 = vmatpush.bf16.msra.mxu0 0
        %3817 = vmatpush.bf16.msra.mxu0 0
        %3818 = vmatpush.bf16.msra.mxu0 0
        %3819 = vmatpush.bf16.msra.mxu0 %v3806
        %3820 = vmatmul.bf16.gmra.mxu0 %v3810
        %v3821 = vpop.f32.mrf.mxu0
        %v3822 = vadd.f32 0.0, %v3821
        %v3823 = vpop.f32.mrf.mxu0
        %3824 = vdwg.mxu0
        %v3825 = vpack.c.bf16 %v3822, %v3822
        %s3826 = scalar_lea.vmem [#allocation11], 2
        %v3827 = vld [vmem:[%s3826] sm:$0x3]
        %v3829 = vsel %vm3808, %v3827, 0
        %3831 = vmatpush.bf16.msra.mxu0 0
        %3832 = vmatpush.bf16.msra.mxu0 0
        %3833 = vmatpush.bf16.msra.mxu0 0
        %3834 = vmatpush.bf16.msra.mxu0 0
        %3835 = vmatpush.bf16.msra.mxu0 0
        %3836 = vmatpush.bf16.msra.mxu0 0
        %3837 = vmatpush.bf16.msra.mxu0 0
        %3838 = vmatpush.bf16.msra.mxu0 %v3806
        %3839 = vmatmul.bf16.gmra.mxu0 %v3829
        %v3840 = vpop.f32.mrf.mxu0
        %v3841 = vadd.f32 0.0, %v3840
        %v3842 = vpop.f32.mrf.mxu0
        %3843 = vdwg.mxu0
        %v3844 = vpack.c.bf16 %v3841, %v3841
        %s3845 = scalar_lea.vmem [#allocation11], 4
        %v3846 = vld [vmem:[%s3845] sm:$0x3]
        %v3848 = vsel %vm3808, %v3846, 0
        %3850 = vmatpush.bf16.msra.mxu0 0
        %3851 = vmatpush.bf16.msra.mxu0 0
        %3852 = vmatpush.bf16.msra.mxu0 0
        %3853 = vmatpush.bf16.msra.mxu0 0
        %3854 = vmatpush.bf16.msra.mxu0 0
        %3855 = vmatpush.bf16.msra.mxu0 0
        %3856 = vmatpush.bf16.msra.mxu0 0
        %3857 = vmatpush.bf16.msra.mxu0 %v3806
        %3858 = vmatmul.bf16.gmra.mxu0 %v3848
        %v3859 = vpop.f32.mrf.mxu0
        %v3860 = vadd.f32 0.0, %v3859
        %v3861 = vpop.f32.mrf.mxu0
        %3862 = vdwg.mxu0
        %v3863 = vpack.c.bf16 %v3860, %v3860
        %s3864 = scalar_lea.vmem [#allocation11], 6
        %v3865 = vld [vmem:[%s3864] sm:$0x3]
        %v3867 = vsel %vm3808, %v3865, 0
        %3869 = vmatpush.bf16.msra.mxu0 0
        %3870 = vmatpush.bf16.msra.mxu0 0
        %3871 = vmatpush.bf16.msra.mxu0 0
        %3872 = vmatpush.bf16.msra.mxu0 0
        %3873 = vmatpush.bf16.msra.mxu0 0
        %3874 = vmatpush.bf16.msra.mxu0 0
        %3875 = vmatpush.bf16.msra.mxu0 0
        %3876 = vmatpush.bf16.msra.mxu0 %v3806
        %3877 = vmatmul.bf16.gmra.mxu0 %v3867
        %v3878 = vpop.f32.mrf.mxu0
        %v3879 = vadd.f32 0.0, %v3878
        %v3880 = vpop.f32.mrf.mxu0
        %3881 = vdwg.mxu0
        %v3882 = vpack.c.bf16 %v3879, %v3879
        %s3883 = scalar_lea.vmem [#allocation11], 8
        %v3884 = vld [vmem:[%s3883] sm:$0x3]
        %v3886 = vsel %vm3808, %v3884, 0
        %3888 = vmatpush.bf16.msra.mxu0 0
        %3889 = vmatpush.bf16.msra.mxu0 0
        %3890 = vmatpush.bf16.msra.mxu0 0
        %3891 = vmatpush.bf16.msra.mxu0 0
        %3892 = vmatpush.bf16.msra.mxu0 0
        %3893 = vmatpush.bf16.msra.mxu0 0
        %3894 = vmatpush.bf16.msra.mxu0 0
        %3895 = vmatpush.bf16.msra.mxu0 %v3806
        %3896 = vmatmul.bf16.gmra.mxu0 %v3886
        %v3897 = vpop.f32.mrf.mxu0
        %v3898 = vadd.f32 0.0, %v3897
        %v3899 = vpop.f32.mrf.mxu0
        %3900 = vdwg.mxu0
        %v3901 = vpack.c.bf16 %v3898, %v3898
        %s3902 = scalar_lea.vmem [#allocation11], 10
        %v3903 = vld [vmem:[%s3902] sm:$0x3]
        %v3905 = vsel %vm3808, %v3903, 0
        %3907 = vmatpush.bf16.msra.mxu0 0
        %3908 = vmatpush.bf16.msra.mxu0 0
        %3909 = vmatpush.bf16.msra.mxu0 0
        %3910 = vmatpush.bf16.msra.mxu0 0
        %3911 = vmatpush.bf16.msra.mxu0 0
        %3912 = vmatpush.bf16.msra.mxu0 0
        %3913 = vmatpush.bf16.msra.mxu0 0
        %3914 = vmatpush.bf16.msra.mxu0 %v3806
        %3915 = vmatmul.bf16.gmra.mxu0 %v3905
        %v3916 = vpop.f32.mrf.mxu0
        %v3917 = vadd.f32 0.0, %v3916
        %v3918 = vpop.f32.mrf.mxu0
        %3919 = vdwg.mxu0
        %v3920 = vpack.c.bf16 %v3917, %v3917
        %s3921 = scalar_lea.vmem [#allocation11], 12
        %v3922 = vld [vmem:[%s3921] sm:$0x3]
        %v3924 = vsel %vm3808, %v3922, 0
        %3926 = vmatpush.bf16.msra.mxu0 0
        %3927 = vmatpush.bf16.msra.mxu0 0
        %3928 = vmatpush.bf16.msra.mxu0 0
        %3929 = vmatpush.bf16.msra.mxu0 0
        %3930 = vmatpush.bf16.msra.mxu0 0
        %3931 = vmatpush.bf16.msra.mxu0 0
        %3932 = vmatpush.bf16.msra.mxu0 0
        %3933 = vmatpush.bf16.msra.mxu0 %v3806
        %3934 = vmatmul.bf16.gmra.mxu0 %v3924
        %v3935 = vpop.f32.mrf.mxu0
        %v3936 = vadd.f32 0.0, %v3935
        %v3937 = vpop.f32.mrf.mxu0
        %3938 = vdwg.mxu0
        %v3939 = vpack.c.bf16 %v3936, %v3936
        %s3940 = scalar_lea.vmem [#allocation11], 14
        %v3941 = vld [vmem:[%s3940] sm:$0x3]
        %v3943 = vsel %vm3808, %v3941, 0
        %3945 = vmatpush.bf16.msra.mxu0 0
        %3946 = vmatpush.bf16.msra.mxu0 0
        %3947 = vmatpush.bf16.msra.mxu0 0
        %3948 = vmatpush.bf16.msra.mxu0 0
        %3949 = vmatpush.bf16.msra.mxu0 0
        %3950 = vmatpush.bf16.msra.mxu0 0
        %3951 = vmatpush.bf16.msra.mxu0 0
        %3952 = vmatpush.bf16.msra.mxu0 %v3806
        %3953 = vmatmul.bf16.gmra.mxu0 %v3943
        %v3954 = vpop.f32.mrf.mxu0
        %v3955 = vadd.f32 0.0, %v3954
        %v3956 = vpop.f32.mrf.mxu0
        %3957 = vdwg.mxu0
        %v3958 = vpack.c.bf16 %v3955, %v3955
        %s3959 = scalar_lea.vmem [#allocation11], 16
        %v3960 = vld [vmem:[%s3959] sm:$0x3]
        %v3962 = vsel %vm3808, %v3960, 0
        %3964 = vmatpush.bf16.msra.mxu0 0
        %3965 = vmatpush.bf16.msra.mxu0 0
        %3966 = vmatpush.bf16.msra.mxu0 0
        %3967 = vmatpush.bf16.msra.mxu0 0
        %3968 = vmatpush.bf16.msra.mxu0 0
        %3969 = vmatpush.bf16.msra.mxu0 0
        %3970 = vmatpush.bf16.msra.mxu0 0
        %3971 = vmatpush.bf16.msra.mxu0 %v3806
        %3972 = vmatmul.bf16.gmra.mxu0 %v3962
        %v3973 = vpop.f32.mrf.mxu0
        %v3974 = vadd.f32 0.0, %v3973
        %v3975 = vpop.f32.mrf.mxu0
        %3976 = vdwg.mxu0
        %v3977 = vpack.c.bf16 %v3974, %v3974
        %v3978 = vld [vmem:[#allocation13] sm:$0xf]
        %v3979 = vld [vmem:[#allocation13 + $0x4] sm:$0xf]
        %v3980 = vld [vmem:[#allocation13 + $0x8] sm:$0xf]
        %v3981 = vld [vmem:[#allocation13 + $0xc] sm:$0xf]
        %v3982 = vld [vmem:[#allocation13 + $0x10] sm:$0xf]
        %v3983 = vld [vmem:[#allocation13 + $0x14] sm:$0xf]
        %v3984 = vld [vmem:[#allocation13 + $0x18] sm:$0xf]
        %v3985 = vld [vmem:[#allocation13 + $0x1c] sm:$0xf]
        %v3986 = vld [vmem:[#allocation13 + $0x20] sm:$0xf]
        %v3987 = vld [vmem:[#allocation13 + $0x24] sm:$0xf]
        %v3988 = vld [vmem:[#allocation13 + $0x28] sm:$0xf]
        %v3989 = vld [vmem:[#allocation13 + $0x2c] sm:$0xf]
        %v3990 = vld [vmem:[#allocation13 + $0x30] sm:$0xf]
        %v3991 = vld [vmem:[#allocation13 + $0x34] sm:$0xf]
        %v3992 = vld [vmem:[#allocation13 + $0x38] sm:$0xf]
        %v3993 = vld [vmem:[#allocation13 + $0x3c] sm:$0xf]
        %v3994 = vld [vmem:[#allocation13 + $0x40] sm:$0xf]
        %v3995 = vld [vmem:[#allocation13 + $0x44] sm:$0xf]
        %v3996 = vld [vmem:[#allocation13 + $0x48] sm:$0xf]
        %v3997 = vld [vmem:[#allocation13 + $0x4c] sm:$0xf]
        %v3998 = vld [vmem:[#allocation13 + $0x50] sm:$0xf]
        %v3999 = vld [vmem:[#allocation13 + $0x54] sm:$0xf]
        %v4000 = vld [vmem:[#allocation13 + $0x58] sm:$0xf]
        %v4001 = vld [vmem:[#allocation13 + $0x5c] sm:$0xf]
        %v4002 = vld [vmem:[#allocation13 + $0x60] sm:$0xf]
        %v4003 = vld [vmem:[#allocation13 + $0x64] sm:$0xf]
        %v4004 = vld [vmem:[#allocation13 + $0x68] sm:$0xf]
        %v4005 = vld [vmem:[#allocation13 + $0x6c] sm:$0xf]
        %v4006 = vld [vmem:[#allocation13 + $0x70] sm:$0xf]
        %v4007 = vld [vmem:[#allocation13 + $0x74] sm:$0xf]
        %v4008 = vld [vmem:[#allocation13 + $0x78] sm:$0xf]
        %v4009 = vld [vmem:[#allocation13 + $0x7c] sm:$0xf]
        %v4010 = vld [vmem:[#allocation13 + $0x80] sm:$0xf]
        %v4011 = vld [vmem:[#allocation13 + $0x84] sm:$0xf]
        %v4012 = vld [vmem:[#allocation13 + $0x88] sm:$0xf]
        %v4013 = vld [vmem:[#allocation13 + $0x8c] sm:$0xf]
        %v4014 = vld [vmem:[#allocation13 + $0x90] sm:$0xf]
        %v4015 = vld [vmem:[#allocation13 + $0x94] sm:$0xf]
        %v4016 = vld [vmem:[#allocation13 + $0x98] sm:$0xf]
        %v4017 = vld [vmem:[#allocation13 + $0x9c] sm:$0xf]
        %v4018 = vld [vmem:[#allocation13 + $0xa0] sm:$0xf]
        %v4019 = vld [vmem:[#allocation13 + $0xa4] sm:$0xf]
        %v4020 = vld [vmem:[#allocation13 + $0xa8] sm:$0xf]
        %v4021 = vld [vmem:[#allocation13 + $0xac] sm:$0xf]
        %v4022 = vld [vmem:[#allocation13 + $0xb0] sm:$0xf]
        %v4023 = vld [vmem:[#allocation13 + $0xb4] sm:$0xf]
        %v4024 = vld [vmem:[#allocation13 + $0xb8] sm:$0xf]
        %v4025 = vld [vmem:[#allocation13 + $0xbc] sm:$0xf]
        %v4026 = vld [vmem:[#allocation13 + $0xc0] sm:$0xf]
        %v4027 = vld [vmem:[#allocation13 + $0xc4] sm:$0xf]
        %v4028 = vld [vmem:[#allocation13 + $0xc8] sm:$0xf]
        %v4029 = vld [vmem:[#allocation13 + $0xcc] sm:$0xf]
        %v4030 = vld [vmem:[#allocation13 + $0xd0] sm:$0xf]
        %v4031 = vld [vmem:[#allocation13 + $0xd4] sm:$0xf]
        %v4032 = vld [vmem:[#allocation13 + $0xd8] sm:$0xf]
        %v4033 = vld [vmem:[#allocation13 + $0xdc] sm:$0xf]
        %v4034 = vld [vmem:[#allocation13 + $0xe0] sm:$0xf]
        %v4035 = vld [vmem:[#allocation13 + $0xe4] sm:$0xf]
        %v4036 = vld [vmem:[#allocation13 + $0xe8] sm:$0xf]
        %v4037 = vld [vmem:[#allocation13 + $0xec] sm:$0xf]
        %v4038 = vld [vmem:[#allocation13 + $0xf0] sm:$0xf]
        %v4039 = vld [vmem:[#allocation13 + $0xf4] sm:$0xf]
        %v4040 = vld [vmem:[#allocation13 + $0xf8] sm:$0xf]
        %v4041 = vld [vmem:[#allocation13 + $0xfc] sm:$0xf]
        %v4042 = vld [vmem:[#allocation13 + $0x100] sm:$0xf]
        %v4043 = vld [vmem:[#allocation13 + $0x104] sm:$0xf]
        %v4044 = vld [vmem:[#allocation13 + $0x108] sm:$0xf]
        %v4045 = vld [vmem:[#allocation13 + $0x10c] sm:$0xf]
        %v4046 = vld [vmem:[#allocation13 + $0x110] sm:$0xf]
        %v4047 = vld [vmem:[#allocation13 + $0x114] sm:$0xf]
        %v4048 = vld [vmem:[#allocation13 + $0x118] sm:$0xf]
        %v4049 = vld [vmem:[#allocation13 + $0x11c] sm:$0xf]
        %v4050 = vld [vmem:[#allocation13 + $0x120] sm:$0xf]
        %v4051 = vld [vmem:[#allocation13 + $0x124] sm:$0xf]
        %v4052 = vld [vmem:[#allocation13 + $0x128] sm:$0xf]
        %v4053 = vld [vmem:[#allocation13 + $0x12c] sm:$0xf]
        %v4054 = vld [vmem:[#allocation13 + $0x130] sm:$0xf]
        %v4055 = vld [vmem:[#allocation13 + $0x134] sm:$0xf]
        %v4056 = vld [vmem:[#allocation13 + $0x138] sm:$0xf]
        %v4057 = vld [vmem:[#allocation13 + $0x13c] sm:$0xf]
        %v4058 = vld [vmem:[#allocation13 + $0x140] sm:$0xf]
        %v4059 = vld [vmem:[#allocation13 + $0x144] sm:$0xf]
        %v4060 = vld [vmem:[#allocation13 + $0x148] sm:$0xf]
        %v4061 = vld [vmem:[#allocation13 + $0x14c] sm:$0xf]
        %v4062 = vld [vmem:[#allocation13 + $0x150] sm:$0xf]
        %v4063 = vld [vmem:[#allocation13 + $0x154] sm:$0xf]
        %v4064 = vld [vmem:[#allocation13 + $0x158] sm:$0xf]
        %v4065 = vld [vmem:[#allocation13 + $0x15c] sm:$0xf]
        %v4066 = vld [vmem:[#allocation13 + $0x160] sm:$0xf]
        %v4067 = vld [vmem:[#allocation13 + $0x164] sm:$0xf]
        %v4068 = vld [vmem:[#allocation13 + $0x168] sm:$0xf]
        %v4069 = vld [vmem:[#allocation13 + $0x16c] sm:$0xf]
        %v4070 = vld [vmem:[#allocation13 + $0x170] sm:$0xf]
        %v4071 = vld [vmem:[#allocation13 + $0x174] sm:$0xf]
        %v4072 = vld [vmem:[#allocation13 + $0x178] sm:$0xf]
        %v4073 = vld [vmem:[#allocation13 + $0x17c] sm:$0xf]
        %v4074 = vld [vmem:[#allocation13 + $0x180] sm:$0xf]
        %v4075 = vld [vmem:[#allocation13 + $0x184] sm:$0xf]
        %v4076 = vld [vmem:[#allocation13 + $0x188] sm:$0xf]
        %v4077 = vld [vmem:[#allocation13 + $0x18c] sm:$0xf]
        %v4078 = vld [vmem:[#allocation13 + $0x190] sm:$0xf]
        %v4079 = vld [vmem:[#allocation13 + $0x194] sm:$0xf]
        %v4080 = vld [vmem:[#allocation13 + $0x198] sm:$0xf]
        %v4081 = vld [vmem:[#allocation13 + $0x19c] sm:$0xf]
        %v4082 = vld [vmem:[#allocation13 + $0x1a0] sm:$0xf]
        %v4083 = vld [vmem:[#allocation13 + $0x1a4] sm:$0xf]
        %v4084 = vld [vmem:[#allocation13 + $0x1a8] sm:$0xf]
        %v4085 = vld [vmem:[#allocation13 + $0x1ac] sm:$0xf]
        %v4086 = vld [vmem:[#allocation13 + $0x1b0] sm:$0xf]
        %v4087 = vld [vmem:[#allocation13 + $0x1b4] sm:$0xf]
        %v4088 = vld [vmem:[#allocation13 + $0x1b8] sm:$0xf]
        %v4089 = vld [vmem:[#allocation13 + $0x1bc] sm:$0xf]
        %v4090 = vld [vmem:[#allocation13 + $0x1c0] sm:$0xf]
        %v4091 = vld [vmem:[#allocation13 + $0x1c4] sm:$0xf]
        %v4092 = vld [vmem:[#allocation13 + $0x1c8] sm:$0xf]
        %v4093 = vld [vmem:[#allocation13 + $0x1cc] sm:$0xf]
        %v4094 = vld [vmem:[#allocation13 + $0x1d0] sm:$0xf]
        %v4095 = vld [vmem:[#allocation13 + $0x1d4] sm:$0xf]
        %v4096 = vld [vmem:[#allocation13 + $0x1d8] sm:$0xf]
        %v4097 = vld [vmem:[#allocation13 + $0x1dc] sm:$0xf]
        %v4098 = vld [vmem:[#allocation13 + $0x1e0] sm:$0xf]
        %v4099 = vld [vmem:[#allocation13 + $0x1e4] sm:$0xf]
        %v4100 = vld [vmem:[#allocation13 + $0x1e8] sm:$0xf]
        %v4101 = vld [vmem:[#allocation13 + $0x1ec] sm:$0xf]
        %v4102 = vld [vmem:[#allocation13 + $0x1f0] sm:$0xf]
        %v4103 = vld [vmem:[#allocation13 + $0x1f4] sm:$0xf]
        %v4104 = vld [vmem:[#allocation13 + $0x1f8] sm:$0xf]
        %v4105 = vld [vmem:[#allocation13 + $0x1fc] sm:$0xf]
        %v4106 = vld [vmem:[#allocation13 + $0x200] sm:$0xf]
        %v4107 = vld [vmem:[#allocation13 + $0x204] sm:$0xf]
        %v4108 = vld [vmem:[#allocation13 + $0x208] sm:$0xf]
        %v4109 = vld [vmem:[#allocation13 + $0x20c] sm:$0xf]
        %v4110 = vld [vmem:[#allocation13 + $0x210] sm:$0xf]
        %v4111 = vld [vmem:[#allocation13 + $0x214] sm:$0xf]
        %v4112 = vld [vmem:[#allocation13 + $0x218] sm:$0xf]
        %v4113 = vld [vmem:[#allocation13 + $0x21c] sm:$0xf]
        %v4114 = vld [vmem:[#allocation13 + $0x220] sm:$0xf]
        %v4115 = vld [vmem:[#allocation13 + $0x224] sm:$0xf]
        %v4116 = vld [vmem:[#allocation13 + $0x228] sm:$0xf]
        %v4117 = vld [vmem:[#allocation13 + $0x22c] sm:$0xf]
        %v4118 = vld [vmem:[#allocation13 + $0x230] sm:$0xf]
        %v4119 = vld [vmem:[#allocation13 + $0x234] sm:$0xf]
        %v4120 = vld [vmem:[#allocation13 + $0x238] sm:$0xf]
        %v4121 = vld [vmem:[#allocation13 + $0x23c] sm:$0xf]
        %v4122 = vld [vmem:[%s9] sm:$0x1]
        %v4124 = vperm.slane %v4122, 0
        %v4270 = vunpack.c.l.b16 %v3978
        %v4271 = vunpack.c.l.b16 %v3979
        %v4272 = vunpack.c.l.b16 %v3980
        %v4273 = vunpack.c.l.b16 %v3981
        %v4274 = vunpack.c.l.b16 %v3982
        %v4275 = vunpack.c.l.b16 %v3983
        %v4276 = vunpack.c.l.b16 %v3984
        %v4277 = vunpack.c.l.b16 %v3985
        %v4278 = vunpack.c.l.b16 %v3986
        %v4279 = vunpack.c.l.b16 %v3987
        %v4280 = vunpack.c.l.b16 %v3988
        %v4281 = vunpack.c.l.b16 %v3989
        %v4282 = vunpack.c.l.b16 %v3990
        %v4283 = vunpack.c.l.b16 %v3991
        %v4284 = vunpack.c.l.b16 %v3992
        %v4285 = vunpack.c.l.b16 %v3993
        %v4286 = vunpack.c.l.b16 %v3994
        %v4287 = vunpack.c.l.b16 %v3995
        %v4288 = vunpack.c.l.b16 %v3996
        %v4289 = vunpack.c.l.b16 %v3997
        %v4290 = vunpack.c.l.b16 %v3998
        %v4291 = vunpack.c.l.b16 %v3999
        %v4292 = vunpack.c.l.b16 %v4000
        %v4293 = vunpack.c.l.b16 %v4001
        %v4294 = vunpack.c.l.b16 %v4002
        %v4295 = vunpack.c.l.b16 %v4003
        %v4296 = vunpack.c.l.b16 %v4004
        %v4297 = vunpack.c.l.b16 %v4005
        %v4298 = vunpack.c.l.b16 %v4006
        %v4299 = vunpack.c.l.b16 %v4007
        %v4300 = vunpack.c.l.b16 %v4008
        %v4301 = vunpack.c.l.b16 %v4009
        %v4302 = vunpack.c.l.b16 %v4010
        %v4303 = vunpack.c.l.b16 %v4011
        %v4304 = vunpack.c.l.b16 %v4012
        %v4305 = vunpack.c.l.b16 %v4013
        %v4306 = vunpack.c.l.b16 %v4014
        %v4307 = vunpack.c.l.b16 %v4015
        %v4308 = vunpack.c.l.b16 %v4016
        %v4309 = vunpack.c.l.b16 %v4017
        %v4310 = vunpack.c.l.b16 %v4018
        %v4311 = vunpack.c.l.b16 %v4019
        %v4312 = vunpack.c.l.b16 %v4020
        %v4313 = vunpack.c.l.b16 %v4021
        %v4314 = vunpack.c.l.b16 %v4022
        %v4315 = vunpack.c.l.b16 %v4023
        %v4316 = vunpack.c.l.b16 %v4024
        %v4317 = vunpack.c.l.b16 %v4025
        %v4318 = vunpack.c.l.b16 %v4026
        %v4319 = vunpack.c.l.b16 %v4027
        %v4320 = vunpack.c.l.b16 %v4028
        %v4321 = vunpack.c.l.b16 %v4029
        %v4322 = vunpack.c.l.b16 %v4030
        %v4323 = vunpack.c.l.b16 %v4031
        %v4324 = vunpack.c.l.b16 %v4032
        %v4325 = vunpack.c.l.b16 %v4033
        %v4326 = vunpack.c.l.b16 %v4034
        %v4327 = vunpack.c.l.b16 %v4035
        %v4328 = vunpack.c.l.b16 %v4036
        %v4329 = vunpack.c.l.b16 %v4037
        %v4330 = vunpack.c.l.b16 %v4038
        %v4331 = vunpack.c.l.b16 %v4039
        %v4332 = vunpack.c.l.b16 %v4040
        %v4333 = vunpack.c.l.b16 %v4041
        %v4334 = vunpack.c.l.b16 %v4042
        %v4335 = vunpack.c.l.b16 %v4043
        %v4336 = vunpack.c.l.b16 %v4044
        %v4337 = vunpack.c.l.b16 %v4045
        %v4338 = vunpack.c.l.b16 %v4046
        %v4339 = vunpack.c.l.b16 %v4047
        %v4340 = vunpack.c.l.b16 %v4048
        %v4341 = vunpack.c.l.b16 %v4049
        %v4342 = vunpack.c.l.b16 %v4050
        %v4343 = vunpack.c.l.b16 %v4051
        %v4344 = vunpack.c.l.b16 %v4052
        %v4345 = vunpack.c.l.b16 %v4053
        %v4346 = vunpack.c.l.b16 %v4054
        %v4347 = vunpack.c.l.b16 %v4055
        %v4348 = vunpack.c.l.b16 %v4056
        %v4349 = vunpack.c.l.b16 %v4057
        %v4350 = vunpack.c.l.b16 %v4058
        %v4351 = vunpack.c.l.b16 %v4059
        %v4352 = vunpack.c.l.b16 %v4060
        %v4353 = vunpack.c.l.b16 %v4061
        %v4354 = vunpack.c.l.b16 %v4062
        %v4355 = vunpack.c.l.b16 %v4063
        %v4356 = vunpack.c.l.b16 %v4064
        %v4357 = vunpack.c.l.b16 %v4065
        %v4358 = vunpack.c.l.b16 %v4066
        %v4359 = vunpack.c.l.b16 %v4067
        %v4360 = vunpack.c.l.b16 %v4068
        %v4361 = vunpack.c.l.b16 %v4069
        %v4362 = vunpack.c.l.b16 %v4070
        %v4363 = vunpack.c.l.b16 %v4071
        %v4364 = vunpack.c.l.b16 %v4072
        %v4365 = vunpack.c.l.b16 %v4073
        %v4366 = vunpack.c.l.b16 %v4074
        %v4367 = vunpack.c.l.b16 %v4075
        %v4368 = vunpack.c.l.b16 %v4076
        %v4369 = vunpack.c.l.b16 %v4077
        %v4370 = vunpack.c.l.b16 %v4078
        %v4371 = vunpack.c.l.b16 %v4079
        %v4372 = vunpack.c.l.b16 %v4080
        %v4373 = vunpack.c.l.b16 %v4081
        %v4374 = vunpack.c.l.b16 %v4082
        %v4375 = vunpack.c.l.b16 %v4083
        %v4376 = vunpack.c.l.b16 %v4084
        %v4377 = vunpack.c.l.b16 %v4085
        %v4378 = vunpack.c.l.b16 %v4086
        %v4379 = vunpack.c.l.b16 %v4087
        %v4380 = vunpack.c.l.b16 %v4088
        %v4381 = vunpack.c.l.b16 %v4089
        %v4382 = vunpack.c.l.b16 %v4090
        %v4383 = vunpack.c.l.b16 %v4091
        %v4384 = vunpack.c.l.b16 %v4092
        %v4385 = vunpack.c.l.b16 %v4093
        %v4386 = vunpack.c.l.b16 %v4094
        %v4387 = vunpack.c.l.b16 %v4095
        %v4388 = vunpack.c.l.b16 %v4096
        %v4389 = vunpack.c.l.b16 %v4097
        %v4390 = vunpack.c.l.b16 %v4098
        %v4391 = vunpack.c.l.b16 %v4099
        %v4392 = vunpack.c.l.b16 %v4100
        %v4393 = vunpack.c.l.b16 %v4101
        %v4394 = vunpack.c.l.b16 %v4102
        %v4395 = vunpack.c.l.b16 %v4103
        %v4396 = vunpack.c.l.b16 %v4104
        %v4397 = vunpack.c.l.b16 %v4105
        %v4398 = vunpack.c.l.b16 %v4106
        %v4399 = vunpack.c.l.b16 %v4107
        %v4400 = vunpack.c.l.b16 %v4108
        %v4401 = vunpack.c.l.b16 %v4109
        %v4402 = vunpack.c.l.b16 %v4110
        %v4403 = vunpack.c.l.b16 %v4111
        %v4404 = vunpack.c.l.b16 %v4112
        %v4405 = vunpack.c.l.b16 %v4113
        %v4406 = vunpack.c.l.b16 %v4114
        %v4407 = vunpack.c.l.b16 %v4115
        %v4408 = vunpack.c.l.b16 %v4116
        %v4409 = vunpack.c.l.b16 %v4117
        %v4410 = vunpack.c.l.b16 %v4118
        %v4411 = vunpack.c.l.b16 %v4119
        %v4412 = vunpack.c.l.b16 %v4120
        %v4413 = vunpack.c.l.b16 %v4121
        %v4414 = vpack.c.b16 %v4271, %v4270
        %v4415 = vpack.c.b16 %v4273, %v4272
        %v4416 = vpack.c.b16 %v4275, %v4274
        %v4417 = vpack.c.b16 %v4277, %v4276
        %v4418 = vpack.c.b16 %v4279, %v4278
        %v4419 = vpack.c.b16 %v4281, %v4280
        %v4420 = vpack.c.b16 %v4283, %v4282
        %v4421 = vpack.c.b16 %v4285, %v4284
        %v4422 = vpack.c.b16 %v4287, %v4286
        %v4423 = vpack.c.b16 %v4289, %v4288
        %v4424 = vpack.c.b16 %v4291, %v4290
        %v4425 = vpack.c.b16 %v4293, %v4292
        %v4426 = vpack.c.b16 %v4295, %v4294
        %v4427 = vpack.c.b16 %v4297, %v4296
        %v4428 = vpack.c.b16 %v4299, %v4298
        %v4429 = vpack.c.b16 %v4301, %v4300
        %v4430 = vpack.c.b16 %v4303, %v4302
        %v4431 = vpack.c.b16 %v4305, %v4304
        %v4432 = vpack.c.b16 %v4307, %v4306
        %v4433 = vpack.c.b16 %v4309, %v4308
        %v4434 = vpack.c.b16 %v4311, %v4310
        %v4435 = vpack.c.b16 %v4313, %v4312
        %v4436 = vpack.c.b16 %v4315, %v4314
        %v4437 = vpack.c.b16 %v4317, %v4316
        %v4438 = vpack.c.b16 %v4319, %v4318
        %v4439 = vpack.c.b16 %v4321, %v4320
        %v4440 = vpack.c.b16 %v4323, %v4322
        %v4441 = vpack.c.b16 %v4325, %v4324
        %v4442 = vpack.c.b16 %v4327, %v4326
        %v4443 = vpack.c.b16 %v4329, %v4328
        %v4444 = vpack.c.b16 %v4331, %v4330
        %v4445 = vpack.c.b16 %v4333, %v4332
        %v4446 = vpack.c.b16 %v4335, %v4334
        %v4447 = vpack.c.b16 %v4337, %v4336
        %v4448 = vpack.c.b16 %v4339, %v4338
        %v4449 = vpack.c.b16 %v4341, %v4340
        %v4450 = vpack.c.b16 %v4343, %v4342
        %v4451 = vpack.c.b16 %v4345, %v4344
        %v4452 = vpack.c.b16 %v4347, %v4346
        %v4453 = vpack.c.b16 %v4349, %v4348
        %v4454 = vpack.c.b16 %v4351, %v4350
        %v4455 = vpack.c.b16 %v4353, %v4352
        %v4456 = vpack.c.b16 %v4355, %v4354
        %v4457 = vpack.c.b16 %v4357, %v4356
        %v4458 = vpack.c.b16 %v4359, %v4358
        %v4459 = vpack.c.b16 %v4361, %v4360
        %v4460 = vpack.c.b16 %v4363, %v4362
        %v4461 = vpack.c.b16 %v4365, %v4364
        %v4462 = vpack.c.b16 %v4367, %v4366
        %v4463 = vpack.c.b16 %v4369, %v4368
        %v4464 = vpack.c.b16 %v4371, %v4370
        %v4465 = vpack.c.b16 %v4373, %v4372
        %v4466 = vpack.c.b16 %v4375, %v4374
        %v4467 = vpack.c.b16 %v4377, %v4376
        %v4468 = vpack.c.b16 %v4379, %v4378
        %v4469 = vpack.c.b16 %v4381, %v4380
        %v4470 = vpack.c.b16 %v4383, %v4382
        %v4471 = vpack.c.b16 %v4385, %v4384
        %v4472 = vpack.c.b16 %v4387, %v4386
        %v4473 = vpack.c.b16 %v4389, %v4388
        %v4474 = vpack.c.b16 %v4391, %v4390
        %v4475 = vpack.c.b16 %v4393, %v4392
        %v4476 = vpack.c.b16 %v4395, %v4394
        %v4477 = vpack.c.b16 %v4397, %v4396
        %v4478 = vpack.c.b16 %v4399, %v4398
        %v4479 = vpack.c.b16 %v4401, %v4400
        %v4480 = vpack.c.b16 %v4403, %v4402
        %v4481 = vpack.c.b16 %v4405, %v4404
        %v4482 = vpack.c.b16 %v4407, %v4406
        %v4483 = vpack.c.b16 %v4409, %v4408
        %v4484 = vpack.c.b16 %v4411, %v4410
        %v4485 = vpack.c.b16 %v4413, %v4412
        %4558 = vmatpush.bf16.msra.mxu0 %v4421
        %4559 = vmatpush.bf16.msra.mxu0 %v4420
        %4560 = vmatpush.bf16.msra.mxu0 %v4419
        %4561 = vmatpush.bf16.msra.mxu0 %v4418
        %4562 = vmatpush.bf16.msra.mxu0 %v4417
        %4563 = vmatpush.bf16.msra.mxu0 %v4416
        %4564 = vmatpush.bf16.msra.mxu0 %v4415
        %4565 = vmatpush.bf16.msra.mxu0 %v4414
        %4566 = vmatmul.bf16.gmra.mxu0 %v3825
        %v4567 = vpop.f32.mrf.mxu0
        %v4568 = vadd.f32 %v4124, %v4567
        %v4569 = vpop.f32.mrf.mxu0
        %4570 = vdwg.mxu0
        %4571 = vmatpush.bf16.msra.mxu0 %v4429
        %4572 = vmatpush.bf16.msra.mxu0 %v4428
        %4573 = vmatpush.bf16.msra.mxu0 %v4427
        %4574 = vmatpush.bf16.msra.mxu0 %v4426
        %4575 = vmatpush.bf16.msra.mxu0 %v4425
        %4576 = vmatpush.bf16.msra.mxu0 %v4424
        %4577 = vmatpush.bf16.msra.mxu0 %v4423
        %4578 = vmatpush.bf16.msra.mxu0 %v4422
        %4579 = vmatmul.bf16.gmra.mxu0 %v3844
        %v4580 = vpop.f32.mrf.mxu0
        %v4581 = vadd.f32 %v4568, %v4580
        %v4582 = vpop.f32.mrf.mxu0
        %4583 = vdwg.mxu0
        %4584 = vmatpush.bf16.msra.mxu0 %v4437
        %4585 = vmatpush.bf16.msra.mxu0 %v4436
        %4586 = vmatpush.bf16.msra.mxu0 %v4435
        %4587 = vmatpush.bf16.msra.mxu0 %v4434
        %4588 = vmatpush.bf16.msra.mxu0 %v4433
        %4589 = vmatpush.bf16.msra.mxu0 %v4432
        %4590 = vmatpush.bf16.msra.mxu0 %v4431
        %4591 = vmatpush.bf16.msra.mxu0 %v4430
        %4592 = vmatmul.bf16.gmra.mxu0 %v3863
        %v4593 = vpop.f32.mrf.mxu0
        %v4594 = vadd.f32 %v4581, %v4593
        %v4595 = vpop.f32.mrf.mxu0
        %4596 = vdwg.mxu0
        %4597 = vmatpush.bf16.msra.mxu0 %v4445
        %4598 = vmatpush.bf16.msra.mxu0 %v4444
        %4599 = vmatpush.bf16.msra.mxu0 %v4443
        %4600 = vmatpush.bf16.msra.mxu0 %v4442
        %4601 = vmatpush.bf16.msra.mxu0 %v4441
        %4602 = vmatpush.bf16.msra.mxu0 %v4440
        %4603 = vmatpush.bf16.msra.mxu0 %v4439
        %4604 = vmatpush.bf16.msra.mxu0 %v4438
        %4605 = vmatmul.bf16.gmra.mxu0 %v3882
        %v4606 = vpop.f32.mrf.mxu0
        %v4607 = vadd.f32 %v4594, %v4606
        %v4608 = vpop.f32.mrf.mxu0
        %4609 = vdwg.mxu0
        %4610 = vmatpush.bf16.msra.mxu0 %v4453
        %4611 = vmatpush.bf16.msra.mxu0 %v4452
        %4612 = vmatpush.bf16.msra.mxu0 %v4451
        %4613 = vmatpush.bf16.msra.mxu0 %v4450
        %4614 = vmatpush.bf16.msra.mxu0 %v4449
        %4615 = vmatpush.bf16.msra.mxu0 %v4448
        %4616 = vmatpush.bf16.msra.mxu0 %v4447
        %4617 = vmatpush.bf16.msra.mxu0 %v4446
        %4618 = vmatmul.bf16.gmra.mxu0 %v3901
        %v4619 = vpop.f32.mrf.mxu0
        %v4620 = vadd.f32 %v4607, %v4619
        %v4621 = vpop.f32.mrf.mxu0
        %4622 = vdwg.mxu0
        %4623 = vmatpush.bf16.msra.mxu0 %v4461
        %4624 = vmatpush.bf16.msra.mxu0 %v4460
        %4625 = vmatpush.bf16.msra.mxu0 %v4459
        %4626 = vmatpush.bf16.msra.mxu0 %v4458
        %4627 = vmatpush.bf16.msra.mxu0 %v4457
        %4628 = vmatpush.bf16.msra.mxu0 %v4456
        %4629 = vmatpush.bf16.msra.mxu0 %v4455
        %4630 = vmatpush.bf16.msra.mxu0 %v4454
        %4631 = vmatmul.bf16.gmra.mxu0 %v3920
        %v4632 = vpop.f32.mrf.mxu0
        %v4633 = vadd.f32 %v4620, %v4632
        %v4634 = vpop.f32.mrf.mxu0
        %4635 = vdwg.mxu0
        %4636 = vmatpush.bf16.msra.mxu0 %v4469
        %4637 = vmatpush.bf16.msra.mxu0 %v4468
        %4638 = vmatpush.bf16.msra.mxu0 %v4467
        %4639 = vmatpush.bf16.msra.mxu0 %v4466
        %4640 = vmatpush.bf16.msra.mxu0 %v4465
        %4641 = vmatpush.bf16.msra.mxu0 %v4464
        %4642 = vmatpush.bf16.msra.mxu0 %v4463
        %4643 = vmatpush.bf16.msra.mxu0 %v4462
        %4644 = vmatmul.bf16.gmra.mxu0 %v3939
        %v4645 = vpop.f32.mrf.mxu0
        %v4646 = vadd.f32 %v4633, %v4645
        %v4647 = vpop.f32.mrf.mxu0
        %4648 = vdwg.mxu0
        %4649 = vmatpush.bf16.msra.mxu0 %v4477
        %4650 = vmatpush.bf16.msra.mxu0 %v4476
        %4651 = vmatpush.bf16.msra.mxu0 %v4475
        %4652 = vmatpush.bf16.msra.mxu0 %v4474
        %4653 = vmatpush.bf16.msra.mxu0 %v4473
        %4654 = vmatpush.bf16.msra.mxu0 %v4472
        %4655 = vmatpush.bf16.msra.mxu0 %v4471
        %4656 = vmatpush.bf16.msra.mxu0 %v4470
        %4657 = vmatmul.bf16.gmra.mxu0 %v3958
        %v4658 = vpop.f32.mrf.mxu0
        %v4659 = vadd.f32 %v4646, %v4658
        %v4660 = vpop.f32.mrf.mxu0
        %4661 = vdwg.mxu0
        %4662 = vmatpush.bf16.msra.mxu0 %v4485
        %4663 = vmatpush.bf16.msra.mxu0 %v4484
        %4664 = vmatpush.bf16.msra.mxu0 %v4483
        %4665 = vmatpush.bf16.msra.mxu0 %v4482
        %4666 = vmatpush.bf16.msra.mxu0 %v4481
        %4667 = vmatpush.bf16.msra.mxu0 %v4480
        %4668 = vmatpush.bf16.msra.mxu0 %v4479
        %4669 = vmatpush.bf16.msra.mxu0 %v4478
        %4670 = vmatmul.bf16.gmra.mxu0 %v3977
        %v4671 = vpop.f32.mrf.mxu0
        %v4672 = vadd.f32 %v4659, %v4671
        %v4673 = vpop.f32.mrf.mxu0
        %4674 = vdwg.mxu0
        %vm4675 = vcmp.ge.f32.partialorder %v4672, 0.0
        %v4676 = vmul.f32 %v4672, 0.2
        %v4677 = vsel %vm4675, %v4672, %v4676
        %v4678 = vpack.c.bf16 %v4677, %v4677
        %v4679 = vld [vmem:[#allocation14] sm:$0xf]
        %v4680 = vld [vmem:[#allocation14 + $0x4] sm:$0xf]
        %v4681 = vld [vmem:[#allocation14 + $0x8] sm:$0xf]
        %v4682 = vld [vmem:[#allocation14 + $0xc] sm:$0xf]
        %v4683 = vld [vmem:[#allocation14 + $0x10] sm:$0xf]
        %v4684 = vld [vmem:[#allocation14 + $0x14] sm:$0xf]
        %v4685 = vld [vmem:[#allocation14 + $0x18] sm:$0xf]
        %v4686 = vld [vmem:[#allocation14 + $0x1c] sm:$0xf]
        %v4687 = vld [vmem:[#allocation14 + $0x20] sm:$0xf]
        %v4688 = vld [vmem:[#allocation14 + $0x24] sm:$0xf]
        %v4689 = vld [vmem:[#allocation14 + $0x28] sm:$0xf]
        %v4690 = vld [vmem:[#allocation14 + $0x2c] sm:$0xf]
        %v4691 = vld [vmem:[#allocation14 + $0x30] sm:$0xf]
        %v4692 = vld [vmem:[#allocation14 + $0x34] sm:$0xf]
        %v4693 = vld [vmem:[#allocation14 + $0x38] sm:$0xf]
        %v4694 = vld [vmem:[#allocation14 + $0x3c] sm:$0xf]
        %v4711 = vunpack.c.l.b16 %v4679
        %v4712 = vunpack.c.l.b16 %v4680
        %v4713 = vunpack.c.l.b16 %v4681
        %v4714 = vunpack.c.l.b16 %v4682
        %v4715 = vunpack.c.l.b16 %v4683
        %v4716 = vunpack.c.l.b16 %v4684
        %v4717 = vunpack.c.l.b16 %v4685
        %v4718 = vunpack.c.l.b16 %v4686
        %v4719 = vunpack.c.l.b16 %v4687
        %v4720 = vunpack.c.l.b16 %v4688
        %v4721 = vunpack.c.l.b16 %v4689
        %v4722 = vunpack.c.l.b16 %v4690
        %v4723 = vunpack.c.l.b16 %v4691
        %v4724 = vunpack.c.l.b16 %v4692
        %v4725 = vunpack.c.l.b16 %v4693
        %v4726 = vunpack.c.l.b16 %v4694
        %v4727 = vpack.c.b16 %v4712, %v4711
        %v4728 = vpack.c.b16 %v4714, %v4713
        %v4729 = vpack.c.b16 %v4716, %v4715
        %v4730 = vpack.c.b16 %v4718, %v4717
        %v4731 = vpack.c.b16 %v4720, %v4719
        %v4732 = vpack.c.b16 %v4722, %v4721
        %v4733 = vpack.c.b16 %v4724, %v4723
        %v4734 = vpack.c.b16 %v4726, %v4725
        %4743 = vmatpush.bf16.msra.mxu0 %v4734
        %4744 = vmatpush.bf16.msra.mxu0 %v4733
        %4745 = vmatpush.bf16.msra.mxu0 %v4732
        %4746 = vmatpush.bf16.msra.mxu0 %v4731
        %4747 = vmatpush.bf16.msra.mxu0 %v4730
        %4748 = vmatpush.bf16.msra.mxu0 %v4729
        %4749 = vmatpush.bf16.msra.mxu0 %v4728
        %4750 = vmatpush.bf16.msra.mxu0 %v4727
        %4751 = vmatmul.bf16.gmra.mxu0 %v4678
        %v4752 = vpop.f32.mrf.mxu0
        %v4753 = vadd.f32 0.0, %v4752
        %v4754 = vpop.f32.mrf.mxu0
        %4755 = vdwg.mxu0
        %vm4756 = vcmask 1043456
        %v4757 = vsel %vm4756, %v4753, 0.0
        %v4758 = vrot.slane %v4757, 4
        %v4759 = vadd.f32 %v4757, %v4758
        %v4760 = vrot.slane %v4759, 2
        %v4761 = vadd.f32 %v4759, %v4760
        %v4762 = vrot.slane %v4761, 1
        %v4763 = vadd.f32 %v4761, %v4762
        %v4764 = vrcp.pop 4.0
        %v4765 = vmul.f32 4.0, %v4764
        %v4766 = vsub.f32 1.0, %v4765
        %v4767 = vmul.f32 %v4764, %v4766
        %v4768 = vadd.f32 %v4764, %v4767
        %vm4769 = vweird.f32 %v4764
        %v4770 = vsel %vm4769, %v4764, %v4768
        %v4771 = vmul.f32 %v4763, %v4770
        %v4772 = vld [vmem:[%s11] sm:$0x1]
        %v4773 = vadd.f32 %v4771, %v4772
        %vm4774 = vcmp.ge.f32.partialorder %v4773, 0.0
        %v4775 = vmul.f32 %v4773, 0.2
        %v4776 = vsel %vm4774, %v4773, %v4775
        %v4777 = vmul.f32 %v4776, 1.4142135
        %4778 = vst [vmem:[%s548] sm:$0x1] %v4777
        %s4779 = sand.u32 %s298, 1
        %s4780 = scalar_lea.sflag [#allocation4], %s4779
        %s4781 = sand.u32 %s298, 1
        %s4782 = scalar_lea.vmem [#allocation16], %s4781
        // Predicated region
        $region101: #{tpu_custom_call.1} parent=67 // pred_check
          %p4783 = pneg %p308
        $region102: #{tpu_custom_call.1} parent=67 // pred_check_branch
          %4785 = sbr.rel (%p4783) target = $region104
        $region103: #{tpu_custom_call.1} parent=67 // pred_region
          %4787 = vsyncadd %s4780, 0
          %s4788 = scalar_lea.hbm %s12, %s33
          %s4790 = sshll.u32 %s4782, 4
          %s4791 = int_to_ptr.vmem [resolvable:$true] %s4790
          %s4792 = sshll.u32 %s4788, 4
          %s4793 = int_to_ptr.hbm [resolvable:$true] %s4792
          %4795 = dma.vmem_to_hbm [thread:$0]  %s4791, 16, %s4793, %s4780
        $region104: #{tpu_custom_call.1} parent=67 // pred_fallthru
          _
      $region68: #{tpu_custom_call.1} parent=5 // pred_fallthru
        _
      %p4796 = scmp.le.s32.totalorder 2, %s28
      // Predicated region
      $region105: #{tpu_custom_call.1} parent=5 // pred_check
        %p4797 = pneg %p4796
      $region106: #{tpu_custom_call.1} parent=5 // pred_check_branch
        %4799 = sbr.rel (%p4797) target = $region108
      $region107: #{tpu_custom_call.1} parent=5 // pred_region
        %s4800 = ssub.s32 %s28, 2
        // Predicated region
        $region109: #{tpu_custom_call.1} parent=107 // pred_check
          %p4801 = pneg %p314
        $region110: #{tpu_custom_call.1} parent=107 // pred_check_branch
          %4803 = sbr.rel (%p4801) target = $region112
        $region111: #{tpu_custom_call.1} parent=107 // pred_region
          %s4804 = sand.u32 %s299, 1
          %s4805 = scalar_lea.sflag [#allocation4], %s4804
          %s4806 = sand.u32 %s299, 1
          %s4807 = scalar_lea.vmem [#allocation16], %s4806
          %4809 = dma.done %s4805, 16
        $region112: #{tpu_custom_call.1} parent=107 // pred_fallthru
          _
      $region108: #{tpu_custom_call.1} parent=5 // pred_fallthru
        _
    $region6: #{tpu_custom_call.1} parent=1 // loop_footer
      %s32 = sadd.s32 1, %s28
    $region7: #{tpu_custom_call.1} parent=1 // loop_footer_branch
      %27 = sbr.rel target = $region3
    $region8: #{tpu_custom_call.1} parent=1 // loop_exit
      _
    %4810 = vsyncpa [#allocation3], 1
    %s4811 = scalar_lea.sflag [#allocation3], 1
    %4812 = vsyncpa %s4811, 1
    %4813 = vsyncpa [#allocation6], 1
    %4814 = vsyncpa [#allocation9], 1
    %4815 = vsyncpa [#allocation12], 1
    %4816 = vsyncpa [#allocation15], 1
    %4817 = vsyncpa [#allocation4], 1
    %s4818 = scalar_lea.sflag [#allocation4], 1
    %4819 = vsyncpa %s4818, 1

</llo_original>
